<compile_context>
chip_gen: v7x
topology: tpu7x:2x2x1
jax: 0.10.0
libtpu: 0.0.40
codegen_flags: <defaults>
</compile_context>

<pallas_src>
import functools
import math

import jax
import jax.numpy as jnp
from jax.experimental import pallas as pl
from jax.experimental.pallas import tpu as pltpu


# --------------------------------------------------------------------------- #
# Generation-aware scoped-VMEM budget
# --------------------------------------------------------------------------- #
def _vmem_limit_bytes():
    """~85% of per-core VMEM: ~100 MiB on v5e/v6e (128 MiB phys), ~54 MiB on v7x."""
    cap = 64 * 1024 * 1024
    try:
        cap = int(pltpu.get_tpu_info().vmem_capacity_bytes)
    except Exception:
        pass
    return max(32 * 1024 * 1024, min(int(cap * 0.85), 100 * 1024 * 1024))


def _full_spec(shape):
    """Whole-array block (empty grid; index_map takes no args)."""
    return pl.BlockSpec(shape, lambda *_: (0,) * len(shape))


# ----------------------------- helpers ------------------------------------ #

def _layer_norm(x, g, b, eps=1e-5):
    """PyTorch nn.LayerNorm semantics (biased variance, eps=1e-5), f32 stats."""
    mu = jnp.mean(x, axis=-1, keepdims=True)
    xc = x - mu
    var = jnp.mean(xc * xc, axis=-1, keepdims=True)
    return xc * jax.lax.rsqrt(var + eps) * g + b


def _patchify(x, p):
    """(N, C, H, W) -> (N, n_h*n_w, C*p*p), matching Conv2d(k=p, s=p) flattening."""
    n, c, h, w = x.shape
    nh, nw = h // p, w // p
    x = x.reshape(n, c, nh, p, nw, p)
    x = x.transpose(0, 2, 4, 1, 3, 5)          # (N, nh, nw, C, p, p)
    return x.reshape(n, nh * nw, c * p * p)


# --------- Pallas kernel: fused patch embed + cls tokens + pos add --------- #

def _embed_kernel(patches_ref, w_ref, b_ref, cls_ref, pos_ref, o_ref):
    n, p, kk = patches_ref.shape
    d = w_ref.shape[1]
    c = cls_ref.shape[1]

    pos = pos_ref[...]                                           # (1, S, D)
    pt = patches_ref[...].reshape(n * p, kk).astype(jnp.bfloat16)
    emb = jnp.dot(pt, w_ref[...], preferred_element_type=jnp.float32) + b_ref[...]

    # No concatenate: class-token rows and patch rows go straight into o_ref.
    o_ref[:, :c, :] = jnp.broadcast_to(cls_ref[...] + pos[:, :c, :], (n, c, d))
    o_ref[:, c:, :] = emb.reshape(n, p, d) + pos[:, c:, :]


def embed_tokens(patches, conv_w, conv_b, class_tokens, pos_embedding, vmem_limit):
    n, p, kk = patches.shape
    d = conv_w.shape[1]
    c = class_tokens.shape[1]
    s = c + p
    return pl.pallas_call(
        _embed_kernel,
        out_shape=jax.ShapeDtypeStruct((n, s, d), jnp.float32),
        in_specs=[_full_spec((n, p, kk)), _full_spec((kk, d)), _full_spec((1, d)),
                  _full_spec((1, c, d)), _full_spec((1, s, d))],
        out_specs=_full_spec((n, s, d)),
        compiler_params=pltpu.CompilerParams(vmem_limit_bytes=vmem_limit),
    )(patches, conv_w, conv_b, class_tokens, pos_embedding)


# -------- Pallas kernel: all encoder layers fused (batch-tile x layer) ----- #

def _encoder_kernel(x_ref,
                    ln1g_ref, ln1b_ref, wq_ref, bq_ref, wk_ref, bk_ref,
                    wv_ref, bv_ref, wo_ref, bo_ref, ln2g_ref, ln2b_ref,
                    w1_ref, b1_ref, w2_ref, b2_ref,
                    o_ref, res_ref, *, num_heads):
    tn, s, d = res_ref.shape
    hd = d // num_heads
    layer = pl.program_id(1)

    # Layer 0: pull this batch tile into the resident residual-stream scratch.
    @pl.when(layer == 0)
    def _():
        res_ref[...] = x_ref[...]

    x = res_ref[...].reshape(tn * s, d)                 # f32 residual stream

    # ---- LN1 + multi-head self-attention (1/sqrt(hd) pre-folded into wq) ----
    h = _layer_norm(x, ln1g_ref[...], ln1b_ref[...]).astype(jnp.bfloat16)
    q = jnp.dot(h, wq_ref[...], preferred_element_type=jnp.float32) + bq_ref[...]
    k = jnp.dot(h, wk_ref[...], preferred_element_type=jnp.float32) + bk_ref[...]
    v = jnp.dot(h, wv_ref[...], preferred_element_type=jnp.float32) + bv_ref[...]

    def heads(t):   # (NS, D) -> (N*H, S, hd); relayout done in bf16 (half bytes)
        return (t.astype(jnp.bfloat16).reshape(tn, s, num_heads, hd)
                 .transpose(0, 2, 1, 3).reshape(tn * num_heads, s, hd))
    # TODO(synk): multi-batch-dim einsum ('nqhd,nkhd->nhqk') would avoid these
    # relayouts entirely but is not reliably lowerable by Mosaic dot_general;
    # the 3-D single-leading-batch einsum below is the proven path.
    qh, kh, vh = heads(q), heads(k), heads(v)

    scores = jnp.einsum('bqd,bkd->bqk', qh, kh,
                        preferred_element_type=jnp.float32)
    scores = scores - jnp.max(scores, axis=-1, keepdims=True)
    e = jnp.exp(scores)                                 # f32 softmax
    p = e * pl.reciprocal(jnp.sum(e, axis=-1, keepdims=True), approx=True)
    # TODO(synk): for long sequences switch to a flash-style online max/sum over
    # key tiles; here the (H, S, S) scores are bounded by the batch-tile size.

    ctx = jnp.einsum('bqk,bkd->bqd', p.astype(jnp.bfloat16), vh,
                     preferred_element_type=jnp.float32)
    ctx = (ctx.astype(jnp.bfloat16).reshape(tn, num_heads, s, hd)
              .transpose(0, 2, 1, 3).reshape(tn * s, d))
    attn = jnp.dot(ctx, wo_ref[...], preferred_element_type=jnp.float32) + bo_ref[...]
    xr = x + attn                                       # residual 1 (f32)

    # ---- LN2 + MLP (Linear -> GELU -> Linear) ----
    y = _layer_norm(xr, ln2g_ref[...], ln2b_ref[...]).astype(jnp.bfloat16)
    y = jnp.dot(y, w1_ref[...], preferred_element_type=jnp.float32) + b1_ref[...]
    # tanh GELU maps onto the EUP slot (small numeric delta vs torch's erf GELU)
    y = jax.nn.gelu(y, approximate=True)
    y = jnp.dot(y.astype(jnp.bfloat16), w2_ref[...],
                preferred_element_type=jnp.float32) + b2_ref[...]

    res_ref[...] = (xr + y).reshape(tn, s, d)           # residual 2 stays in VMEM

    @pl.when(layer == pl.num_programs(1) - 1)
    def _():
        o_ref[...] = res_ref[...]                       # one HBM writeback per tile


_ENC_WEIGHT_NAMES = ("ln1_g", "ln1_b", "wq", "bq", "wk", "bk", "wv", "bv",
                     "wo", "bo", "ln2_g", "ln2_b", "w1", "b1", "w2", "b2")


def _pick_batch_tile(n, s, d, mlp_dim, num_heads, vmem_limit):
    """Largest batch tile whose per-layer live VMEM fits the budget; keep >=2
    tiles on the parallel axis when possible so both v7x TensorCores get work."""
    per_item = 4 * (10 * s * d + 2 * num_heads * s * s + 2 * s * mlp_dim)
    weight_bytes = 2 * 2 * (4 * d * d + 2 * d * mlp_dim)      # bf16, double-buffered
    budget = int(0.8 * vmem_limit) - weight_bytes
    fits = [t for t in range(1, n + 1) if n % t == 0 and t * per_item <= budget]
    if not fits:
        return 1
    multi = [t for t in fits if n // t >= 2]
    return max(multi) if multi else max(fits)


def encoder_layers(x, enc, *, num_heads, vmem_limit):
    n, s, d = x.shape
    num_layers = enc["wq"].shape[0]
    mlp_dim = enc["w1"].shape[-1]
    tile_n = _pick_batch_tile(n, s, d, mlp_dim, num_heads, vmem_limit)

    weights = [enc[name] for name in _ENC_WEIGHT_NAMES]

    def layer_spec(a):   # (L, r, c): layer axis squeezed, whole (r, c) per layer
        return pl.BlockSpec((None, a.shape[1], a.shape[2]), lambda b, l: (l, 0, 0))

    kernel = functools.partial(_encoder_kernel, num_heads=num_heads)
    return pl.pallas_call(
        kernel,
        out_shape=jax.ShapeDtypeStruct((n, s, d), jnp.float32),
        grid_spec=pltpu.PrefetchScalarGridSpec(
            num_scalar_prefetch=0,
            grid=(n // tile_n, num_layers),
            in_specs=[pl.BlockSpec((tile_n, s, d), lambda b, l: (b, 0, 0))]
                     + [layer_spec(a) for a in weights],
            out_specs=pl.BlockSpec((tile_n, s, d), lambda b, l: (b, 0, 0)),
            scratch_shapes=[pltpu.VMEM((tile_n, s, d), jnp.float32)]),
        compiler_params=pltpu.CompilerParams(
            dimension_semantics=("parallel", "arbitrary"),
            vmem_limit_bytes=vmem_limit),
    )(x, *weights)


# ------------- Pallas kernel: final LN + class-token pool + head ----------- #

def _head_kernel(x_ref, lng_ref, lnb_ref, wh_ref, bh_ref, o_ref):
    xn = _layer_norm(x_ref[...], lng_ref[...], lnb_ref[...])    # == encoder.ln
    pooled = jnp.sum(xn, axis=1)                                # sum class tokens
    o_ref[...] = jnp.dot(pooled.astype(jnp.bfloat16), wh_ref[...],
                         preferred_element_type=jnp.float32) + bh_ref[...]


def vit_head(x_cls, ln_g, ln_b, head_w_pad, head_b_pad, vmem_limit):
    n, c, d = x_cls.shape
    cpad = head_w_pad.shape[1]          # pre-padded to a multiple of 128 (bf16)
    return pl.pallas_call(
        _head_kernel,
        out_shape=jax.ShapeDtypeStruct((n, cpad), jnp.float32),
        in_specs=[_full_spec((n, c, d)), _full_spec((1, d)), _full_spec((1, d)),
                  _full_spec((d, cpad)), _full_spec((1, cpad))],
        out_specs=_full_spec((n, cpad)),
        compiler_params=pltpu.CompilerParams(vmem_limit_bytes=vmem_limit),
    )(x_cls, ln_g, ln_b, head_w_pad, head_b_pad)


# ---------------------------- model wrapper -------------------------------- #

def rankvit_forward(x_img, params, *, patch_size, num_heads, num_class_tokens,
                    num_classes):
    vmem_limit = _vmem_limit_bytes()

    # patch extraction (pure layout glue) + fused embed/cls/pos kernel
    patches = _patchify(x_img, patch_size)                      # (N, P, K)
    x = embed_tokens(patches, params["conv_w"], params["conv_b"],
                     params["class_tokens"], params["pos_embedding"], vmem_limit)

    # TODO(synk): sort_and_drop (argsort + gather of token-magnitude ranking for
    # budget < 1.0) is not implemented; default current_budget == 1.0 path only.
    x = encoder_layers(x, params["enc"], num_heads=num_heads,
                       vmem_limit=vmem_limit)

    # final encoder LN is per-token, so applying it to the class tokens only is
    # exact; only the class tokens are DMA'd into the head kernel.
    x_cls = x[:, :num_class_tokens, :]
    logits = vit_head(x_cls, params["ln_g"], params["ln_b"],
                      params["head_w"], params["head_b"], vmem_limit)
    return logits[:, :num_classes]


# ------------------------- deterministic init ------------------------------ #

def build_params(key, *, image_size, patch_size, num_layers, num_heads,
                 hidden_dim, mlp_dim, num_classes, num_class_tokens):
    k_in = 3 * patch_size * patch_size
    n_patches = (image_size // patch_size) ** 2
    seq = n_patches + num_class_tokens
    head_dim = hidden_dim // num_heads
    attn_scale = 1.0 / math.sqrt(head_dim)

    key_box = [key]

    def nrm(shape, std):
        key_box[0], sub = jax.random.split(key_box[0])
        return std * jax.random.normal(sub, shape, dtype=jnp.float32)

    def nrm_stack(shape, std):
        return jnp.stack([nrm(shape, std) for _ in range(num_layers)], axis=0)

    lin_std = 1.0 / math.sqrt(hidden_dim)
    zeros_bias = jnp.zeros((num_layers, 1, hidden_dim), jnp.float32)

    enc = {
        "ln1_g": jnp.ones((num_layers, 1, hidden_dim), jnp.float32),
        "ln1_b": jnp.zeros((num_layers, 1, hidden_dim), jnp.float32),
        # 1/sqrt(head_dim) folded into the q projection (free at runtime)
        "wq": (nrm_stack((hidden_dim, hidden_dim), lin_std) * attn_scale
               ).astype(jnp.bfloat16),
        "bq": zeros_bias,  # zero bias; a nonzero bq would also carry attn_scale
        "wk": nrm_stack((hidden_dim, hidden_dim), lin_std).astype(jnp.bfloat16),
        "bk": zeros_bias,
        "wv": nrm_stack((hidden_dim, hidden_dim), lin_std).astype(jnp.bfloat16),
        "bv": zeros_bias,
        "wo": nrm_stack((hidden_dim, hidden_dim), lin_std).astype(jnp.bfloat16),
        "bo": zeros_bias,
        "ln2_g": jnp.ones((num_layers, 1, hidden_dim), jnp.float32),
        "ln2_b": jnp.zeros((num_layers, 1, hidden_dim), jnp.float32),
        "w1": nrm_stack((hidden_dim, mlp_dim), lin_std).astype(jnp.bfloat16),
        "b1": jnp.zeros((num_layers, 1, mlp_dim), jnp.float32),
        "w2": nrm_stack((mlp_dim, hidden_dim), 1.0 / math.sqrt(mlp_dim)
                        ).astype(jnp.bfloat16),
        "b2": zeros_bias,
    }

    # head: zero-initialized (nn.init.zeros_), pre-padded to a lane-dense
    # multiple of 128 classes and stored bf16 (hoisted out of the forward pass).
    cpad = 128 * pl.cdiv(num_classes, 128)
    head_w_pad = jnp.zeros((hidden_dim, cpad), jnp.bfloat16)
    head_b_pad = jnp.zeros((1, cpad), jnp.float32)

    return {
        # conv_proj: (~trunc_)normal(std=sqrt(1/fan_in)) weight, zero bias; bf16.
        "conv_w": nrm((hidden_dim, k_in), math.sqrt(1.0 / k_in)).T.astype(jnp.bfloat16),
        "conv_b": jnp.zeros((1, hidden_dim), jnp.float32),
        # class tokens: zeros ; pos_embedding: normal(std=0.02)
        "class_tokens": jnp.zeros((1, num_class_tokens, hidden_dim), jnp.float32),
        "pos_embedding": nrm((1, seq, hidden_dim), 0.02),
        # final LayerNorm
        "ln_g": jnp.ones((1, hidden_dim), jnp.float32),
        "ln_b": jnp.zeros((1, hidden_dim), jnp.float32),
        "head_w": head_w_pad,
        "head_b": head_b_pad,
        "enc": enc,
    }


# --------------------------------- main ------------------------------------ #

if __name__ == "__main__":
    # small config consistent with the module's constructor
    IMAGE_SIZE = 16
    PATCH_SIZE = 4
    NUM_LAYERS = 2
    NUM_HEADS = 4
    HIDDEN_DIM = 32
    MLP_DIM = 64
    NUM_CLASSES = 10
    NUM_CLASS_TOKENS = 1
    BATCH = 2
    # rankvit_layers = [1]; default budget 1.0 -> same forward path as ViTBlock

    key = jax.random.PRNGKey(0)
    k_params, k_img = jax.random.split(key)

    params = build_params(
        k_params,
        image_size=IMAGE_SIZE, patch_size=PATCH_SIZE, num_layers=NUM_LAYERS,
        num_heads=NUM_HEADS, hidden_dim=HIDDEN_DIM, mlp_dim=MLP_DIM,
        num_classes=NUM_CLASSES, num_class_tokens=NUM_CLASS_TOKENS)

    x_img = jax.random.normal(k_img, (BATCH, 3, IMAGE_SIZE, IMAGE_SIZE),
                              dtype=jnp.float32)

    fwd = jax.jit(functools.partial(
        rankvit_forward,
        patch_size=PATCH_SIZE, num_heads=NUM_HEADS,
        num_class_tokens=NUM_CLASS_TOKENS, num_classes=NUM_CLASSES))

    out = fwd(x_img, params)
    jax.block_until_ready(out)
    assert out.shape == (BATCH, NUM_CLASSES)
    assert bool(jnp.all(jnp.isfinite(out)))
    print("KERNEL_OK")
</pallas_src>

<mosaic_0001>
module attributes {stable_mosaic.version = 11 : i64} {
  func.func @_embed_kernel(%arg0: memref<2x16x48xf32, #tpu.memory_space<vmem>>, %arg1: memref<48x32xbf16, #tpu.memory_space<vmem>>, %arg2: memref<1x32xf32, #tpu.memory_space<vmem>>, %arg3: memref<1x1x32xf32, #tpu.memory_space<vmem>>, %arg4: memref<1x17x32xf32, #tpu.memory_space<vmem>>, %arg5: memref<2x17x32xf32, #tpu.memory_space<vmem>>) attributes {dimension_semantics = [], scalar_prefetch = 0 : i64, scratch_operands = 0 : i64, tpu.core_type = #tpu.core_type<tc>} {
    %c0 = arith.constant 0 : index
    %c0_0 = arith.constant 0 : index
    %c0_1 = arith.constant 0 : index
    %0 = vector.load %arg4[%c0, %c0_0, %c0_1] : memref<1x17x32xf32, #tpu.memory_space<vmem>>, vector<1x17x32xf32>
    %c0_2 = arith.constant 0 : index
    %c0_3 = arith.constant 0 : index
    %c0_4 = arith.constant 0 : index
    %1 = vector.load %arg0[%c0_2, %c0_3, %c0_4] : memref<2x16x48xf32, #tpu.memory_space<vmem>>, vector<2x16x48xf32>
    %2 = vector.shape_cast %1 : vector<2x16x48xf32> to vector<32x48xf32>
    %3 = arith.truncf %2 : vector<32x48xf32> to vector<32x48xbf16>
    %c0_5 = arith.constant 0 : index
    %c0_6 = arith.constant 0 : index
    %4 = vector.load %arg1[%c0_5, %c0_6] : memref<48x32xbf16, #tpu.memory_space<vmem>>, vector<48x32xbf16>
    %cst = arith.constant dense<0.000000e+00> : vector<32x32xf32>
    %5 = tpu.matmul %3, %4, %cst {dimension_numbers = #tpu.dot_dimension_numbers<[1], [0], [0], [1], [0, 0, 1, 1], [], []>} : vector<32x48xbf16>, vector<48x32xbf16>, vector<32x32xf32> -> vector<32x32xf32>
    %c0_7 = arith.constant 0 : index
    %c0_8 = arith.constant 0 : index
    %6 = vector.load %arg2[%c0_7, %c0_8] : memref<1x32xf32, #tpu.memory_space<vmem>>, vector<1x32xf32>
    %7 = vector.broadcast %6 : vector<1x32xf32> to vector<32x32xf32>
    %8 = arith.addf %5, %7 : vector<32x32xf32>
    %c0_9 = arith.constant 0 : index
    %c0_10 = arith.constant 0 : index
    %c0_11 = arith.constant 0 : index
    %9 = vector.load %arg3[%c0_9, %c0_10, %c0_11] : memref<1x1x32xf32, #tpu.memory_space<vmem>>, vector<1x1x32xf32>
    %10 = vector.extract_strided_slice %0 {offsets = [0, 0, 0], sizes = [1, 1, 32], strides = [1, 1, 1]} : vector<1x17x32xf32> to vector<1x1x32xf32>
    %11 = arith.addf %9, %10 : vector<1x1x32xf32>
    %12 = vector.shape_cast %11 : vector<1x1x32xf32> to vector<1x1x32xf32>
    %13 = vector.broadcast %12 : vector<1x1x32xf32> to vector<2x1x32xf32>
    %c0_12 = arith.constant 0 : index
    %c0_13 = arith.constant 0 : index
    %c0_14 = arith.constant 0 : index
    %14 = vector.load %arg5[%c0_12, %c0_13, %c0_14] : memref<2x17x32xf32, #tpu.memory_space<vmem>>, vector<2x1x32xf32>
    tpu.vector_store %arg5[%c0_12, %c0_13, %c0_14], %13 {strides = array<i32>} : memref<2x17x32xf32, #tpu.memory_space<vmem>>, vector<2x1x32xf32>,
    %15 = vector.shape_cast %8 : vector<32x32xf32> to vector<2x16x32xf32>
    %16 = vector.extract_strided_slice %0 {offsets = [0, 1, 0], sizes = [1, 16, 32], strides = [1, 1, 1]} : vector<1x17x32xf32> to vector<1x16x32xf32>
    %17 = vector.broadcast %16 : vector<1x16x32xf32> to vector<2x16x32xf32>
    %18 = arith.addf %15, %17 : vector<2x16x32xf32>
    %c0_15 = arith.constant 0 : index
    %c1 = arith.constant 1 : index
    %c0_16 = arith.constant 0 : index
    %19 = vector.load %arg5[%c0_15, %c1, %c0_16] : memref<2x17x32xf32, #tpu.memory_space<vmem>>, vector<2x16x32xf32>
    tpu.vector_store %arg5[%c0_15, %c1, %c0_16], %18 {strides = array<i32>} : memref<2x17x32xf32, #tpu.memory_space<vmem>>, vector<2x16x32xf32>,
    return
  }
}

module attributes {stable_mosaic.version = 11 : i64} {
  func.func @_encoder_kernel(%arg0: i32, %arg1: i32, %arg2: memref<1x17x32xf32, #tpu.memory_space<vmem>>, %arg3: memref<1x1x32xf32, #tpu.memory_space<vmem>>, %arg4: memref<1x1x32xf32, #tpu.memory_space<vmem>>, %arg5: memref<1x32x32xbf16, #tpu.memory_space<vmem>>, %arg6: memref<1x1x32xf32, #tpu.memory_space<vmem>>, %arg7: memref<1x32x32xbf16, #tpu.memory_space<vmem>>, %arg8: memref<1x1x32xf32, #tpu.memory_space<vmem>>, %arg9: memref<1x32x32xbf16, #tpu.memory_space<vmem>>, %arg10: memref<1x1x32xf32, #tpu.memory_space<vmem>>, %arg11: memref<1x32x32xbf16, #tpu.memory_space<vmem>>, %arg12: memref<1x1x32xf32, #tpu.memory_space<vmem>>, %arg13: memref<1x1x32xf32, #tpu.memory_space<vmem>>, %arg14: memref<1x1x32xf32, #tpu.memory_space<vmem>>, %arg15: memref<1x32x64xbf16, #tpu.memory_space<vmem>>, %arg16: memref<1x1x64xf32, #tpu.memory_space<vmem>>, %arg17: memref<1x64x32xbf16, #tpu.memory_space<vmem>>, %arg18: memref<1x1x32xf32, #tpu.memory_space<vmem>>, %arg19: memref<1x17x32xf32, #tpu.memory_space<vmem>>, %arg20: memref<1x17x32xf32, #tpu.memory_space<vmem>>) attributes {dimension_semantics = [#tpu.dimension_semantics<parallel>, #tpu.dimension_semantics<arbitrary>], iteration_bounds = array<i64: 2, 2>, scalar_prefetch = 0 : i64, scratch_operands = 1 : i64, tpu.core_type = #tpu.core_type<tc>, window_params = [{transform_indices = @transform_0, window_bounds = array<i64: 1, 17, 32>}, {transform_indices = @transform_1, window_bounds = array<i64: 1, 1, 32>}, {transform_indices = @transform_2, window_bounds = array<i64: 1, 1, 32>}, {transform_indices = @transform_3, window_bounds = array<i64: 1, 32, 32>}, {transform_indices = @transform_4, window_bounds = array<i64: 1, 1, 32>}, {transform_indices = @transform_5, window_bounds = array<i64: 1, 32, 32>}, {transform_indices = @transform_6, window_bounds = array<i64: 1, 1, 32>}, {transform_indices = @transform_7, window_bounds = array<i64: 1, 32, 32>}, {transform_indices = @transform_8, window_bounds = array<i64: 1, 1, 32>}, {transform_indices = @transform_9, window_bounds = array<i64: 1, 32, 32>}, {transform_indices = @transform_10, window_bounds = array<i64: 1, 1, 32>}, {transform_indices = @transform_11, window_bounds = array<i64: 1, 1, 32>}, {transform_indices = @transform_12, window_bounds = array<i64: 1, 1, 32>}, {transform_indices = @transform_13, window_bounds = array<i64: 1, 32, 64>}, {transform_indices = @transform_14, window_bounds = array<i64: 1, 1, 64>}, {transform_indices = @transform_15, window_bounds = array<i64: 1, 64, 32>}, {transform_indices = @transform_16, window_bounds = array<i64: 1, 1, 32>}, {transform_indices = @transform_17, window_bounds = array<i64: 1, 17, 32>}]} {
    %c0_i32 = arith.constant 0 : i32
    %0 = arith.cmpi eq, %arg1, %c0_i32 : i32
    %1 = arith.extui %0 : i1 to i32
    %c0_i32_0 = arith.constant 0 : i32
    %2 = arith.cmpi ne, %1, %c0_i32_0 : i32
    scf.if %2 {
      %c0_78 = arith.constant 0 : index
      %c0_79 = arith.constant 0 : index
      %c0_80 = arith.constant 0 : index
      %147 = vector.load %arg2[%c0_78, %c0_79, %c0_80] : memref<1x17x32xf32, #tpu.memory_space<vmem>>, vector<1x17x32xf32>
      %c0_81 = arith.constant 0 : index
      %c0_82 = arith.constant 0 : index
      %c0_83 = arith.constant 0 : index
      %148 = vector.load %arg20[%c0_81, %c0_82, %c0_83] : memref<1x17x32xf32, #tpu.memory_space<vmem>>, vector<1x17x32xf32>
      tpu.vector_store %arg20[%c0_81, %c0_82, %c0_83], %147 {strides = array<i32>} : memref<1x17x32xf32, #tpu.memory_space<vmem>>, vector<1x17x32xf32>,
    } else {
    }
    %c0 = arith.constant 0 : index
    %c0_1 = arith.constant 0 : index
    %c0_2 = arith.constant 0 : index
    %3 = vector.load %arg20[%c0, %c0_1, %c0_2] : memref<1x17x32xf32, #tpu.memory_space<vmem>>, vector<1x17x32xf32>
    %4 = vector.shape_cast %3 : vector<1x17x32xf32> to vector<17x32xf32>
    %c0_3 = arith.constant 0 : index
    %c0_4 = arith.constant 0 : index
    %c0_5 = arith.constant 0 : index
    %5 = vector.load %arg3[%c0_3, %c0_4, %c0_5] : memref<1x1x32xf32, #tpu.memory_space<vmem>>, vector<1x1x32xf32>
    %6 = vector.shape_cast %5 : vector<1x1x32xf32> to vector<1x32xf32>
    %c0_6 = arith.constant 0 : index
    %c0_7 = arith.constant 0 : index
    %c0_8 = arith.constant 0 : index
    %7 = vector.load %arg4[%c0_6, %c0_7, %c0_8] : memref<1x1x32xf32, #tpu.memory_space<vmem>>, vector<1x1x32xf32>
    %8 = vector.shape_cast %7 : vector<1x1x32xf32> to vector<1x32xf32>
    %cst = arith.constant dense<0.000000e+00> : vector<17xf32>
    %9 = vector.multi_reduction <add>, %4, %cst [1] : vector<17x32xf32> to vector<17xf32>
    %10 = vector.shape_cast %9 : vector<17xf32> to vector<17x1xf32>
    %cst_9 = arith.constant 3.200000e+01 : f32
    %11 = vector.broadcast %cst_9 : f32 to vector<17x1xf32>
    %12 = arith.divf %10, %11 : vector<17x1xf32>
    %13 = vector.broadcast %12 : vector<17x1xf32> to vector<17x32xf32>
    %14 = arith.subf %4, %13 : vector<17x32xf32>
    %15 = arith.mulf %14, %14 : vector<17x32xf32>
    %cst_10 = arith.constant dense<0.000000e+00> : vector<17xf32>
    %16 = vector.multi_reduction <add>, %15, %cst_10 [1] : vector<17x32xf32> to vector<17xf32>
    %17 = vector.shape_cast %16 : vector<17xf32> to vector<17x1xf32>
    %cst_11 = arith.constant 3.200000e+01 : f32
    %18 = vector.broadcast %cst_11 : f32 to vector<17x1xf32>
    %19 = arith.divf %17, %18 : vector<17x1xf32>
    %cst_12 = arith.constant 9.99999974E-6 : f32
    %20 = vector.broadcast %cst_12 : f32 to vector<17x1xf32>
    %21 = arith.addf %19, %20 : vector<17x1xf32>
    %22 = math.rsqrt %21 : vector<17x1xf32>
    %23 = vector.broadcast %22 : vector<17x1xf32> to vector<17x32xf32>
    %24 = arith.mulf %14, %23 : vector<17x32xf32>
    %25 = vector.broadcast %6 : vector<1x32xf32> to vector<17x32xf32>
    %26 = arith.mulf %24, %25 : vector<17x32xf32>
    %27 = vector.broadcast %8 : vector<1x32xf32> to vector<17x32xf32>
    %28 = arith.addf %26, %27 : vector<17x32xf32>
    %29 = arith.truncf %28 : vector<17x32xf32> to vector<17x32xbf16>
    %c0_13 = arith.constant 0 : index
    %c0_14 = arith.constant 0 : index
    %c0_15 = arith.constant 0 : index
    %30 = vector.load %arg5[%c0_13, %c0_14, %c0_15] : memref<1x32x32xbf16, #tpu.memory_space<vmem>>, vector<1x32x32xbf16>
    %31 = vector.shape_cast %30 : vector<1x32x32xbf16> to vector<32x32xbf16>
    %cst_16 = arith.constant dense<0.000000e+00> : vector<17x32xf32>
    %32 = tpu.matmul %29, %31, %cst_16 {dimension_numbers = #tpu.dot_dimension_numbers<[1], [0], [0], [1], [0, 0, 1, 1], [], []>} : vector<17x32xbf16>, vector<32x32xbf16>, vector<17x32xf32> -> vector<17x32xf32>
    %c0_17 = arith.constant 0 : index
    %c0_18 = arith.constant 0 : index
    %c0_19 = arith.constant 0 : index
    %33 = vector.load %arg6[%c0_17, %c0_18, %c0_19] : memref<1x1x32xf32, #tpu.memory_space<vmem>>, vector<1x1x32xf32>
    %34 = vector.shape_cast %33 : vector<1x1x32xf32> to vector<1x32xf32>
    %35 = vector.broadcast %34 : vector<1x32xf32> to vector<17x32xf32>
    %36 = arith.addf %32, %35 : vector<17x32xf32>
    %c0_20 = arith.constant 0 : index
    %c0_21 = arith.constant 0 : index
    %c0_22 = arith.constant 0 : index
    %37 = vector.load %arg7[%c0_20, %c0_21, %c0_22] : memref<1x32x32xbf16, #tpu.memory_space<vmem>>, vector<1x32x32xbf16>
    %38 = vector.shape_cast %37 : vector<1x32x32xbf16> to vector<32x32xbf16>
    %cst_23 = arith.constant dense<0.000000e+00> : vector<17x32xf32>
    %39 = tpu.matmul %29, %38, %cst_23 {dimension_numbers = #tpu.dot_dimension_numbers<[1], [0], [0], [1], [0, 0, 1, 1], [], []>} : vector<17x32xbf16>, vector<32x32xbf16>, vector<17x32xf32> -> vector<17x32xf32>
    %c0_24 = arith.constant 0 : index
    %c0_25 = arith.constant 0 : index
    %c0_26 = arith.constant 0 : index
    %40 = vector.load %arg8[%c0_24, %c0_25, %c0_26] : memref<1x1x32xf32, #tpu.memory_space<vmem>>, vector<1x1x32xf32>
    %41 = vector.shape_cast %40 : vector<1x1x32xf32> to vector<1x32xf32>
    %42 = vector.broadcast %41 : vector<1x32xf32> to vector<17x32xf32>
    %43 = arith.addf %39, %42 : vector<17x32xf32>
    %c0_27 = arith.constant 0 : index
    %c0_28 = arith.constant 0 : index
    %c0_29 = arith.constant 0 : index
    %44 = vector.load %arg9[%c0_27, %c0_28, %c0_29] : memref<1x32x32xbf16, #tpu.memory_space<vmem>>, vector<1x32x32xbf16>
    %45 = vector.shape_cast %44 : vector<1x32x32xbf16> to vector<32x32xbf16>
    %cst_30 = arith.constant dense<0.000000e+00> : vector<17x32xf32>
    %46 = tpu.matmul %29, %45, %cst_30 {dimension_numbers = #tpu.dot_dimension_numbers<[1], [0], [0], [1], [0, 0, 1, 1], [], []>} : vector<17x32xbf16>, vector<32x32xbf16>, vector<17x32xf32> -> vector<17x32xf32>
    %c0_31 = arith.constant 0 : index
    %c0_32 = arith.constant 0 : index
    %c0_33 = arith.constant 0 : index
    %47 = vector.load %arg10[%c0_31, %c0_32, %c0_33] : memref<1x1x32xf32, #tpu.memory_space<vmem>>, vector<1x1x32xf32>
    %48 = vector.shape_cast %47 : vector<1x1x32xf32> to vector<1x32xf32>
    %49 = vector.broadcast %48 : vector<1x32xf32> to vector<17x32xf32>
    %50 = arith.addf %46, %49 : vector<17x32xf32>
    %51 = arith.truncf %36 : vector<17x32xf32> to vector<17x32xbf16>
    %52 = vector.shape_cast %51 : vector<17x32xbf16> to vector<1x17x4x8xbf16>
    %53 = tpu.transpose %52, [0, 2, 1, 3] : vector<1x17x4x8xbf16> -> vector<1x4x17x8xbf16>
    %54 = vector.shape_cast %53 : vector<1x4x17x8xbf16> to vector<4x17x8xbf16>
    %55 = arith.truncf %43 : vector<17x32xf32> to vector<17x32xbf16>
    %56 = vector.shape_cast %55 : vector<17x32xbf16> to vector<1x17x4x8xbf16>
    %57 = tpu.transpose %56, [0, 2, 1, 3] : vector<1x17x4x8xbf16> -> vector<1x4x17x8xbf16>
    %58 = vector.shape_cast %57 : vector<1x4x17x8xbf16> to vector<4x17x8xbf16>
    %59 = arith.truncf %50 : vector<17x32xf32> to vector<17x32xbf16>
    %60 = vector.shape_cast %59 : vector<17x32xbf16> to vector<1x17x4x8xbf16>
    %61 = tpu.transpose %60, [0, 2, 1, 3] : vector<1x17x4x8xbf16> -> vector<1x4x17x8xbf16>
    %62 = vector.shape_cast %61 : vector<1x4x17x8xbf16> to vector<4x17x8xbf16>
    "tpu.trace_start"() <{level = 10 : i32, message = "bqd,bkd->bqk"}> : () -> ()
    %cst_34 = arith.constant dense<0.000000e+00> : vector<4x17x17xf32>
    %63 = tpu.matmul %54, %58, %cst_34 {dimension_numbers = #tpu.dot_dimension_numbers<[2], [2], [1], [1], [0, 0, 0, 1, 1, 1], [0], [0]>} : vector<4x17x8xbf16>, vector<4x17x8xbf16>, vector<4x17x17xf32> -> vector<4x17x17xf32>
    "tpu.trace_stop"() : () -> ()
    %cst_35 = arith.constant dense<0xFF800000> : vector<4x17xf32>
    %64 = vector.multi_reduction <maximumf>, %63, %cst_35 [2] : vector<4x17x17xf32> to vector<4x17xf32>
    %65 = vector.shape_cast %64 : vector<4x17xf32> to vector<4x17x1xf32>
    %66 = vector.broadcast %65 : vector<4x17x1xf32> to vector<4x17x17xf32>
    %67 = arith.subf %63, %66 : vector<4x17x17xf32>
    %68 = math.exp %67 : vector<4x17x17xf32>
    %cst_36 = arith.constant dense<0.000000e+00> : vector<4x17xf32>
    %69 = vector.multi_reduction <add>, %68, %cst_36 [2] : vector<4x17x17xf32> to vector<4x17xf32>
    %70 = vector.shape_cast %69 : vector<4x17xf32> to vector<4x17x1xf32>
    %71 = tpu.reciprocal %70 {approx = true} : vector<4x17x1xf32> -> vector<4x17x1xf32>
    %72 = vector.broadcast %71 : vector<4x17x1xf32> to vector<4x17x17xf32>
    %73 = arith.mulf %68, %72 : vector<4x17x17xf32>
    %74 = arith.truncf %73 : vector<4x17x17xf32> to vector<4x17x17xbf16>
    "tpu.trace_start"() <{level = 10 : i32, message = "bqk,bkd->bqd"}> : () -> ()
    %cst_37 = arith.constant dense<0.000000e+00> : vector<4x17x8xf32>
    %75 = tpu.matmul %74, %62, %cst_37 {dimension_numbers = #tpu.dot_dimension_numbers<[2], [1], [1], [2], [0, 0, 0, 1, 1, 2], [0], [0]>} : vector<4x17x17xbf16>, vector<4x17x8xbf16>, vector<4x17x8xf32> -> vector<4x17x8xf32>
    "tpu.trace_stop"() : () -> ()
    %76 = arith.truncf %75 : vector<4x17x8xf32> to vector<4x17x8xbf16>
    %77 = vector.shape_cast %76 : vector<4x17x8xbf16> to vector<1x4x17x8xbf16>
    %78 = tpu.transpose %77, [0, 2, 1, 3] : vector<1x4x17x8xbf16> -> vector<1x17x4x8xbf16>
    %79 = vector.shape_cast %78 : vector<1x17x4x8xbf16> to vector<17x32xbf16>
    %c0_38 = arith.constant 0 : index
    %c0_39 = arith.constant 0 : index
    %c0_40 = arith.constant 0 : index
    %80 = vector.load %arg11[%c0_38, %c0_39, %c0_40] : memref<1x32x32xbf16, #tpu.memory_space<vmem>>, vector<1x32x32xbf16>
    %81 = vector.shape_cast %80 : vector<1x32x32xbf16> to vector<32x32xbf16>
    %cst_41 = arith.constant dense<0.000000e+00> : vector<17x32xf32>
    %82 = tpu.matmul %79, %81, %cst_41 {dimension_numbers = #tpu.dot_dimension_numbers<[1], [0], [0], [1], [0, 0, 1, 1], [], []>} : vector<17x32xbf16>, vector<32x32xbf16>, vector<17x32xf32> -> vector<17x32xf32>
    %c0_42 = arith.constant 0 : index
    %c0_43 = arith.constant 0 : index
    %c0_44 = arith.constant 0 : index
    %83 = vector.load %arg12[%c0_42, %c0_43, %c0_44] : memref<1x1x32xf32, #tpu.memory_space<vmem>>, vector<1x1x32xf32>
    %84 = vector.shape_cast %83 : vector<1x1x32xf32> to vector<1x32xf32>
    %85 = vector.broadcast %84 : vector<1x32xf32> to vector<17x32xf32>
    %86 = arith.addf %82, %85 : vector<17x32xf32>
    %87 = arith.addf %4, %86 : vector<17x32xf32>
    %c0_45 = arith.constant 0 : index
    %c0_46 = arith.constant 0 : index
    %c0_47 = arith.constant 0 : index
    %88 = vector.load %arg13[%c0_45, %c0_46, %c0_47] : memref<1x1x32xf32, #tpu.memory_space<vmem>>, vector<1x1x32xf32>
    %89 = vector.shape_cast %88 : vector<1x1x32xf32> to vector<1x32xf32>
    %c0_48 = arith.constant 0 : index
    %c0_49 = arith.constant 0 : index
    %c0_50 = arith.constant 0 : index
    %90 = vector.load %arg14[%c0_48, %c0_49, %c0_50] : memref<1x1x32xf32, #tpu.memory_space<vmem>>, vector<1x1x32xf32>
    %91 = vector.shape_cast %90 : vector<1x1x32xf32> to vector<1x32xf32>
    %cst_51 = arith.constant dense<0.000000e+00> : vector<17xf32>
    %92 = vector.multi_reduction <add>, %87, %cst_51 [1] : vector<17x32xf32> to vector<17xf32>
    %93 = vector.shape_cast %92 : vector<17xf32> to vector<17x1xf32>
    %cst_52 = arith.constant 3.200000e+01 : f32
    %94 = vector.broadcast %cst_52 : f32 to vector<17x1xf32>
    %95 = arith.divf %93, %94 : vector<17x1xf32>
    %96 = vector.broadcast %95 : vector<17x1xf32> to vector<17x32xf32>
    %97 = arith.subf %87, %96 : vector<17x32xf32>
    %98 = arith.mulf %97, %97 : vector<17x32xf32>
    %cst_53 = arith.constant dense<0.000000e+00> : vector<17xf32>
    %99 = vector.multi_reduction <add>, %98, %cst_53 [1] : vector<17x32xf32> to vector<17xf32>
    %100 = vector.shape_cast %99 : vector<17xf32> to vector<17x1xf32>
    %cst_54 = arith.constant 3.200000e+01 : f32
    %101 = vector.broadcast %cst_54 : f32 to vector<17x1xf32>
    %102 = arith.divf %100, %101 : vector<17x1xf32>
    %cst_55 = arith.constant 9.99999974E-6 : f32
    %103 = vector.broadcast %cst_55 : f32 to vector<17x1xf32>
    %104 = arith.addf %102, %103 : vector<17x1xf32>
    %105 = math.rsqrt %104 : vector<17x1xf32>
    %106 = vector.broadcast %105 : vector<17x1xf32> to vector<17x32xf32>
    %107 = arith.mulf %97, %106 : vector<17x32xf32>
    %108 = vector.broadcast %89 : vector<1x32xf32> to vector<17x32xf32>
    %109 = arith.mulf %107, %108 : vector<17x32xf32>
    %110 = vector.broadcast %91 : vector<1x32xf32> to vector<17x32xf32>
    %111 = arith.addf %109, %110 : vector<17x32xf32>
    %112 = arith.truncf %111 : vector<17x32xf32> to vector<17x32xbf16>
    %c0_56 = arith.constant 0 : index
    %c0_57 = arith.constant 0 : index
    %c0_58 = arith.constant 0 : index
    %113 = vector.load %arg15[%c0_56, %c0_57, %c0_58] : memref<1x32x64xbf16, #tpu.memory_space<vmem>>, vector<1x32x64xbf16>
    %114 = vector.shape_cast %113 : vector<1x32x64xbf16> to vector<32x64xbf16>
    %cst_59 = arith.constant dense<0.000000e+00> : vector<17x64xf32>
    %115 = tpu.matmul %112, %114, %cst_59 {dimension_numbers = #tpu.dot_dimension_numbers<[1], [0], [0], [1], [0, 0, 1, 1], [], []>} : vector<17x32xbf16>, vector<32x64xbf16>, vector<17x64xf32> -> vector<17x64xf32>
    %c0_60 = arith.constant 0 : index
    %c0_61 = arith.constant 0 : index
    %c0_62 = arith.constant 0 : index
    %116 = vector.load %arg16[%c0_60, %c0_61, %c0_62] : memref<1x1x64xf32, #tpu.memory_space<vmem>>, vector<1x1x64xf32>
    %117 = vector.shape_cast %116 : vector<1x1x64xf32> to vector<1x64xf32>
    %118 = vector.broadcast %117 : vector<1x64xf32> to vector<17x64xf32>
    %119 = arith.addf %115, %118 : vector<17x64xf32>
    %120 = arith.mulf %119, %119 : vector<17x64xf32>
    %121 = arith.mulf %119, %120 : vector<17x64xf32>
    %cst_63 = arith.constant 4.471500e-02 : f32
    %122 = vector.broadcast %cst_63 : f32 to vector<17x64xf32>
    %123 = arith.mulf %122, %121 : vector<17x64xf32>
    %124 = arith.addf %119, %123 : vector<17x64xf32>
    %cst_64 = arith.constant 0.797884583 : f32
    %125 = vector.broadcast %cst_64 : f32 to vector<17x64xf32>
    %126 = arith.mulf %125, %124 : vector<17x64xf32>
    %127 = math.tanh %126 : vector<17x64xf32>
    %cst_65 = arith.constant 1.000000e+00 : f32
    %128 = vector.broadcast %cst_65 : f32 to vector<17x64xf32>
    %129 = arith.addf %128, %127 : vector<17x64xf32>
    %cst_66 = arith.constant 5.000000e-01 : f32
    %130 = vector.broadcast %cst_66 : f32 to vector<17x64xf32>
    %131 = arith.mulf %130, %129 : vector<17x64xf32>
    %132 = arith.mulf %119, %131 : vector<17x64xf32>
    %133 = arith.truncf %132 : vector<17x64xf32> to vector<17x64xbf16>
    %c0_67 = arith.constant 0 : index
    %c0_68 = arith.constant 0 : index
    %c0_69 = arith.constant 0 : index
    %134 = vector.load %arg17[%c0_67, %c0_68, %c0_69] : memref<1x64x32xbf16, #tpu.memory_space<vmem>>, vector<1x64x32xbf16>
    %135 = vector.shape_cast %134 : vector<1x64x32xbf16> to vector<64x32xbf16>
    %cst_70 = arith.constant dense<0.000000e+00> : vector<17x32xf32>
    %136 = tpu.matmul %133, %135, %cst_70 {dimension_numbers = #tpu.dot_dimension_numbers<[1], [0], [0], [1], [0, 0, 1, 1], [], []>} : vector<17x64xbf16>, vector<64x32xbf16>, vector<17x32xf32> -> vector<17x32xf32>
    %c0_71 = arith.constant 0 : index
    %c0_72 = arith.constant 0 : index
    %c0_73 = arith.constant 0 : index
    %137 = vector.load %arg18[%c0_71, %c0_72, %c0_73] : memref<1x1x32xf32, #tpu.memory_space<vmem>>, vector<1x1x32xf32>
    %138 = vector.shape_cast %137 : vector<1x1x32xf32> to vector<1x32xf32>
    %139 = vector.broadcast %138 : vector<1x32xf32> to vector<17x32xf32>
    %140 = arith.addf %136, %139 : vector<17x32xf32>
    %141 = arith.addf %87, %140 : vector<17x32xf32>
    %142 = vector.shape_cast %141 : vector<17x32xf32> to vector<1x17x32xf32>
    %c0_74 = arith.constant 0 : index
    %c0_75 = arith.constant 0 : index
    %c0_76 = arith.constant 0 : index
    %143 = vector.load %arg20[%c0_74, %c0_75, %c0_76] : memref<1x17x32xf32, #tpu.memory_space<vmem>>, vector<1x17x32xf32>
    tpu.vector_store %arg20[%c0_74, %c0_75, %c0_76], %142 {strides = array<i32>} : memref<1x17x32xf32, #tpu.memory_space<vmem>>, vector<1x17x32xf32>,
    %c1_i32 = arith.constant 1 : i32
    %144 = arith.cmpi eq, %arg1, %c1_i32 : i32
    %145 = arith.extui %144 : i1 to i32
    %c0_i32_77 = arith.constant 0 : i32
    %146 = arith.cmpi ne, %145, %c0_i32_77 : i32
    scf.if %146 {
      %c0_78 = arith.constant 0 : index
      %c0_79 = arith.constant 0 : index
      %c0_80 = arith.constant 0 : index
      %147 = vector.load %arg20[%c0_78, %c0_79, %c0_80] : memref<1x17x32xf32, #tpu.memory_space<vmem>>, vector<1x17x32xf32>
      %c0_81 = arith.constant 0 : index
      %c0_82 = arith.constant 0 : index
      %c0_83 = arith.constant 0 : index
      %148 = vector.load %arg19[%c0_81, %c0_82, %c0_83] : memref<1x17x32xf32, #tpu.memory_space<vmem>>, vector<1x17x32xf32>
      tpu.vector_store %arg19[%c0_81, %c0_82, %c0_83], %147 {strides = array<i32>} : memref<1x17x32xf32, #tpu.memory_space<vmem>>, vector<1x17x32xf32>,
    } else {
    }
    return
  }
  func.func @transform_0(%arg0: i32, %arg1: i32) -> (i32, i32, i32) {
    %c0_i32 = arith.constant 0 : i32
    %c0_i32_0 = arith.constant 0 : i32
    %c0_i32_1 = arith.constant 0 : i32
    return %arg0, %c0_i32, %c0_i32_0 : i32, i32, i32
  }
  func.func @transform_1(%arg0: i32, %arg1: i32) -> (i32, i32, i32) {
    %c0_i32 = arith.constant 0 : i32
    %c0_i32_0 = arith.constant 0 : i32
    %c0_i32_1 = arith.constant 0 : i32
    return %arg1, %c0_i32, %c0_i32_0 : i32, i32, i32
  }
  func.func @transform_2(%arg0: i32, %arg1: i32) -> (i32, i32, i32) {
    %c0_i32 = arith.constant 0 : i32
    %c0_i32_0 = arith.constant 0 : i32
    %c0_i32_1 = arith.constant 0 : i32
    return %arg1, %c0_i32, %c0_i32_0 : i32, i32, i32
  }
  func.func @transform_3(%arg0: i32, %arg1: i32) -> (i32, i32, i32) {
    %c0_i32 = arith.constant 0 : i32
    %c0_i32_0 = arith.constant 0 : i32
    %c0_i32_1 = arith.constant 0 : i32
    return %arg1, %c0_i32, %c0_i32_0 : i32, i32, i32
  }
  func.func @transform_4(%arg0: i32, %arg1: i32) -> (i32, i32, i32) {
    %c0_i32 = arith.constant 0 : i32
    %c0_i32_0 = arith.constant 0 : i32
    %c0_i32_1 = arith.constant 0 : i32
    return %arg1, %c0_i32, %c0_i32_0 : i32, i32, i32
  }
  func.func @transform_5(%arg0: i32, %arg1: i32) -> (i32, i32, i32) {
    %c0_i32 = arith.constant 0 : i32
    %c0_i32_0 = arith.constant 0 : i32
    %c0_i32_1 = arith.constant 0 : i32
    return %arg1, %c0_i32, %c0_i32_0 : i32, i32, i32
  }
  func.func @transform_6(%arg0: i32, %arg1: i32) -> (i32, i32, i32) {
    %c0_i32 = arith.constant 0 : i32
    %c0_i32_0 = arith.constant 0 : i32
    %c0_i32_1 = arith.constant 0 : i32
    return %arg1, %c0_i32, %c0_i32_0 : i32, i32, i32
  }
  func.func @transform_7(%arg0: i32, %arg1: i32) -> (i32, i32, i32) {
    %c0_i32 = arith.constant 0 : i32
    %c0_i32_0 = arith.constant 0 : i32
    %c0_i32_1 = arith.constant 0 : i32
    return %arg1, %c0_i32, %c0_i32_0 : i32, i32, i32
  }
  func.func @transform_8(%arg0: i32, %arg1: i32) -> (i32, i32, i32) {
    %c0_i32 = arith.constant 0 : i32
    %c0_i32_0 = arith.constant 0 : i32
    %c0_i32_1 = arith.constant 0 : i32
    return %arg1, %c0_i32, %c0_i32_0 : i32, i32, i32
  }
  func.func @transform_9(%arg0: i32, %arg1: i32) -> (i32, i32, i32) {
    %c0_i32 = arith.constant 0 : i32
    %c0_i32_0 = arith.constant 0 : i32
    %c0_i32_1 = arith.constant 0 : i32
    return %arg1, %c0_i32, %c0_i32_0 : i32, i32, i32
  }
  func.func @transform_10(%arg0: i32, %arg1: i32) -> (i32, i32, i32) {
    %c0_i32 = arith.constant 0 : i32
    %c0_i32_0 = arith.constant 0 : i32
    %c0_i32_1 = arith.constant 0 : i32
    return %arg1, %c0_i32, %c0_i32_0 : i32, i32, i32
  }
  func.func @transform_11(%arg0: i32, %arg1: i32) -> (i32, i32, i32) {
    %c0_i32 = arith.constant 0 : i32
    %c0_i32_0 = arith.constant 0 : i32
    %c0_i32_1 = arith.constant 0 : i32
    return %arg1, %c0_i32, %c0_i32_0 : i32, i32, i32
  }
  func.func @transform_12(%arg0: i32, %arg1: i32) -> (i32, i32, i32) {
    %c0_i32 = arith.constant 0 : i32
    %c0_i32_0 = arith.constant 0 : i32
    %c0_i32_1 = arith.constant 0 : i32
    return %arg1, %c0_i32, %c0_i32_0 : i32, i32, i32
  }
  func.func @transform_13(%arg0: i32, %arg1: i32) -> (i32, i32, i32) {
    %c0_i32 = arith.constant 0 : i32
    %c0_i32_0 = arith.constant 0 : i32
    %c0_i32_1 = arith.constant 0 : i32
    return %arg1, %c0_i32, %c0_i32_0 : i32, i32, i32
  }
  func.func @transform_14(%arg0: i32, %arg1: i32) -> (i32, i32, i32) {
    %c0_i32 = arith.constant 0 : i32
    %c0_i32_0 = arith.constant 0 : i32
    %c0_i32_1 = arith.constant 0 : i32
    return %arg1, %c0_i32, %c0_i32_0 : i32, i32, i32
  }
  func.func @transform_15(%arg0: i32, %arg1: i32) -> (i32, i32, i32) {
    %c0_i32 = arith.constant 0 : i32
    %c0_i32_0 = arith.constant 0 : i32
    %c0_i32_1 = arith.constant 0 : i32
    return %arg1, %c0_i32, %c0_i32_0 : i32, i32, i32
  }
  func.func @transform_16(%arg0: i32, %arg1: i32) -> (i32, i32, i32) {
    %c0_i32 = arith.constant 0 : i32
    %c0_i32_0 = arith.constant 0 : i32
    %c0_i32_1 = arith.constant 0 : i32
    return %arg1, %c0_i32, %c0_i32_0 : i32, i32, i32
  }
  func.func @transform_17(%arg0: i32, %arg1: i32) -> (i32, i32, i32) {
    %c0_i32 = arith.constant 0 : i32
    %c0_i32_0 = arith.constant 0 : i32
    %c0_i32_1 = arith.constant 0 : i32
    return %arg0, %c0_i32, %c0_i32_0 : i32, i32, i32
  }
}

module attributes {stable_mosaic.version = 11 : i64} {
  func.func @_head_kernel(%arg0: memref<2x1x32xf32, #tpu.memory_space<vmem>>, %arg1: memref<1x32xf32, #tpu.memory_space<vmem>>, %arg2: memref<1x32xf32, #tpu.memory_space<vmem>>, %arg3: memref<32x128xbf16, #tpu.memory_space<vmem>>, %arg4: memref<1x128xf32, #tpu.memory_space<vmem>>, %arg5: memref<2x128xf32, #tpu.memory_space<vmem>>) attributes {dimension_semantics = [], scalar_prefetch = 0 : i64, scratch_operands = 0 : i64, tpu.core_type = #tpu.core_type<tc>} {
    %c0 = arith.constant 0 : index
    %c0_0 = arith.constant 0 : index
    %c0_1 = arith.constant 0 : index
    %0 = vector.load %arg0[%c0, %c0_0, %c0_1] : memref<2x1x32xf32, #tpu.memory_space<vmem>>, vector<2x1x32xf32>
    %c0_2 = arith.constant 0 : index
    %c0_3 = arith.constant 0 : index
    %1 = vector.load %arg1[%c0_2, %c0_3] : memref<1x32xf32, #tpu.memory_space<vmem>>, vector<1x32xf32>
    %c0_4 = arith.constant 0 : index
    %c0_5 = arith.constant 0 : index
    %2 = vector.load %arg2[%c0_4, %c0_5] : memref<1x32xf32, #tpu.memory_space<vmem>>, vector<1x32xf32>
    %cst = arith.constant dense<0.000000e+00> : vector<2x1xf32>
    %3 = vector.multi_reduction <add>, %0, %cst [2] : vector<2x1x32xf32> to vector<2x1xf32>
    %4 = vector.shape_cast %3 : vector<2x1xf32> to vector<2x1x1xf32>
    %cst_6 = arith.constant 3.200000e+01 : f32
    %5 = vector.broadcast %cst_6 : f32 to vector<2x1x1xf32>
    %6 = arith.divf %4, %5 : vector<2x1x1xf32>
    %7 = vector.broadcast %6 : vector<2x1x1xf32> to vector<2x1x32xf32>
    %8 = arith.subf %0, %7 : vector<2x1x32xf32>
    %9 = arith.mulf %8, %8 : vector<2x1x32xf32>
    %cst_7 = arith.constant dense<0.000000e+00> : vector<2x1xf32>
    %10 = vector.multi_reduction <add>, %9, %cst_7 [2] : vector<2x1x32xf32> to vector<2x1xf32>
    %11 = vector.shape_cast %10 : vector<2x1xf32> to vector<2x1x1xf32>
    %cst_8 = arith.constant 3.200000e+01 : f32
    %12 = vector.broadcast %cst_8 : f32 to vector<2x1x1xf32>
    %13 = arith.divf %11, %12 : vector<2x1x1xf32>
    %cst_9 = arith.constant 9.99999974E-6 : f32
    %14 = vector.broadcast %cst_9 : f32 to vector<2x1x1xf32>
    %15 = arith.addf %13, %14 : vector<2x1x1xf32>
    %16 = math.rsqrt %15 : vector<2x1x1xf32>
    %17 = vector.broadcast %16 : vector<2x1x1xf32> to vector<2x1x32xf32>
    %18 = arith.mulf %8, %17 : vector<2x1x32xf32>
    %19 = vector.shape_cast %1 : vector<1x32xf32> to vector<1x1x32xf32>
    %20 = vector.broadcast %19 : vector<1x1x32xf32> to vector<2x1x32xf32>
    %21 = arith.mulf %18, %20 : vector<2x1x32xf32>
    %22 = vector.shape_cast %2 : vector<1x32xf32> to vector<1x1x32xf32>
    %23 = vector.broadcast %22 : vector<1x1x32xf32> to vector<2x1x32xf32>
    %24 = arith.addf %21, %23 : vector<2x1x32xf32>
    %cst_10 = arith.constant dense<0.000000e+00> : vector<2x32xf32>
    %25 = vector.multi_reduction <add>, %24, %cst_10 [1] : vector<2x1x32xf32> to vector<2x32xf32>
    %26 = arith.truncf %25 : vector<2x32xf32> to vector<2x32xbf16>
    %c0_11 = arith.constant 0 : index
    %c0_12 = arith.constant 0 : index
    %27 = vector.load %arg3[%c0_11, %c0_12] : memref<32x128xbf16, #tpu.memory_space<vmem>>, vector<32x128xbf16>
    %cst_13 = arith.constant dense<0.000000e+00> : vector<2x128xf32>
    %28 = tpu.matmul %26, %27, %cst_13 {dimension_numbers = #tpu.dot_dimension_numbers<[1], [0], [0], [1], [0, 0, 1, 1], [], []>} : vector<2x32xbf16>, vector<32x128xbf16>, vector<2x128xf32> -> vector<2x128xf32>
    %c0_14 = arith.constant 0 : index
    %c0_15 = arith.constant 0 : index
    %29 = vector.load %arg4[%c0_14, %c0_15] : memref<1x128xf32, #tpu.memory_space<vmem>>, vector<1x128xf32>
    %30 = vector.broadcast %29 : vector<1x128xf32> to vector<2x128xf32>
    %31 = arith.addf %28, %30 : vector<2x128xf32>
    %c0_16 = arith.constant 0 : index
    %c0_17 = arith.constant 0 : index
    %32 = vector.load %arg5[%c0_16, %c0_17] : memref<2x128xf32, #tpu.memory_space<vmem>>, vector<2x128xf32>
    tpu.vector_store %arg5[%c0_16, %c0_17], %31 {strides = array<i32>} : memref<2x128xf32, #tpu.memory_space<vmem>>, vector<2x128xf32>,
    return
  }
}

</mosaic_0001>

<llo_original>
// kernel: rankvit_forward.3
$region0: #{rankvit_forward.3}
  #allocation0 [shape = 'u32[]', space=smem, size = 0x4, offset = 0x4, fixed_abs, tag = 'smem constant byte address 0x4 - core index']
  #allocation1 [shape = 'u32[144,128]{1,0:T(1,128)}', space=vmem, size = 0x12000, scoped, tag = 'internal scratch']
  %s0 = inlined_call_operand.vmem [shape: f32[2,16,48], index: 0, kind: input, shape index: {}]
  %s1 = inlined_call_operand.vmem [shape: bf16[48,32], index: 1, kind: input, shape index: {}]
  %s2 = inlined_call_operand.vmem [shape: f32[1,32], index: 2, kind: input, shape index: {}]
  %s3 = inlined_call_operand.vmem [shape: f32[1,1,32], index: 3, kind: input, shape index: {}]
  %s4 = inlined_call_operand.vmem [shape: f32[1,17,32], index: 4, kind: input, shape index: {}]
  %s5 = inlined_call_operand.vmem [shape: f32[2,17,32], index: 5, kind: output, shape index: {}]
  %s6 = sld [smem:[#allocation0]]
  $region30: #{rankvit_forward.3} parent=0
    _
  %s8 = ssub.s32 1, %s6
  %s9 = scalar_select 0, %s8, %s6
  // Predicated region
  $region2: #{rankvit_forward.3} parent=0 // pred_check
    _
  $region3: #{rankvit_forward.3} parent=0 // pred_check_branch
    %11 = sbr.rel (0) target = $region5
  $region4: #{rankvit_forward.3} parent=0 // pred_region
    _
  $region5: #{rankvit_forward.3} parent=0 // pred_fallthru
    _
  // Predicated region
  $region6: #{rankvit_forward.3} parent=0 // pred_check
    _
  $region7: #{rankvit_forward.3} parent=0 // pred_check_branch
    %13 = sbr.rel (0) target = $region9
  $region8: #{rankvit_forward.3} parent=0 // pred_region
    _
  $region9: #{rankvit_forward.3} parent=0 // pred_fallthru
    _
  // Predicated region
  $region10: #{rankvit_forward.3} parent=0 // pred_check
    _
  $region11: #{rankvit_forward.3} parent=0 // pred_check_branch
    %15 = sbr.rel (0) target = $region13
  $region12: #{rankvit_forward.3} parent=0 // pred_region
    _
  $region13: #{rankvit_forward.3} parent=0 // pred_fallthru
    _
  // Predicated region
  $region14: #{rankvit_forward.3} parent=0 // pred_check
    _
  $region15: #{rankvit_forward.3} parent=0 // pred_check_branch
    %17 = sbr.rel (0) target = $region17
  $region16: #{rankvit_forward.3} parent=0 // pred_region
    _
  $region17: #{rankvit_forward.3} parent=0 // pred_fallthru
    _
  // Predicated region
  $region18: #{rankvit_forward.3} parent=0 // pred_check
    _
  $region19: #{rankvit_forward.3} parent=0 // pred_check_branch
    %19 = sbr.rel (0) target = $region21
  $region20: #{rankvit_forward.3} parent=0 // pred_region
    _
  $region21: #{rankvit_forward.3} parent=0 // pred_fallthru
    _
  %v21 = vld [vmem:[%s4] sm:$0xff]
  %v22 = vld [vmem:[%s4 + $0x8] sm:$0xff]
  %v23 = vld [vmem:[%s4 + $0x10] sm:$0x1]
  %v24 = vld [vmem:[%s0] sm:$0xff]
  %v25 = vld [vmem:[%s0 + $0x8] sm:$0xff]
  %v26 = vld [vmem:[%s0 + $0x10] sm:$0xff]
  %v27 = vld [vmem:[%s0 + $0x18] sm:$0xff]
  %v28 = vpack.c.bf16 %v25, %v24
  %v29 = vpack.c.bf16 %v27, %v26
  %v30 = vld [vmem:[%s1] sm:$0xf]
  %v31 = vld [vmem:[%s1 + $0x4] sm:$0xf]
  %v32 = vld [vmem:[%s1 + $0x8] sm:$0xf]
  %v33 = vld [vmem:[%s1 + $0xc] sm:$0xf]
  %v34 = vld [vmem:[%s1 + $0x10] sm:$0xf]
  %v35 = vld [vmem:[%s1 + $0x14] sm:$0xf]
  %v36 = vld [vmem:[%s2] sm:$0x1]
  %v38 = vlaneseq
  %v39 = vshrl.u32 %v38, 7
  %v40 = vsub.s32 0, %v39
  %v41 = vrot.slane %v36, %v40
  %v49 = vunpack.c.l.b16 %v30
  %v50 = vunpack.c.l.b16 %v31
  %v51 = vunpack.c.l.b16 %v32
  %v52 = vunpack.c.l.b16 %v33
  %v53 = vunpack.c.l.b16 %v34
  %v54 = vunpack.c.l.b16 %v35
  %v55 = vpack.c.b16 %v50, %v49
  %v56 = vpack.c.b16 %v52, %v51
  %v57 = vpack.c.b16 %v54, %v53
  %vm61 = vcmask 392192
  %v63 = vsel %vm61, %v28, 0
  %v66 = vsel %vm61, %v29, 0
  %68 = vmatprep.subr.bf16.mxu0 0
  %69 = vmatpush1.bf16.msra.mxu0 %v55
  %70 = vmatprep.subr.bf16.mxu0 0
  %71 = vmatpush1.bf16.msra.mxu0 %v56
  %72 = vmatprep.subr.bf16.mxu0 0
  %73 = vmatpush1.bf16.msra.mxu0 %v57
  %74 = vmatprep.subr.bf16.mxu0 0
  %75 = vmatpush1.bf16.msra.mxu0 0
  %76 = vmatprep.subr.bf16.mxu0 0
  %77 = vmatpush1.bf16.msra.mxu0 0
  %78 = vmatprep.subr.bf16.mxu0 0
  %79 = vmatpush1.bf16.msra.mxu0 0
  %80 = vmatprep.subr.bf16.mxu0 0
  %81 = vmatpush1.bf16.msra.mxu0 0
  %82 = vmatprep.subr.bf16.mxu0 0
  %83 = vmatpush1.bf16.msra.mxu0 0
  %84 = vmatprep.subr.bf16.mxu0 0
  %85 = vmatpush1.bf16.msra.mxu0 0
  %86 = vmatprep.subr.bf16.mxu0 0
  %87 = vmatpush1.bf16.msra.mxu0 0
  %88 = vmatprep.subr.bf16.mxu0 0
  %89 = vmatpush1.bf16.msra.mxu0 0
  %90 = vmatprep.subr.bf16.mxu0 0
  %91 = vmatpush1.bf16.msra.mxu0 0
  %92 = vmatprep.subr.bf16.mxu0 0
  %93 = vmatpush1.bf16.msra.mxu0 0
  %94 = vmatprep.subr.bf16.mxu0 0
  %95 = vmatpush1.bf16.msra.mxu0 0
  %96 = vmatprep.subr.bf16.mxu0 0
  %97 = vmatpush1.bf16.msra.mxu0 0
  %98 = vmatprep.subr.bf16.mxu0 0
  %99 = vmatpush1.bf16.msra.mxu0 0
  %100 = vmatprep.mubr.bf16.mxu0 0
  %101 = vmatmul.mubr.bf16.gmra.mrb[0].mxu0 %v63
  %v102 = vpop.f32.mrb[0].mxu0
  %v103 = vadd.f32 %v41, %v102
  %v104 = vpop.f32.mrb[0].mxu0
  %v105 = vpop.f32.mrb[0].mxu0
  %v106 = vadd.f32 %v41, %v105
  %v107 = vpop.f32.mrb[0].mxu0
  %108 = vmatprep.mubr.bf16.mxu0 0
  %109 = vmatmul.mubr.bf16.gmra.mrb[0].mxu0 %v66
  %v110 = vpop.f32.mrb[0].mxu0
  %v111 = vadd.f32 %v41, %v110
  %v112 = vpop.f32.mrb[0].mxu0
  %v113 = vpop.f32.mrb[0].mxu0
  %v114 = vadd.f32 %v41, %v113
  %v115 = vpop.f32.mrb[0].mxu0
  %116 = vdwg.mxu0
  %v117 = vld [vmem:[%s3] sm:$0x1]
  %v118 = vadd.f32 %v117, %v21
  %vm119 = vcmask 253952
  %120 = vst.msk [vmem:[%s5] sm:$0x1] %vm119, %v118
  %121 = vst.msk [vmem:[%s5 + $0x18] sm:$0x1] %vm119, %v118
  %vm125 = vcmask 1046528
  %v126 = vrot.slane %v21, 1
  %v127 = vrot.slane %v22, 1
  %v128 = vsel %vm125, %v126, %v127
  %v129 = vrot.slane %v23, 1
  %v130 = vsel %vm125, %v127, %v129
  %v133 = vadd.f32 %v103, %v128
  %v134 = vadd.f32 %v106, %v130
  %v135 = vadd.f32 %v111, %v128
  %v136 = vadd.f32 %v114, %v130
  %vm137 = vcmask 261120
  %138 = vst.msk [vmem:[%s5 + $0x1] sm:$0xff] %vm137, %v133
  %139 = vst.msk [vmem:[%s5 + $0x9] sm:$0xff] %vm137, %v134
  %140 = vst.msk [vmem:[%s5 + $0x19] sm:$0xff] %vm137, %v135
  %141 = vst.msk [vmem:[%s5 + $0x21] sm:$0xff] %vm137, %v136
  // Predicated region
  $region22: #{rankvit_forward.3} parent=0 // pred_check
    _
  $region23: #{rankvit_forward.3} parent=0 // pred_check_branch
    %143 = sbr.rel (0) target = $region25
  $region24: #{rankvit_forward.3} parent=0 // pred_region
    _
  $region25: #{rankvit_forward.3} parent=0 // pred_fallthru
    _
  // Predicated region
  $region26: #{rankvit_forward.3} parent=0 // pred_check
    _
  $region27: #{rankvit_forward.3} parent=0 // pred_check_branch
    %145 = sbr.rel (0) target = $region29
  $region28: #{rankvit_forward.3} parent=0 // pred_region
    _
  $region29: #{rankvit_forward.3} parent=0 // pred_fallthru
    _

// kernel: rankvit_forward.5
$region0: #{rankvit_forward.5}
  #allocation0 [shape = 'u32[]', space=smem, size = 0x4, offset = 0x4, fixed_abs, tag = 'smem constant byte address 0x4 - core index']
  #allocation1 [shape = 'u32[144,128]{1,0:T(1,128)}', space=vmem, size = 0x12000, scoped, tag = 'internal scratch']
  %s0 = inlined_call_operand.vmem [shape: f32[2,1,32], index: 0, kind: input, shape index: {}]
  %s1 = inlined_call_operand.vmem [shape: f32[1,32], index: 1, kind: input, shape index: {}]
  %s2 = inlined_call_operand.vmem [shape: f32[1,32], index: 2, kind: input, shape index: {}]
  %s3 = inlined_call_operand.vmem [shape: bf16[32,128], index: 3, kind: input, shape index: {}]
  %s4 = inlined_call_operand.vmem [shape: f32[1,128], index: 4, kind: input, shape index: {}]
  %s5 = inlined_call_operand.hbm [shape: f32[2,128], index: 5, kind: output, shape index: {}]
  %s6 = sld [smem:[#allocation0]]
  $region30: #{rankvit_forward.5} parent=0
    _
  %s8 = ssub.s32 1, %s6
  %s9 = scalar_select 0, %s8, %s6
  $region1: #{rankvit_forward.5} parent=0
    #allocation2 [shape = 'u8[1024]{0}', space=vmem, size = 0x400, scoped, tag = 'output window, operand 0, single buffered']
    #allocation3 [shape = 's32[1]{0}', space=sflag, size = 0x4, scoped, tag = 'scoped memory for rankvit_forward.5']
    %10 = vsyncpa [#allocation3], 0
    // Predicated region
    $region2: #{rankvit_forward.5} parent=1 // pred_check
      _
    $region3: #{rankvit_forward.5} parent=1 // pred_check_branch
      %12 = sbr.rel (0) target = $region5
    $region4: #{rankvit_forward.5} parent=1 // pred_region
      _
    $region5: #{rankvit_forward.5} parent=1 // pred_fallthru
      _
    // Predicated region
    $region6: #{rankvit_forward.5} parent=1 // pred_check
      _
    $region7: #{rankvit_forward.5} parent=1 // pred_check_branch
      %14 = sbr.rel (0) target = $region9
    $region8: #{rankvit_forward.5} parent=1 // pred_region
      _
    $region9: #{rankvit_forward.5} parent=1 // pred_fallthru
      _
    // Predicated region
    $region10: #{rankvit_forward.5} parent=1 // pred_check
      _
    $region11: #{rankvit_forward.5} parent=1 // pred_check_branch
      %16 = sbr.rel (0) target = $region13
    $region12: #{rankvit_forward.5} parent=1 // pred_region
      _
    $region13: #{rankvit_forward.5} parent=1 // pred_fallthru
      _
    // Predicated region
    $region14: #{rankvit_forward.5} parent=1 // pred_check
      _
    $region15: #{rankvit_forward.5} parent=1 // pred_check_branch
      %18 = sbr.rel (0) target = $region17
    $region16: #{rankvit_forward.5} parent=1 // pred_region
      _
    $region17: #{rankvit_forward.5} parent=1 // pred_fallthru
      _
    // Predicated region
    $region18: #{rankvit_forward.5} parent=1 // pred_check
      _
    $region19: #{rankvit_forward.5} parent=1 // pred_check_branch
      %20 = sbr.rel (0) target = $region21
    $region20: #{rankvit_forward.5} parent=1 // pred_region
      _
    $region21: #{rankvit_forward.5} parent=1 // pred_fallthru
      _
    %v22 = vld [vmem:[%s0] sm:$0x1]
    %v23 = vld [vmem:[%s0 + $0x1] sm:$0x1]
    %v24 = vld [vmem:[%s1] sm:$0x1]
    %v25 = vld [vmem:[%s2] sm:$0x1]
    %vm26 = vcmask 253952
    %v27 = vsel %vm26, %v22, 0.0
    %28 = vadd.xlane.f32.xlu0 %v27
    %v29 = vpop.xlane.xlu0 %28
    %v30 = vsel %vm26, %v23, 0.0
    %31 = vadd.xlane.f32.xlu0 %v30
    %v32 = vpop.xlane.xlu0 %31
    %v33 = vrcp.pop 32.0
    %v34 = vmul.f32 %v29, %v33
    %v35 = vmul.f32 %v32, %v33
    %v36 = vsub.f32 %v22, %v34
    %v37 = vsub.f32 %v23, %v35
    %v38 = vmul.f32 %v36, %v36
    %v39 = vmul.f32 %v37, %v37
    %v40 = vsel %vm26, %v38, 0.0
    %41 = vadd.xlane.f32.xlu0 %v40
    %v42 = vpop.xlane.xlu0 %41
    %v43 = vsel %vm26, %v39, 0.0
    %44 = vadd.xlane.f32.xlu0 %v43
    %v45 = vpop.xlane.xlu0 %44
    %v46 = vmul.f32 %v42, %v33
    %v47 = vmul.f32 %v45, %v33
    %v48 = vadd.f32 %v46, 1e-05
    %v49 = vadd.f32 %v47, 1e-05
    %v50 = vrsqrt.pop %v48
    %v51 = vrsqrt.pop %v49
    %v52 = vmul.f32 %v36, %v50
    %v53 = vmul.f32 %v37, %v51
    %v54 = vmul.f32 %v52, %v24
    %v55 = vmul.f32 %v53, %v24
    %v56 = vadd.f32 %v54, %v25
    %v57 = vadd.f32 %v55, %v25
    %v58 = vadd.f32 %v56, 0.0
    %v59 = vadd.f32 %v57, 0.0
    %v60 = vpack.c.bf16 %v58, %v58
    %v61 = vpack.c.bf16 %v59, %v59
    %v62 = vld [vmem:[%s3] sm:$0xf]
    %v63 = vld [vmem:[%s3 + $0x4] sm:$0xf]
    %v64 = vld [vmem:[%s3 + $0x8] sm:$0xf]
    %v65 = vld [vmem:[%s3 + $0xc] sm:$0xf]
    %v66 = vld [vmem:[%s4] sm:$0x1]
    %v68 = vlaneseq
    %v69 = vshrl.u32 %v68, 7
    %v70 = vsub.s32 0, %v69
    %v71 = vrot.slane %v66, %v70
    %v75 = vunpack.c.l.b16 %v60
    %v76 = vunpack.c.l.b16 %v61
    %v77 = vrot.slane %v76, 7
    %vm78 = vcmask 1041409
    %v79 = vsel %vm78, %v77, %v75
    %v80 = vpack.c.b16 %v79, %v79
    %v85 = vunpack.c.l.b16 %v62
    %v86 = vunpack.c.l.b16 %v63
    %v87 = vunpack.c.l.b16 %v64
    %v88 = vunpack.c.l.b16 %v65
    %v89 = vpack.c.b16 %v86, %v85
    %v90 = vpack.c.b16 %v88, %v87
    %vm93 = vcmask 261120
    %v95 = vsel %vm93, %v80, 0
    %97 = vmatprep.subr.bf16.mxu0 0
    %98 = vmatpush1.bf16.msra.mxu0 %v89
    %99 = vmatprep.subr.bf16.mxu0 0
    %100 = vmatpush1.bf16.msra.mxu0 %v90
    %101 = vmatprep.subr.bf16.mxu0 0
    %102 = vmatpush1.bf16.msra.mxu0 0
    %103 = vmatprep.subr.bf16.mxu0 0
    %104 = vmatpush1.bf16.msra.mxu0 0
    %105 = vmatprep.subr.bf16.mxu0 0
    %106 = vmatpush1.bf16.msra.mxu0 0
    %107 = vmatprep.subr.bf16.mxu0 0
    %108 = vmatpush1.bf16.msra.mxu0 0
    %109 = vmatprep.subr.bf16.mxu0 0
    %110 = vmatpush1.bf16.msra.mxu0 0
    %111 = vmatprep.subr.bf16.mxu0 0
    %112 = vmatpush1.bf16.msra.mxu0 0
    %113 = vmatprep.subr.bf16.mxu0 0
    %114 = vmatpush1.bf16.msra.mxu0 0
    %115 = vmatprep.subr.bf16.mxu0 0
    %116 = vmatpush1.bf16.msra.mxu0 0
    %117 = vmatprep.subr.bf16.mxu0 0
    %118 = vmatpush1.bf16.msra.mxu0 0
    %119 = vmatprep.subr.bf16.mxu0 0
    %120 = vmatpush1.bf16.msra.mxu0 0
    %121 = vmatprep.subr.bf16.mxu0 0
    %122 = vmatpush1.bf16.msra.mxu0 0
    %123 = vmatprep.subr.bf16.mxu0 0
    %124 = vmatpush1.bf16.msra.mxu0 0
    %125 = vmatprep.subr.bf16.mxu0 0
    %126 = vmatpush1.bf16.msra.mxu0 0
    %127 = vmatprep.subr.bf16.mxu0 0
    %128 = vmatpush1.bf16.msra.mxu0 0
    %129 = vmatprep.mubr.bf16.mxu0 0
    %130 = vmatmul.mubr.bf16.gmra.mrb[0].mxu0 %v95
    %v131 = vpop.f32.mrb[0].mxu0
    %v132 = vadd.f32 %v71, %v131
    %v133 = vpop.f32.mrb[0].mxu0
    %v134 = vpop.f32.mrb[0].mxu0
    %v135 = vpop.f32.mrb[0].mxu0
    %136 = vdwg.mxu0
    %137 = vst [vmem:[#allocation2] sm:$0x3] %v132
    // Predicated region
    $region22: #{rankvit_forward.5} parent=1 // pred_check
      _
    $region23: #{rankvit_forward.5} parent=1 // pred_check_branch
      %139 = sbr.rel (0) target = $region25
    $region24: #{rankvit_forward.5} parent=1 // pred_region
      %s141 = ssub.s32 32, 32
      %142 = vsyncadd [#allocation3], %s141
      %s144 = sshll.u32 [#allocation2], 4
      %s145 = int_to_ptr.vmem [resolvable:$true] %s144
      %147 = dma.vmem_to_hbm [thread:$0]  %s145, 32, %s5, [#allocation3]
    $region25: #{rankvit_forward.5} parent=1 // pred_fallthru
      _
    // Predicated region
    $region26: #{rankvit_forward.5} parent=1 // pred_check
      _
    $region27: #{rankvit_forward.5} parent=1 // pred_check_branch
      %149 = sbr.rel (0) target = $region29
    $region28: #{rankvit_forward.5} parent=1 // pred_region
      %150 = dma.done [#allocation3], 32
    $region29: #{rankvit_forward.5} parent=1 // pred_fallthru
      _
    %151 = vsyncpa [#allocation3], 1

// kernel: rankvit_forward.4
$region0: #{rankvit_forward.4}
  #allocation0 [shape = 'u32[]', space=smem, size = 0x4, offset = 0x4, fixed_abs, tag = 'smem constant byte address 0x4 - core index']
  #allocation1 [shape = 'u32[144,128]{1,0:T(1,128)}', space=vmem, size = 0x12000, scoped, tag = 'internal scratch']
  #allocation2 [shape = 'f32[1,17,32]{2,1,0:T(8,128)}', space=vmem, size = 0x3000, scoped, tag = 'scratch operand']
  %s0 = inlined_call_operand.vmem [shape: f32[2,17,32], index: 0, kind: input, shape index: {}]
  %s1 = inlined_call_operand.vmem [shape: f32[2,1,32], index: 1, kind: input, shape index: {}]
  %s2 = inlined_call_operand.vmem [shape: f32[2,1,32], index: 2, kind: input, shape index: {}]
  %s3 = inlined_call_operand.vmem [shape: bf16[2,32,32], index: 3, kind: input, shape index: {}]
  %s4 = inlined_call_operand.vmem [shape: f32[2,1,32], index: 4, kind: input, shape index: {}]
  %s5 = inlined_call_operand.vmem [shape: bf16[2,32,32], index: 5, kind: input, shape index: {}]
  %s6 = inlined_call_operand.vmem [shape: f32[2,1,32], index: 6, kind: input, shape index: {}]
  %s7 = inlined_call_operand.vmem [shape: bf16[2,32,32], index: 7, kind: input, shape index: {}]
  %s8 = inlined_call_operand.vmem [shape: f32[2,1,32], index: 8, kind: input, shape index: {}]
  %s9 = inlined_call_operand.vmem [shape: bf16[2,32,32], index: 9, kind: input, shape index: {}]
  %s10 = inlined_call_operand.vmem [shape: f32[2,1,32], index: 10, kind: input, shape index: {}]
  %s11 = inlined_call_operand.vmem [shape: f32[2,1,32], index: 11, kind: input, shape index: {}]
  %s12 = inlined_call_operand.vmem [shape: f32[2,1,32], index: 12, kind: input, shape index: {}]
  %s13 = inlined_call_operand.vmem [shape: bf16[2,32,64], index: 13, kind: input, shape index: {}]
  %s14 = inlined_call_operand.vmem [shape: f32[2,1,64], index: 14, kind: input, shape index: {}]
  %s15 = inlined_call_operand.vmem [shape: bf16[2,64,32], index: 15, kind: input, shape index: {}]
  %s16 = inlined_call_operand.vmem [shape: f32[2,1,32], index: 16, kind: input, shape index: {}]
  %s17 = inlined_call_operand.vmem [shape: f32[2,17,32], index: 17, kind: output, shape index: {}]
  %s18 = sld [smem:[#allocation0]]
  $region109: #{rankvit_forward.4} parent=0
    _
  %s20 = ssub.s32 1, %s18
  %s21 = scalar_select 0, %s20, %s18
  loop: start=0, step=1, limit=6
  $region2: #{rankvit_forward.4} parent=0 // loop_pre_header
    _
  $region3: #{rankvit_forward.4} parent=0 // loop_header
    %s23 = sphi 0, %s27
    %p24 = scmp.ge.s32.totalorder %s23, 6
    %s30 = sphi 0, %s42
    %s31 = sphi 0, %s38
    %s32 = sphi 0, %s30
    %s33 = sphi 0, %s31
    %s34 = sphi 0, %s32
    %s35 = sphi 0, %s33
    %s45 = sphi 0, %s47
    %s48 = sphi 0, %s45
    %s49 = sphi 0, %s48
    %s65 = sphi 0, %s49
    %s71 = sphi 0, %s73
    %s74 = sphi 0, %s71
    %s75 = sphi 0, %s74
    %s91 = sphi 0, %s75
    %s97 = sphi 0, %s99
    %s100 = sphi 0, %s97
    %s101 = sphi 0, %s100
    %s117 = sphi 0, %s101
    %s123 = sphi 0, %s125
    %s126 = sphi 0, %s123
    %s127 = sphi 0, %s126
    %s143 = sphi 0, %s127
    %s149 = sphi 0, %s151
    %s152 = sphi 0, %s149
    %s153 = sphi 0, %s152
    %s169 = sphi 0, %s153
    %s175 = sphi 0, %s177
    %s178 = sphi 0, %s175
    %s179 = sphi 0, %s178
    %s195 = sphi 0, %s179
    %s201 = sphi 0, %s203
    %s204 = sphi 0, %s201
    %s205 = sphi 0, %s204
    %s221 = sphi 0, %s205
    %s227 = sphi 0, %s229
    %s230 = sphi 0, %s227
    %s231 = sphi 0, %s230
    %s247 = sphi 0, %s231
    %s253 = sphi 0, %s255
    %s256 = sphi 0, %s253
    %s257 = sphi 0, %s256
    %s273 = sphi 0, %s257
    %s279 = sphi 0, %s281
    %s282 = sphi 0, %s279
    %s283 = sphi 0, %s282
    %s299 = sphi 0, %s283
    %s305 = sphi 0, %s307
    %s308 = sphi 0, %s305
    %s309 = sphi 0, %s308
    %s325 = sphi 0, %s309
    %s331 = sphi 0, %s333
    %s334 = sphi 0, %s331
    %s335 = sphi 0, %s334
    %s351 = sphi 0, %s335
    %s357 = sphi 0, %s359
    %s360 = sphi 0, %s357
    %s361 = sphi 0, %s360
    %s377 = sphi 0, %s361
    %s383 = sphi 0, %s385
    %s386 = sphi 0, %s383
    %s387 = sphi 0, %s386
    %s403 = sphi 0, %s387
    %s409 = sphi 0, %s411
    %s412 = sphi 0, %s409
    %s413 = sphi 0, %s412
    %s429 = sphi 0, %s413
    %s435 = sphi 0, %s437
    %s438 = sphi 0, %s435
    %s439 = sphi 0, %s438
    %s455 = sphi 0, %s439
    %s461 = sphi 0, %s463
    %s464 = sphi 0, %s461
    %s465 = sphi 0, %s464
    %s481 = sphi 0, %s465
    %s487 = sphi 0, %s489
    %s490 = sphi 0, %s487
    %s491 = sphi 0, %s490
    %s507 = sphi 0, %s491
  $region4: #{rankvit_forward.4} parent=0 // loop_header_branch
    %26 = sbr.rel (%p24) target = $region8
  $region5: #{rankvit_forward.4} parent=0 // loop_body
    %s28 = ssub.s32 %s23, 1
    %s29 = ssub.s32 %s23, 2
    %s36 = sadd.s32 1, %s31
    %p37 = scmp.ge.s32.totalorder %s36, 2
    %s38 = scalar_select %p37, 0, %s36
    %s39 = sadd.s32 1, %s30
    %s40 = scalar_select %p37, %s39, %s30
    %p41 = scmp.ge.s32.totalorder %s40, 2
    %s42 = scalar_select %p41, 0, %s40
    %s43 = ssub.s32 %s30, %s42
    %p44 = scmp.eq.s32.totalorder %s43, 0
    %s46 = sadd.s32 %s45, 1
    %s47 = scalar_select %p44, %s45, %s46
    %p50 = pneg %p44
    %p51 = scmp.eq.s32.totalorder %s23, 3
    %p52 = por %p50, %p51
    %p53 = scmp.ne.s32.totalorder %s45, %s48
    %p54 = scmp.eq.s32.totalorder %s23, 0
    %p55 = por %p53, %p54
    %p56 = scmp.ne.s32.totalorder %s45, %s48
    %p57 = scmp.eq.s32.totalorder %s28, 3
    %p58 = por %p56, %p57
    %p59 = scmp.ne.s32.totalorder %s48, %s49
    %p60 = scmp.eq.s32.totalorder %s28, 0
    %p61 = por %p59, %p60
    %p62 = scmp.ne.s32.totalorder %s48, %s49
    %p63 = scmp.eq.s32.totalorder %s29, 3
    %p64 = por %p62, %p63
    %p66 = scmp.ne.s32.totalorder %s49, %s65
    %p67 = scmp.eq.s32.totalorder %s29, 0
    %p68 = por %p66, %p67
    %s69 = ssub.s32 %s31, %s38
    %p70 = scmp.eq.s32.totalorder %s69, 0
    %s72 = sadd.s32 %s71, 1
    %s73 = scalar_select %p70, %s71, %s72
    %p76 = pneg %p70
    %p77 = scmp.eq.s32.totalorder %s23, 3
    %p78 = por %p76, %p77
    %p79 = scmp.ne.s32.totalorder %s71, %s74
    %p80 = scmp.eq.s32.totalorder %s23, 0
    %p81 = por %p79, %p80
    %p82 = scmp.ne.s32.totalorder %s71, %s74
    %p83 = scmp.eq.s32.totalorder %s28, 3
    %p84 = por %p82, %p83
    %p85 = scmp.ne.s32.totalorder %s74, %s75
    %p86 = scmp.eq.s32.totalorder %s28, 0
    %p87 = por %p85, %p86
    %p88 = scmp.ne.s32.totalorder %s74, %s75
    %p89 = scmp.eq.s32.totalorder %s29, 3
    %p90 = por %p88, %p89
    %p92 = scmp.ne.s32.totalorder %s75, %s91
    %p93 = scmp.eq.s32.totalorder %s29, 0
    %p94 = por %p92, %p93
    %s95 = ssub.s32 %s31, %s38
    %p96 = scmp.eq.s32.totalorder %s95, 0
    %s98 = sadd.s32 %s97, 1
    %s99 = scalar_select %p96, %s97, %s98
    %p102 = pneg %p96
    %p103 = scmp.eq.s32.totalorder %s23, 3
    %p104 = por %p102, %p103
    %p105 = scmp.ne.s32.totalorder %s97, %s100
    %p106 = scmp.eq.s32.totalorder %s23, 0
    %p107 = por %p105, %p106
    %p108 = scmp.ne.s32.totalorder %s97, %s100
    %p109 = scmp.eq.s32.totalorder %s28, 3
    %p110 = por %p108, %p109
    %p111 = scmp.ne.s32.totalorder %s100, %s101
    %p112 = scmp.eq.s32.totalorder %s28, 0
    %p113 = por %p111, %p112
    %p114 = scmp.ne.s32.totalorder %s100, %s101
    %p115 = scmp.eq.s32.totalorder %s29, 3
    %p116 = por %p114, %p115
    %p118 = scmp.ne.s32.totalorder %s101, %s117
    %p119 = scmp.eq.s32.totalorder %s29, 0
    %p120 = por %p118, %p119
    %s121 = ssub.s32 %s31, %s38
    %p122 = scmp.eq.s32.totalorder %s121, 0
    %s124 = sadd.s32 %s123, 1
    %s125 = scalar_select %p122, %s123, %s124
    %p128 = pneg %p122
    %p129 = scmp.eq.s32.totalorder %s23, 3
    %p130 = por %p128, %p129
    %p131 = scmp.ne.s32.totalorder %s123, %s126
    %p132 = scmp.eq.s32.totalorder %s23, 0
    %p133 = por %p131, %p132
    %p134 = scmp.ne.s32.totalorder %s123, %s126
    %p135 = scmp.eq.s32.totalorder %s28, 3
    %p136 = por %p134, %p135
    %p137 = scmp.ne.s32.totalorder %s126, %s127
    %p138 = scmp.eq.s32.totalorder %s28, 0
    %p139 = por %p137, %p138
    %p140 = scmp.ne.s32.totalorder %s126, %s127
    %p141 = scmp.eq.s32.totalorder %s29, 3
    %p142 = por %p140, %p141
    %p144 = scmp.ne.s32.totalorder %s127, %s143
    %p145 = scmp.eq.s32.totalorder %s29, 0
    %p146 = por %p144, %p145
    %s147 = ssub.s32 %s31, %s38
    %p148 = scmp.eq.s32.totalorder %s147, 0
    %s150 = sadd.s32 %s149, 1
    %s151 = scalar_select %p148, %s149, %s150
    %p154 = pneg %p148
    %p155 = scmp.eq.s32.totalorder %s23, 3
    %p156 = por %p154, %p155
    %p157 = scmp.ne.s32.totalorder %s149, %s152
    %p158 = scmp.eq.s32.totalorder %s23, 0
    %p159 = por %p157, %p158
    %p160 = scmp.ne.s32.totalorder %s149, %s152
    %p161 = scmp.eq.s32.totalorder %s28, 3
    %p162 = por %p160, %p161
    %p163 = scmp.ne.s32.totalorder %s152, %s153
    %p164 = scmp.eq.s32.totalorder %s28, 0
    %p165 = por %p163, %p164
    %p166 = scmp.ne.s32.totalorder %s152, %s153
    %p167 = scmp.eq.s32.totalorder %s29, 3
    %p168 = por %p166, %p167
    %p170 = scmp.ne.s32.totalorder %s153, %s169
    %p171 = scmp.eq.s32.totalorder %s29, 0
    %p172 = por %p170, %p171
    %s173 = ssub.s32 %s31, %s38
    %p174 = scmp.eq.s32.totalorder %s173, 0
    %s176 = sadd.s32 %s175, 1
    %s177 = scalar_select %p174, %s175, %s176
    %p180 = pneg %p174
    %p181 = scmp.eq.s32.totalorder %s23, 3
    %p182 = por %p180, %p181
    %p183 = scmp.ne.s32.totalorder %s175, %s178
    %p184 = scmp.eq.s32.totalorder %s23, 0
    %p185 = por %p183, %p184
    %p186 = scmp.ne.s32.totalorder %s175, %s178
    %p187 = scmp.eq.s32.totalorder %s28, 3
    %p188 = por %p186, %p187
    %p189 = scmp.ne.s32.totalorder %s178, %s179
    %p190 = scmp.eq.s32.totalorder %s28, 0
    %p191 = por %p189, %p190
    %p192 = scmp.ne.s32.totalorder %s178, %s179
    %p193 = scmp.eq.s32.totalorder %s29, 3
    %p194 = por %p192, %p193
    %p196 = scmp.ne.s32.totalorder %s179, %s195
    %p197 = scmp.eq.s32.totalorder %s29, 0
    %p198 = por %p196, %p197
    %s199 = ssub.s32 %s31, %s38
    %p200 = scmp.eq.s32.totalorder %s199, 0
    %s202 = sadd.s32 %s201, 1
    %s203 = scalar_select %p200, %s201, %s202
    %p206 = pneg %p200
    %p207 = scmp.eq.s32.totalorder %s23, 3
    %p208 = por %p206, %p207
    %p209 = scmp.ne.s32.totalorder %s201, %s204
    %p210 = scmp.eq.s32.totalorder %s23, 0
    %p211 = por %p209, %p210
    %p212 = scmp.ne.s32.totalorder %s201, %s204
    %p213 = scmp.eq.s32.totalorder %s28, 3
    %p214 = por %p212, %p213
    %p215 = scmp.ne.s32.totalorder %s204, %s205
    %p216 = scmp.eq.s32.totalorder %s28, 0
    %p217 = por %p215, %p216
    %p218 = scmp.ne.s32.totalorder %s204, %s205
    %p219 = scmp.eq.s32.totalorder %s29, 3
    %p220 = por %p218, %p219
    %p222 = scmp.ne.s32.totalorder %s205, %s221
    %p223 = scmp.eq.s32.totalorder %s29, 0
    %p224 = por %p222, %p223
    %s225 = ssub.s32 %s31, %s38
    %p226 = scmp.eq.s32.totalorder %s225, 0
    %s228 = sadd.s32 %s227, 1
    %s229 = scalar_select %p226, %s227, %s228
    %p232 = pneg %p226
    %p233 = scmp.eq.s32.totalorder %s23, 3
    %p234 = por %p232, %p233
    %p235 = scmp.ne.s32.totalorder %s227, %s230
    %p236 = scmp.eq.s32.totalorder %s23, 0
    %p237 = por %p235, %p236
    %p238 = scmp.ne.s32.totalorder %s227, %s230
    %p239 = scmp.eq.s32.totalorder %s28, 3
    %p240 = por %p238, %p239
    %p241 = scmp.ne.s32.totalorder %s230, %s231
    %p242 = scmp.eq.s32.totalorder %s28, 0
    %p243 = por %p241, %p242
    %p244 = scmp.ne.s32.totalorder %s230, %s231
    %p245 = scmp.eq.s32.totalorder %s29, 3
    %p246 = por %p244, %p245
    %p248 = scmp.ne.s32.totalorder %s231, %s247
    %p249 = scmp.eq.s32.totalorder %s29, 0
    %p250 = por %p248, %p249
    %s251 = ssub.s32 %s31, %s38
    %p252 = scmp.eq.s32.totalorder %s251, 0
    %s254 = sadd.s32 %s253, 1
    %s255 = scalar_select %p252, %s253, %s254
    %p258 = pneg %p252
    %p259 = scmp.eq.s32.totalorder %s23, 3
    %p260 = por %p258, %p259
    %p261 = scmp.ne.s32.totalorder %s253, %s256
    %p262 = scmp.eq.s32.totalorder %s23, 0
    %p263 = por %p261, %p262
    %p264 = scmp.ne.s32.totalorder %s253, %s256
    %p265 = scmp.eq.s32.totalorder %s28, 3
    %p266 = por %p264, %p265
    %p267 = scmp.ne.s32.totalorder %s256, %s257
    %p268 = scmp.eq.s32.totalorder %s28, 0
    %p269 = por %p267, %p268
    %p270 = scmp.ne.s32.totalorder %s256, %s257
    %p271 = scmp.eq.s32.totalorder %s29, 3
    %p272 = por %p270, %p271
    %p274 = scmp.ne.s32.totalorder %s257, %s273
    %p275 = scmp.eq.s32.totalorder %s29, 0
    %p276 = por %p274, %p275
    %s277 = ssub.s32 %s31, %s38
    %p278 = scmp.eq.s32.totalorder %s277, 0
    %s280 = sadd.s32 %s279, 1
    %s281 = scalar_select %p278, %s279, %s280
    %p284 = pneg %p278
    %p285 = scmp.eq.s32.totalorder %s23, 3
    %p286 = por %p284, %p285
    %p287 = scmp.ne.s32.totalorder %s279, %s282
    %p288 = scmp.eq.s32.totalorder %s23, 0
    %p289 = por %p287, %p288
    %p290 = scmp.ne.s32.totalorder %s279, %s282
    %p291 = scmp.eq.s32.totalorder %s28, 3
    %p292 = por %p290, %p291
    %p293 = scmp.ne.s32.totalorder %s282, %s283
    %p294 = scmp.eq.s32.totalorder %s28, 0
    %p295 = por %p293, %p294
    %p296 = scmp.ne.s32.totalorder %s282, %s283
    %p297 = scmp.eq.s32.totalorder %s29, 3
    %p298 = por %p296, %p297
    %p300 = scmp.ne.s32.totalorder %s283, %s299
    %p301 = scmp.eq.s32.totalorder %s29, 0
    %p302 = por %p300, %p301
    %s303 = ssub.s32 %s31, %s38
    %p304 = scmp.eq.s32.totalorder %s303, 0
    %s306 = sadd.s32 %s305, 1
    %s307 = scalar_select %p304, %s305, %s306
    %p310 = pneg %p304
    %p311 = scmp.eq.s32.totalorder %s23, 3
    %p312 = por %p310, %p311
    %p313 = scmp.ne.s32.totalorder %s305, %s308
    %p314 = scmp.eq.s32.totalorder %s23, 0
    %p315 = por %p313, %p314
    %p316 = scmp.ne.s32.totalorder %s305, %s308
    %p317 = scmp.eq.s32.totalorder %s28, 3
    %p318 = por %p316, %p317
    %p319 = scmp.ne.s32.totalorder %s308, %s309
    %p320 = scmp.eq.s32.totalorder %s28, 0
    %p321 = por %p319, %p320
    %p322 = scmp.ne.s32.totalorder %s308, %s309
    %p323 = scmp.eq.s32.totalorder %s29, 3
    %p324 = por %p322, %p323
    %p326 = scmp.ne.s32.totalorder %s309, %s325
    %p327 = scmp.eq.s32.totalorder %s29, 0
    %p328 = por %p326, %p327
    %s329 = ssub.s32 %s31, %s38
    %p330 = scmp.eq.s32.totalorder %s329, 0
    %s332 = sadd.s32 %s331, 1
    %s333 = scalar_select %p330, %s331, %s332
    %p336 = pneg %p330
    %p337 = scmp.eq.s32.totalorder %s23, 3
    %p338 = por %p336, %p337
    %p339 = scmp.ne.s32.totalorder %s331, %s334
    %p340 = scmp.eq.s32.totalorder %s23, 0
    %p341 = por %p339, %p340
    %p342 = scmp.ne.s32.totalorder %s331, %s334
    %p343 = scmp.eq.s32.totalorder %s28, 3
    %p344 = por %p342, %p343
    %p345 = scmp.ne.s32.totalorder %s334, %s335
    %p346 = scmp.eq.s32.totalorder %s28, 0
    %p347 = por %p345, %p346
    %p348 = scmp.ne.s32.totalorder %s334, %s335
    %p349 = scmp.eq.s32.totalorder %s29, 3
    %p350 = por %p348, %p349
    %p352 = scmp.ne.s32.totalorder %s335, %s351
    %p353 = scmp.eq.s32.totalorder %s29, 0
    %p354 = por %p352, %p353
    %s355 = ssub.s32 %s31, %s38
    %p356 = scmp.eq.s32.totalorder %s355, 0
    %s358 = sadd.s32 %s357, 1
    %s359 = scalar_select %p356, %s357, %s358
    %p362 = pneg %p356
    %p363 = scmp.eq.s32.totalorder %s23, 3
    %p364 = por %p362, %p363
    %p365 = scmp.ne.s32.totalorder %s357, %s360
    %p366 = scmp.eq.s32.totalorder %s23, 0
    %p367 = por %p365, %p366
    %p368 = scmp.ne.s32.totalorder %s357, %s360
    %p369 = scmp.eq.s32.totalorder %s28, 3
    %p370 = por %p368, %p369
    %p371 = scmp.ne.s32.totalorder %s360, %s361
    %p372 = scmp.eq.s32.totalorder %s28, 0
    %p373 = por %p371, %p372
    %p374 = scmp.ne.s32.totalorder %s360, %s361
    %p375 = scmp.eq.s32.totalorder %s29, 3
    %p376 = por %p374, %p375
    %p378 = scmp.ne.s32.totalorder %s361, %s377
    %p379 = scmp.eq.s32.totalorder %s29, 0
    %p380 = por %p378, %p379
    %s381 = ssub.s32 %s31, %s38
    %p382 = scmp.eq.s32.totalorder %s381, 0
    %s384 = sadd.s32 %s383, 1
    %s385 = scalar_select %p382, %s383, %s384
    %p388 = pneg %p382
    %p389 = scmp.eq.s32.totalorder %s23, 3
    %p390 = por %p388, %p389
    %p391 = scmp.ne.s32.totalorder %s383, %s386
    %p392 = scmp.eq.s32.totalorder %s23, 0
    %p393 = por %p391, %p392
    %p394 = scmp.ne.s32.totalorder %s383, %s386
    %p395 = scmp.eq.s32.totalorder %s28, 3
    %p396 = por %p394, %p395
    %p397 = scmp.ne.s32.totalorder %s386, %s387
    %p398 = scmp.eq.s32.totalorder %s28, 0
    %p399 = por %p397, %p398
    %p400 = scmp.ne.s32.totalorder %s386, %s387
    %p401 = scmp.eq.s32.totalorder %s29, 3
    %p402 = por %p400, %p401
    %p404 = scmp.ne.s32.totalorder %s387, %s403
    %p405 = scmp.eq.s32.totalorder %s29, 0
    %p406 = por %p404, %p405
    %s407 = ssub.s32 %s31, %s38
    %p408 = scmp.eq.s32.totalorder %s407, 0
    %s410 = sadd.s32 %s409, 1
    %s411 = scalar_select %p408, %s409, %s410
    %p414 = pneg %p408
    %p415 = scmp.eq.s32.totalorder %s23, 3
    %p416 = por %p414, %p415
    %p417 = scmp.ne.s32.totalorder %s409, %s412
    %p418 = scmp.eq.s32.totalorder %s23, 0
    %p419 = por %p417, %p418
    %p420 = scmp.ne.s32.totalorder %s409, %s412
    %p421 = scmp.eq.s32.totalorder %s28, 3
    %p422 = por %p420, %p421
    %p423 = scmp.ne.s32.totalorder %s412, %s413
    %p424 = scmp.eq.s32.totalorder %s28, 0
    %p425 = por %p423, %p424
    %p426 = scmp.ne.s32.totalorder %s412, %s413
    %p427 = scmp.eq.s32.totalorder %s29, 3
    %p428 = por %p426, %p427
    %p430 = scmp.ne.s32.totalorder %s413, %s429
    %p431 = scmp.eq.s32.totalorder %s29, 0
    %p432 = por %p430, %p431
    %s433 = ssub.s32 %s31, %s38
    %p434 = scmp.eq.s32.totalorder %s433, 0
    %s436 = sadd.s32 %s435, 1
    %s437 = scalar_select %p434, %s435, %s436
    %p440 = pneg %p434
    %p441 = scmp.eq.s32.totalorder %s23, 3
    %p442 = por %p440, %p441
    %p443 = scmp.ne.s32.totalorder %s435, %s438
    %p444 = scmp.eq.s32.totalorder %s23, 0
    %p445 = por %p443, %p444
    %p446 = scmp.ne.s32.totalorder %s435, %s438
    %p447 = scmp.eq.s32.totalorder %s28, 3
    %p448 = por %p446, %p447
    %p449 = scmp.ne.s32.totalorder %s438, %s439
    %p450 = scmp.eq.s32.totalorder %s28, 0
    %p451 = por %p449, %p450
    %p452 = scmp.ne.s32.totalorder %s438, %s439
    %p453 = scmp.eq.s32.totalorder %s29, 3
    %p454 = por %p452, %p453
    %p456 = scmp.ne.s32.totalorder %s439, %s455
    %p457 = scmp.eq.s32.totalorder %s29, 0
    %p458 = por %p456, %p457
    %s459 = ssub.s32 %s31, %s38
    %p460 = scmp.eq.s32.totalorder %s459, 0
    %s462 = sadd.s32 %s461, 1
    %s463 = scalar_select %p460, %s461, %s462
    %p466 = pneg %p460
    %p467 = scmp.eq.s32.totalorder %s23, 3
    %p468 = por %p466, %p467
    %p469 = scmp.ne.s32.totalorder %s461, %s464
    %p470 = scmp.eq.s32.totalorder %s23, 0
    %p471 = por %p469, %p470
    %p472 = scmp.ne.s32.totalorder %s461, %s464
    %p473 = scmp.eq.s32.totalorder %s28, 3
    %p474 = por %p472, %p473
    %p475 = scmp.ne.s32.totalorder %s464, %s465
    %p476 = scmp.eq.s32.totalorder %s28, 0
    %p477 = por %p475, %p476
    %p478 = scmp.ne.s32.totalorder %s464, %s465
    %p479 = scmp.eq.s32.totalorder %s29, 3
    %p480 = por %p478, %p479
    %p482 = scmp.ne.s32.totalorder %s465, %s481
    %p483 = scmp.eq.s32.totalorder %s29, 0
    %p484 = por %p482, %p483
    %s485 = ssub.s32 %s30, %s42
    %p486 = scmp.eq.s32.totalorder %s485, 0
    %s488 = sadd.s32 %s487, 1
    %s489 = scalar_select %p486, %s487, %s488
    %p492 = pneg %p486
    %p493 = scmp.eq.s32.totalorder %s23, 3
    %p494 = por %p492, %p493
    %p495 = scmp.ne.s32.totalorder %s487, %s490
    %p496 = scmp.eq.s32.totalorder %s23, 0
    %p497 = por %p495, %p496
    %p498 = scmp.ne.s32.totalorder %s487, %s490
    %p499 = scmp.eq.s32.totalorder %s28, 3
    %p500 = por %p498, %p499
    %p501 = scmp.ne.s32.totalorder %s490, %s491
    %p502 = scmp.eq.s32.totalorder %s28, 0
    %p503 = por %p501, %p502
    %p504 = scmp.ne.s32.totalorder %s490, %s491
    %p505 = scmp.eq.s32.totalorder %s29, 3
    %p506 = por %p504, %p505
    %p508 = scmp.ne.s32.totalorder %s491, %s507
    %p509 = scmp.eq.s32.totalorder %s29, 0
    %p510 = por %p508, %p509
    %p511 = scmp.le.s32.totalorder 1, %s23
    %p512 = scmp.lt.s32.totalorder %s23, 5
    %p513 = pnand %p511, %p512
    %p514 = pneg %p513
    // Predicated region
    $region9: #{rankvit_forward.4} parent=5 // pred_check
      _
    $region10: #{rankvit_forward.4} parent=5 // pred_check_branch
      %516 = sbr.rel (%p513) target = $region12
    $region11: #{rankvit_forward.4} parent=5 // pred_region
      %s517 = ssub.s32 %s23, 1
    $region12: #{rankvit_forward.4} parent=5 // pred_fallthru
      _
    %p518 = scmp.lt.s32.totalorder %s23, 4
    // Predicated region
    $region13: #{rankvit_forward.4} parent=5 // pred_check
      %p519 = pneg %p518
    $region14: #{rankvit_forward.4} parent=5 // pred_check_branch
      %521 = sbr.rel (%p519) target = $region16
    $region15: #{rankvit_forward.4} parent=5 // pred_region
      // Predicated region
      $region17: #{rankvit_forward.4} parent=15 // pred_check
        %p522 = pneg %p55
      $region18: #{rankvit_forward.4} parent=15 // pred_check_branch
        %524 = sbr.rel (%p522) target = $region20
      $region19: #{rankvit_forward.4} parent=15 // pred_region
        %p525 = scmp.lt.s32.totalorder %s30, 1
        %s526 = scalar_select %p525, %s30, 1
        %s527 = smul.addr %s526, 3
        %s528 = smul.addr %s527, 8
        %s529 = scalar_lea.vmem %s0, %s528
      $region20: #{rankvit_forward.4} parent=15 // pred_fallthru
        _
      // Predicated region
      $region21: #{rankvit_forward.4} parent=15 // pred_check
        %p530 = pneg %p81
      $region22: #{rankvit_forward.4} parent=15 // pred_check_branch
        %532 = sbr.rel (%p530) target = $region24
      $region23: #{rankvit_forward.4} parent=15 // pred_region
        %p533 = scmp.lt.s32.totalorder %s31, 1
        %s534 = scalar_select %p533, %s31, 1
        %s535 = scalar_lea.vmem %s1, %s534
      $region24: #{rankvit_forward.4} parent=15 // pred_fallthru
        _
      // Predicated region
      $region25: #{rankvit_forward.4} parent=15 // pred_check
        %p536 = pneg %p107
      $region26: #{rankvit_forward.4} parent=15 // pred_check_branch
        %538 = sbr.rel (%p536) target = $region28
      $region27: #{rankvit_forward.4} parent=15 // pred_region
        %p539 = scmp.lt.s32.totalorder %s31, 1
        %s540 = scalar_select %p539, %s31, 1
        %s541 = scalar_lea.vmem %s2, %s540
      $region28: #{rankvit_forward.4} parent=15 // pred_fallthru
        _
      // Predicated region
      $region29: #{rankvit_forward.4} parent=15 // pred_check
        %p542 = pneg %p133
      $region30: #{rankvit_forward.4} parent=15 // pred_check_branch
        %544 = sbr.rel (%p542) target = $region32
      $region31: #{rankvit_forward.4} parent=15 // pred_region
        %p545 = scmp.lt.s32.totalorder %s31, 1
        %s546 = scalar_select %p545, %s31, 1
        %s547 = smul.addr %s546, 4
        %s548 = smul.addr %s547, 4
        %s549 = scalar_lea.vmem %s3, %s548
      $region32: #{rankvit_forward.4} parent=15 // pred_fallthru
        _
      // Predicated region
      $region33: #{rankvit_forward.4} parent=15 // pred_check
        %p550 = pneg %p159
      $region34: #{rankvit_forward.4} parent=15 // pred_check_branch
        %552 = sbr.rel (%p550) target = $region36
      $region35: #{rankvit_forward.4} parent=15 // pred_region
        %p553 = scmp.lt.s32.totalorder %s31, 1
        %s554 = scalar_select %p553, %s31, 1
        %s555 = scalar_lea.vmem %s4, %s554
      $region36: #{rankvit_forward.4} parent=15 // pred_fallthru
        _
      // Predicated region
      $region37: #{rankvit_forward.4} parent=15 // pred_check
        %p556 = pneg %p185
      $region38: #{rankvit_forward.4} parent=15 // pred_check_branch
        %558 = sbr.rel (%p556) target = $region40
      $region39: #{rankvit_forward.4} parent=15 // pred_region
        %p559 = scmp.lt.s32.totalorder %s31, 1
        %s560 = scalar_select %p559, %s31, 1
        %s561 = smul.addr %s560, 4
        %s562 = smul.addr %s561, 4
        %s563 = scalar_lea.vmem %s5, %s562
      $region40: #{rankvit_forward.4} parent=15 // pred_fallthru
        _
      // Predicated region
      $region41: #{rankvit_forward.4} parent=15 // pred_check
        %p564 = pneg %p211
      $region42: #{rankvit_forward.4} parent=15 // pred_check_branch
        %566 = sbr.rel (%p564) target = $region44
      $region43: #{rankvit_forward.4} parent=15 // pred_region
        %p567 = scmp.lt.s32.totalorder %s31, 1
        %s568 = scalar_select %p567, %s31, 1
        %s569 = scalar_lea.vmem %s6, %s568
      $region44: #{rankvit_forward.4} parent=15 // pred_fallthru
        _
      // Predicated region
      $region45: #{rankvit_forward.4} parent=15 // pred_check
        %p570 = pneg %p237
      $region46: #{rankvit_forward.4} parent=15 // pred_check_branch
        %572 = sbr.rel (%p570) target = $region48
      $region47: #{rankvit_forward.4} parent=15 // pred_region
        %p573 = scmp.lt.s32.totalorder %s31, 1
        %s574 = scalar_select %p573, %s31, 1
        %s575 = smul.addr %s574, 4
        %s576 = smul.addr %s575, 4
        %s577 = scalar_lea.vmem %s7, %s576
      $region48: #{rankvit_forward.4} parent=15 // pred_fallthru
        _
      // Predicated region
      $region49: #{rankvit_forward.4} parent=15 // pred_check
        %p578 = pneg %p263
      $region50: #{rankvit_forward.4} parent=15 // pred_check_branch
        %580 = sbr.rel (%p578) target = $region52
      $region51: #{rankvit_forward.4} parent=15 // pred_region
        %p581 = scmp.lt.s32.totalorder %s31, 1
        %s582 = scalar_select %p581, %s31, 1
        %s583 = scalar_lea.vmem %s8, %s582
      $region52: #{rankvit_forward.4} parent=15 // pred_fallthru
        _
      // Predicated region
      $region53: #{rankvit_forward.4} parent=15 // pred_check
        %p584 = pneg %p289
      $region54: #{rankvit_forward.4} parent=15 // pred_check_branch
        %586 = sbr.rel (%p584) target = $region56
      $region55: #{rankvit_forward.4} parent=15 // pred_region
        %p587 = scmp.lt.s32.totalorder %s31, 1
        %s588 = scalar_select %p587, %s31, 1
        %s589 = smul.addr %s588, 4
        %s590 = smul.addr %s589, 4
        %s591 = scalar_lea.vmem %s9, %s590
      $region56: #{rankvit_forward.4} parent=15 // pred_fallthru
        _
      // Predicated region
      $region57: #{rankvit_forward.4} parent=15 // pred_check
        %p592 = pneg %p315
      $region58: #{rankvit_forward.4} parent=15 // pred_check_branch
        %594 = sbr.rel (%p592) target = $region60
      $region59: #{rankvit_forward.4} parent=15 // pred_region
        %p595 = scmp.lt.s32.totalorder %s31, 1
        %s596 = scalar_select %p595, %s31, 1
        %s597 = scalar_lea.vmem %s10, %s596
      $region60: #{rankvit_forward.4} parent=15 // pred_fallthru
        _
      // Predicated region
      $region61: #{rankvit_forward.4} parent=15 // pred_check
        %p598 = pneg %p341
      $region62: #{rankvit_forward.4} parent=15 // pred_check_branch
        %600 = sbr.rel (%p598) target = $region64
      $region63: #{rankvit_forward.4} parent=15 // pred_region
        %p601 = scmp.lt.s32.totalorder %s31, 1
        %s602 = scalar_select %p601, %s31, 1
        %s603 = scalar_lea.vmem %s11, %s602
      $region64: #{rankvit_forward.4} parent=15 // pred_fallthru
        _
      // Predicated region
      $region65: #{rankvit_forward.4} parent=15 // pred_check
        %p604 = pneg %p367
      $region66: #{rankvit_forward.4} parent=15 // pred_check_branch
        %606 = sbr.rel (%p604) target = $region68
      $region67: #{rankvit_forward.4} parent=15 // pred_region
        %p607 = scmp.lt.s32.totalorder %s31, 1
        %s608 = scalar_select %p607, %s31, 1
        %s609 = scalar_lea.vmem %s12, %s608
      $region68: #{rankvit_forward.4} parent=15 // pred_fallthru
        _
      // Predicated region
      $region69: #{rankvit_forward.4} parent=15 // pred_check
        %p610 = pneg %p393
      $region70: #{rankvit_forward.4} parent=15 // pred_check_branch
        %612 = sbr.rel (%p610) target = $region72
      $region71: #{rankvit_forward.4} parent=15 // pred_region
        %p613 = scmp.lt.s32.totalorder %s31, 1
        %s614 = scalar_select %p613, %s31, 1
        %s615 = smul.addr %s614, 4
        %s616 = smul.addr %s615, 4
        %s617 = scalar_lea.vmem %s13, %s616
      $region72: #{rankvit_forward.4} parent=15 // pred_fallthru
        _
      // Predicated region
      $region73: #{rankvit_forward.4} parent=15 // pred_check
        %p618 = pneg %p419
      $region74: #{rankvit_forward.4} parent=15 // pred_check_branch
        %620 = sbr.rel (%p618) target = $region76
      $region75: #{rankvit_forward.4} parent=15 // pred_region
        %p621 = scmp.lt.s32.totalorder %s31, 1
        %s622 = scalar_select %p621, %s31, 1
        %s623 = scalar_lea.vmem %s14, %s622
      $region76: #{rankvit_forward.4} parent=15 // pred_fallthru
        _
      // Predicated region
      $region77: #{rankvit_forward.4} parent=15 // pred_check
        %p624 = pneg %p445
      $region78: #{rankvit_forward.4} parent=15 // pred_check_branch
        %626 = sbr.rel (%p624) target = $region80
      $region79: #{rankvit_forward.4} parent=15 // pred_region
        %p627 = scmp.lt.s32.totalorder %s31, 1
        %s628 = scalar_select %p627, %s31, 1
        %s629 = smul.addr %s628, 8
        %s630 = smul.addr %s629, 4
        %s631 = scalar_lea.vmem %s15, %s630
      $region80: #{rankvit_forward.4} parent=15 // pred_fallthru
        _
      // Predicated region
      $region81: #{rankvit_forward.4} parent=15 // pred_check
        %p632 = pneg %p471
      $region82: #{rankvit_forward.4} parent=15 // pred_check_branch
        %634 = sbr.rel (%p632) target = $region84
      $region83: #{rankvit_forward.4} parent=15 // pred_region
        %p635 = scmp.lt.s32.totalorder %s31, 1
        %s636 = scalar_select %p635, %s31, 1
        %s637 = scalar_lea.vmem %s16, %s636
      $region84: #{rankvit_forward.4} parent=15 // pred_fallthru
        _
    $region16: #{rankvit_forward.4} parent=5 // pred_fallthru
      _
    %p638 = scmp.le.s32.totalorder 1, %s23
    %p639 = scmp.lt.s32.totalorder %s23, 5
    %p640 = pnand %p638, %p639
    %p641 = pneg %p640
    // Predicated region
    $region85: #{rankvit_forward.4} parent=5 // pred_check
      _
    $region86: #{rankvit_forward.4} parent=5 // pred_check_branch
      %643 = sbr.rel (%p640) target = $region88
    $region87: #{rankvit_forward.4} parent=5 // pred_region
      %s644 = ssub.s32 %s23, 1
      %p645 = scmp.lt.s32.totalorder %s32, 1
      %s646 = scalar_select %p645, %s32, 1
      %s647 = smul.addr %s646, 3
      %s648 = smul.addr %s647, 8
      %s649 = scalar_lea.vmem %s0, %s648
      %p650 = pneg %p61
      %p651 = pneg %p58
      %p652 = scmp.lt.s32.totalorder %s33, 1
      %s653 = scalar_select %p652, %s33, 1
      %s654 = scalar_lea.vmem %s1, %s653
      %p655 = pneg %p87
      %p656 = pneg %p84
      %p657 = scmp.lt.s32.totalorder %s33, 1
      %s658 = scalar_select %p657, %s33, 1
      %s659 = scalar_lea.vmem %s2, %s658
      %p660 = pneg %p113
      %p661 = pneg %p110
      %p662 = scmp.lt.s32.totalorder %s33, 1
      %s663 = scalar_select %p662, %s33, 1
      %s664 = smul.addr %s663, 4
      %s665 = smul.addr %s664, 4
      %s666 = scalar_lea.vmem %s3, %s665
      %p667 = pneg %p139
      %p668 = pneg %p136
      %p669 = scmp.lt.s32.totalorder %s33, 1
      %s670 = scalar_select %p669, %s33, 1
      %s671 = scalar_lea.vmem %s4, %s670
      %p672 = pneg %p165
      %p673 = pneg %p162
      %p674 = scmp.lt.s32.totalorder %s33, 1
      %s675 = scalar_select %p674, %s33, 1
      %s676 = smul.addr %s675, 4
      %s677 = smul.addr %s676, 4
      %s678 = scalar_lea.vmem %s5, %s677
      %p679 = pneg %p191
      %p680 = pneg %p188
      %p681 = scmp.lt.s32.totalorder %s33, 1
      %s682 = scalar_select %p681, %s33, 1
      %s683 = scalar_lea.vmem %s6, %s682
      %p684 = pneg %p217
      %p685 = pneg %p214
      %p686 = scmp.lt.s32.totalorder %s33, 1
      %s687 = scalar_select %p686, %s33, 1
      %s688 = smul.addr %s687, 4
      %s689 = smul.addr %s688, 4
      %s690 = scalar_lea.vmem %s7, %s689
      %p691 = pneg %p243
      %p692 = pneg %p240
      %p693 = scmp.lt.s32.totalorder %s33, 1
      %s694 = scalar_select %p693, %s33, 1
      %s695 = scalar_lea.vmem %s8, %s694
      %p696 = pneg %p269
      %p697 = pneg %p266
      %p698 = scmp.lt.s32.totalorder %s33, 1
      %s699 = scalar_select %p698, %s33, 1
      %s700 = smul.addr %s699, 4
      %s701 = smul.addr %s700, 4
      %s702 = scalar_lea.vmem %s9, %s701
      %p703 = pneg %p295
      %p704 = pneg %p292
      %p705 = scmp.lt.s32.totalorder %s33, 1
      %s706 = scalar_select %p705, %s33, 1
      %s707 = scalar_lea.vmem %s10, %s706
      %p708 = pneg %p321
      %p709 = pneg %p318
      %p710 = scmp.lt.s32.totalorder %s33, 1
      %s711 = scalar_select %p710, %s33, 1
      %s712 = scalar_lea.vmem %s11, %s711
      %p713 = pneg %p347
      %p714 = pneg %p344
      %p715 = scmp.lt.s32.totalorder %s33, 1
      %s716 = scalar_select %p715, %s33, 1
      %s717 = scalar_lea.vmem %s12, %s716
      %p718 = pneg %p373
      %p719 = pneg %p370
      %p720 = scmp.lt.s32.totalorder %s33, 1
      %s721 = scalar_select %p720, %s33, 1
      %s722 = smul.addr %s721, 4
      %s723 = smul.addr %s722, 4
      %s724 = scalar_lea.vmem %s13, %s723
      %p725 = pneg %p399
      %p726 = pneg %p396
      %p727 = scmp.lt.s32.totalorder %s33, 1
      %s728 = scalar_select %p727, %s33, 1
      %s729 = scalar_lea.vmem %s14, %s728
      %p730 = pneg %p425
      %p731 = pneg %p422
      %p732 = scmp.lt.s32.totalorder %s33, 1
      %s733 = scalar_select %p732, %s33, 1
      %s734 = smul.addr %s733, 8
      %s735 = smul.addr %s734, 4
      %s736 = scalar_lea.vmem %s15, %s735
      %p737 = pneg %p451
      %p738 = pneg %p448
      %p739 = scmp.lt.s32.totalorder %s33, 1
      %s740 = scalar_select %p739, %s33, 1
      %s741 = scalar_lea.vmem %s16, %s740
      %p742 = pneg %p477
      %p743 = pneg %p474
      %p744 = pneg %p503
      %p745 = pneg %p500
      %p746 = scmp.lt.s32.totalorder %s32, 1
      %s747 = scalar_select %p746, %s32, 1
      %s748 = smul.addr %s747, 3
      %s749 = smul.addr %s748, 8
      %s750 = scalar_lea.vmem %s17, %s749
      %p751 = scmp.lt.s32.totalorder %s32, 1
      %s752 = scalar_select %p751, %s32, 1
      %s753 = smul.addr %s752, 3
      %s754 = smul.addr %s753, 8
      %s755 = scalar_lea.vmem %s0, %s754
      %p756 = scmp.lt.s32.totalorder %s33, 1
      %s757 = scalar_select %p756, %s33, 1
      %s758 = scalar_lea.vmem %s1, %s757
      %p759 = scmp.lt.s32.totalorder %s33, 1
      %s760 = scalar_select %p759, %s33, 1
      %s761 = scalar_lea.vmem %s2, %s760
      %p762 = scmp.lt.s32.totalorder %s33, 1
      %s763 = scalar_select %p762, %s33, 1
      %s764 = smul.addr %s763, 4
      %s765 = smul.addr %s764, 4
      %s766 = scalar_lea.vmem %s3, %s765
      %p767 = scmp.lt.s32.totalorder %s33, 1
      %s768 = scalar_select %p767, %s33, 1
      %s769 = scalar_lea.vmem %s4, %s768
      %p770 = scmp.lt.s32.totalorder %s33, 1
      %s771 = scalar_select %p770, %s33, 1
      %s772 = smul.addr %s771, 4
      %s773 = smul.addr %s772, 4
      %s774 = scalar_lea.vmem %s5, %s773
      %p775 = scmp.lt.s32.totalorder %s33, 1
      %s776 = scalar_select %p775, %s33, 1
      %s777 = scalar_lea.vmem %s6, %s776
      %p778 = scmp.lt.s32.totalorder %s33, 1
      %s779 = scalar_select %p778, %s33, 1
      %s780 = smul.addr %s779, 4
      %s781 = smul.addr %s780, 4
      %s782 = scalar_lea.vmem %s7, %s781
      %p783 = scmp.lt.s32.totalorder %s33, 1
      %s784 = scalar_select %p783, %s33, 1
      %s785 = scalar_lea.vmem %s8, %s784
      %p786 = scmp.lt.s32.totalorder %s33, 1
      %s787 = scalar_select %p786, %s33, 1
      %s788 = smul.addr %s787, 4
      %s789 = smul.addr %s788, 4
      %s790 = scalar_lea.vmem %s9, %s789
      %p791 = scmp.lt.s32.totalorder %s33, 1
      %s792 = scalar_select %p791, %s33, 1
      %s793 = scalar_lea.vmem %s10, %s792
      %p794 = scmp.lt.s32.totalorder %s33, 1
      %s795 = scalar_select %p794, %s33, 1
      %s796 = scalar_lea.vmem %s11, %s795
      %p797 = scmp.lt.s32.totalorder %s33, 1
      %s798 = scalar_select %p797, %s33, 1
      %s799 = scalar_lea.vmem %s12, %s798
      %p800 = scmp.lt.s32.totalorder %s33, 1
      %s801 = scalar_select %p800, %s33, 1
      %s802 = smul.addr %s801, 4
      %s803 = smul.addr %s802, 4
      %s804 = scalar_lea.vmem %s13, %s803
      %p805 = scmp.lt.s32.totalorder %s33, 1
      %s806 = scalar_select %p805, %s33, 1
      %s807 = scalar_lea.vmem %s14, %s806
      %p808 = scmp.lt.s32.totalorder %s33, 1
      %s809 = scalar_select %p808, %s33, 1
      %s810 = smul.addr %s809, 8
      %s811 = smul.addr %s810, 4
      %s812 = scalar_lea.vmem %s15, %s811
      %p813 = scmp.lt.s32.totalorder %s33, 1
      %s814 = scalar_select %p813, %s33, 1
      %s815 = scalar_lea.vmem %s16, %s814
      %p816 = scmp.lt.s32.totalorder %s32, 1
      %s817 = scalar_select %p816, %s32, 1
      %s818 = smul.addr %s817, 3
      %s819 = smul.addr %s818, 8
      %s820 = scalar_lea.vmem %s17, %s819
      %p822 = scmp.eq.s32.totalorder %s33, 0
      // Predicated region
      $region89: #{rankvit_forward.4} parent=87 // pred_check
        %p823 = pneg %p822
      $region90: #{rankvit_forward.4} parent=87 // pred_check_branch
        %825 = sbr.rel (%p823) target = $region92
      $region91: #{rankvit_forward.4} parent=87 // pred_region
        %v826 = vld [vmem:[%s755] sm:$0xff]
        %v827 = vld [vmem:[%s755 + $0x8] sm:$0xff]
        %v828 = vld [vmem:[%s755 + $0x10] sm:$0x1]
        %vm829 = vcmask 261120
        %830 = vst.msk [vmem:[#allocation2] sm:$0xff] %vm829, %v826
        %831 = vst.msk [vmem:[#allocation2 + $0x8] sm:$0xff] %vm829, %v827
        %vm832 = vcmask 253952
        %833 = vst.msk [vmem:[#allocation2 + $0x10] sm:$0x1] %vm832, %v828
      $region92: #{rankvit_forward.4} parent=87 // pred_fallthru
        _
      %v834 = vld [vmem:[#allocation2] sm:$0xff]
      %v835 = vld [vmem:[#allocation2 + $0x8] sm:$0xff]
      %v836 = vld [vmem:[#allocation2 + $0x10] sm:$0x1]
      %v837 = vld [vmem:[%s758] sm:$0x1]
      %v838 = vld [vmem:[%s761] sm:$0x1]
      %vm839 = vcmask 261120
      %v840 = vsel %vm839, %v834, 0.0
      %841 = vadd.xlane.f32.xlu0 %v840
      %v842 = vpop.xlane.xlu0 %841
      %v843 = vsel %vm839, %v835, 0.0
      %844 = vadd.xlane.f32.xlu0 %v843
      %v845 = vpop.xlane.xlu0 %844
      %vm846 = vcmask 253952
      %v847 = vsel %vm846, %v836, 0.0
      %848 = vadd.xlane.f32.xlu0 %v847
      %v849 = vpop.xlane.xlu0 %848
      %v850 = vrcp.pop 32.0
      %v851 = vmul.f32 %v842, %v850
      %v852 = vmul.f32 %v845, %v850
      %v853 = vmul.f32 %v849, %v850
      %v854 = vsub.f32 %v834, %v851
      %v855 = vsub.f32 %v835, %v852
      %v856 = vsub.f32 %v836, %v853
      %v857 = vmul.f32 %v854, %v854
      %v858 = vmul.f32 %v855, %v855
      %v859 = vmul.f32 %v856, %v856
      %v860 = vsel %vm839, %v857, 0.0
      %861 = vadd.xlane.f32.xlu0 %v860
      %v862 = vpop.xlane.xlu0 %861
      %v863 = vsel %vm839, %v858, 0.0
      %864 = vadd.xlane.f32.xlu0 %v863
      %v865 = vpop.xlane.xlu0 %864
      %v866 = vsel %vm846, %v859, 0.0
      %867 = vadd.xlane.f32.xlu0 %v866
      %v868 = vpop.xlane.xlu0 %867
      %v869 = vmul.f32 %v862, %v850
      %v870 = vmul.f32 %v865, %v850
      %v871 = vmul.f32 %v868, %v850
      %v872 = vadd.f32 %v869, 1e-05
      %v873 = vadd.f32 %v870, 1e-05
      %v874 = vadd.f32 %v871, 1e-05
      %v875 = vrsqrt.pop %v872
      %v876 = vrsqrt.pop %v873
      %v877 = vrsqrt.pop %v874
      %v878 = vmul.f32 %v854, %v875
      %v879 = vmul.f32 %v855, %v876
      %v880 = vmul.f32 %v856, %v877
      %v882 = vlaneseq
      %v883 = vshrl.u32 %v882, 7
      %v884 = vsub.s32 0, %v883
      %v885 = vrot.slane %v837, %v884
      %v887 = vmul.f32 %v878, %v885
      %v888 = vmul.f32 %v879, %v885
      %v889 = vmul.f32 %v880, %v885
      %v891 = vlaneseq
      %v892 = vshrl.u32 %v891, 7
      %v893 = vsub.s32 0, %v892
      %v894 = vrot.slane %v838, %v893
      %v896 = vadd.f32 %v887, %v894
      %v897 = vadd.f32 %v888, %v894
      %v898 = vadd.f32 %v889, %v894
      %v899 = vpack.c.bf16 %v897, %v896
      %v900 = vpack.c.bf16 %v898, %v898
      %v901 = vld [vmem:[%s766] sm:$0xf]
      %v902 = vld [vmem:[%s766 + $0x4] sm:$0xf]
      %v903 = vld [vmem:[%s766 + $0x8] sm:$0xf]
      %v904 = vld [vmem:[%s766 + $0xc] sm:$0xf]
      %v905 = vld [vmem:[%s769] sm:$0x1]
      %v907 = vlaneseq
      %v908 = vshrl.u32 %v907, 7
      %v909 = vsub.s32 0, %v908
      %v910 = vrot.slane %v905, %v909
      %v916 = vunpack.c.l.b16 %v901
      %v917 = vunpack.c.l.b16 %v902
      %v918 = vunpack.c.l.b16 %v903
      %v919 = vunpack.c.l.b16 %v904
      %v920 = vpack.c.b16 %v917, %v916
      %v921 = vpack.c.b16 %v919, %v918
      %v925 = vsel %vm839, %v899, 0
      %v928 = vsel %vm839, %v900, 0
      %930 = vmatprep.subr.bf16.mxu0 0
      %931 = vmatpush1.bf16.msra.mxu0 %v920
      %932 = vmatprep.subr.bf16.mxu0 0
      %933 = vmatpush1.bf16.msra.mxu0 %v921
      %934 = vmatprep.subr.bf16.mxu0 0
      %935 = vmatpush1.bf16.msra.mxu0 0
      %936 = vmatprep.subr.bf16.mxu0 0
      %937 = vmatpush1.bf16.msra.mxu0 0
      %938 = vmatprep.subr.bf16.mxu0 0
      %939 = vmatpush1.bf16.msra.mxu0 0
      %940 = vmatprep.subr.bf16.mxu0 0
      %941 = vmatpush1.bf16.msra.mxu0 0
      %942 = vmatprep.subr.bf16.mxu0 0
      %943 = vmatpush1.bf16.msra.mxu0 0
      %944 = vmatprep.subr.bf16.mxu0 0
      %945 = vmatpush1.bf16.msra.mxu0 0
      %946 = vmatprep.subr.bf16.mxu0 0
      %947 = vmatpush1.bf16.msra.mxu0 0
      %948 = vmatprep.subr.bf16.mxu0 0
      %949 = vmatpush1.bf16.msra.mxu0 0
      %950 = vmatprep.subr.bf16.mxu0 0
      %951 = vmatpush1.bf16.msra.mxu0 0
      %952 = vmatprep.subr.bf16.mxu0 0
      %953 = vmatpush1.bf16.msra.mxu0 0
      %954 = vmatprep.subr.bf16.mxu0 0
      %955 = vmatpush1.bf16.msra.mxu0 0
      %956 = vmatprep.subr.bf16.mxu0 0
      %957 = vmatpush1.bf16.msra.mxu0 0
      %958 = vmatprep.subr.bf16.mxu0 0
      %959 = vmatpush1.bf16.msra.mxu0 0
      %960 = vmatprep.subr.bf16.mxu0 0
      %961 = vmatpush1.bf16.msra.mxu0 0
      %962 = vmatprep.mubr.bf16.mxu0 0
      %963 = vmatmul.mubr.bf16.gmra.mrb[0].mxu0 %v925
      %v964 = vpop.f32.mrb[0].mxu0
      %v965 = vadd.f32 %v910, %v964
      %v966 = vpop.f32.mrb[0].mxu0
      %v967 = vpop.f32.mrb[0].mxu0
      %v968 = vadd.f32 %v910, %v967
      %v969 = vpop.f32.mrb[0].mxu0
      %970 = vmatprep.mubr.bf16.mxu0 0
      %971 = vmatmul.mubr.bf16.gmra.mrb[0].mxu0 %v928
      %v972 = vpop.f32.mrb[0].mxu0
      %v973 = vadd.f32 %v910, %v972
      %v974 = vpop.f32.mrb[0].mxu0
      %v975 = vpop.f32.mrb[0].mxu0
      %v976 = vpop.f32.mrb[0].mxu0
      %977 = vdwg.mxu0
      %v978 = vld [vmem:[%s774] sm:$0xf]
      %v979 = vld [vmem:[%s774 + $0x4] sm:$0xf]
      %v980 = vld [vmem:[%s774 + $0x8] sm:$0xf]
      %v981 = vld [vmem:[%s774 + $0xc] sm:$0xf]
      %v982 = vld [vmem:[%s777] sm:$0x1]
      %v984 = vlaneseq
      %v985 = vshrl.u32 %v984, 7
      %v986 = vsub.s32 0, %v985
      %v987 = vrot.slane %v982, %v986
      %v993 = vunpack.c.l.b16 %v978
      %v994 = vunpack.c.l.b16 %v979
      %v995 = vunpack.c.l.b16 %v980
      %v996 = vunpack.c.l.b16 %v981
      %v997 = vpack.c.b16 %v994, %v993
      %v998 = vpack.c.b16 %v996, %v995
      %1001 = vmatprep.subr.bf16.mxu0 0
      %1002 = vmatpush1.bf16.msra.mxu0 %v997
      %1003 = vmatprep.subr.bf16.mxu0 0
      %1004 = vmatpush1.bf16.msra.mxu0 %v998
      %1005 = vmatprep.subr.bf16.mxu0 0
      %1006 = vmatpush1.bf16.msra.mxu0 0
      %1007 = vmatprep.subr.bf16.mxu0 0
      %1008 = vmatpush1.bf16.msra.mxu0 0
      %1009 = vmatprep.subr.bf16.mxu0 0
      %1010 = vmatpush1.bf16.msra.mxu0 0
      %1011 = vmatprep.subr.bf16.mxu0 0
      %1012 = vmatpush1.bf16.msra.mxu0 0
      %1013 = vmatprep.subr.bf16.mxu0 0
      %1014 = vmatpush1.bf16.msra.mxu0 0
      %1015 = vmatprep.subr.bf16.mxu0 0
      %1016 = vmatpush1.bf16.msra.mxu0 0
      %1017 = vmatprep.subr.bf16.mxu0 0
      %1018 = vmatpush1.bf16.msra.mxu0 0
      %1019 = vmatprep.subr.bf16.mxu0 0
      %1020 = vmatpush1.bf16.msra.mxu0 0
      %1021 = vmatprep.subr.bf16.mxu0 0
      %1022 = vmatpush1.bf16.msra.mxu0 0
      %1023 = vmatprep.subr.bf16.mxu0 0
      %1024 = vmatpush1.bf16.msra.mxu0 0
      %1025 = vmatprep.subr.bf16.mxu0 0
      %1026 = vmatpush1.bf16.msra.mxu0 0
      %1027 = vmatprep.subr.bf16.mxu0 0
      %1028 = vmatpush1.bf16.msra.mxu0 0
      %1029 = vmatprep.subr.bf16.mxu0 0
      %1030 = vmatpush1.bf16.msra.mxu0 0
      %1031 = vmatprep.subr.bf16.mxu0 0
      %1032 = vmatpush1.bf16.msra.mxu0 0
      %1033 = vmatprep.mubr.bf16.mxu0 0
      %1034 = vmatmul.mubr.bf16.gmra.mrb[0].mxu0 %v925
      %v1035 = vpop.f32.mrb[0].mxu0
      %v1036 = vadd.f32 %v987, %v1035
      %v1037 = vpop.f32.mrb[0].mxu0
      %v1038 = vpop.f32.mrb[0].mxu0
      %v1039 = vadd.f32 %v987, %v1038
      %v1040 = vpop.f32.mrb[0].mxu0
      %1041 = vmatprep.mubr.bf16.mxu0 0
      %1042 = vmatmul.mubr.bf16.gmra.mrb[0].mxu0 %v928
      %v1043 = vpop.f32.mrb[0].mxu0
      %v1044 = vadd.f32 %v987, %v1043
      %v1045 = vpop.f32.mrb[0].mxu0
      %v1046 = vpop.f32.mrb[0].mxu0
      %v1047 = vpop.f32.mrb[0].mxu0
      %1048 = vdwg.mxu0
      %v1049 = vld [vmem:[%s782] sm:$0xf]
      %v1050 = vld [vmem:[%s782 + $0x4] sm:$0xf]
      %v1051 = vld [vmem:[%s782 + $0x8] sm:$0xf]
      %v1052 = vld [vmem:[%s782 + $0xc] sm:$0xf]
      %v1053 = vld [vmem:[%s785] sm:$0x1]
      %v1055 = vlaneseq
      %v1056 = vshrl.u32 %v1055, 7
      %v1057 = vsub.s32 0, %v1056
      %v1058 = vrot.slane %v1053, %v1057
      %v1064 = vunpack.c.l.b16 %v1049
      %v1065 = vunpack.c.l.b16 %v1050
      %v1066 = vunpack.c.l.b16 %v1051
      %v1067 = vunpack.c.l.b16 %v1052
      %v1068 = vpack.c.b16 %v1065, %v1064
      %v1069 = vpack.c.b16 %v1067, %v1066
      %1072 = vmatprep.subr.bf16.mxu0 0
      %1073 = vmatpush1.bf16.msra.mxu0 %v1068
      %1074 = vmatprep.subr.bf16.mxu0 0
      %1075 = vmatpush1.bf16.msra.mxu0 %v1069
      %1076 = vmatprep.subr.bf16.mxu0 0
      %1077 = vmatpush1.bf16.msra.mxu0 0
      %1078 = vmatprep.subr.bf16.mxu0 0
      %1079 = vmatpush1.bf16.msra.mxu0 0
      %1080 = vmatprep.subr.bf16.mxu0 0
      %1081 = vmatpush1.bf16.msra.mxu0 0
      %1082 = vmatprep.subr.bf16.mxu0 0
      %1083 = vmatpush1.bf16.msra.mxu0 0
      %1084 = vmatprep.subr.bf16.mxu0 0
      %1085 = vmatpush1.bf16.msra.mxu0 0
      %1086 = vmatprep.subr.bf16.mxu0 0
      %1087 = vmatpush1.bf16.msra.mxu0 0
      %1088 = vmatprep.subr.bf16.mxu0 0
      %1089 = vmatpush1.bf16.msra.mxu0 0
      %1090 = vmatprep.subr.bf16.mxu0 0
      %1091 = vmatpush1.bf16.msra.mxu0 0
      %1092 = vmatprep.subr.bf16.mxu0 0
      %1093 = vmatpush1.bf16.msra.mxu0 0
      %1094 = vmatprep.subr.bf16.mxu0 0
      %1095 = vmatpush1.bf16.msra.mxu0 0
      %1096 = vmatprep.subr.bf16.mxu0 0
      %1097 = vmatpush1.bf16.msra.mxu0 0
      %1098 = vmatprep.subr.bf16.mxu0 0
      %1099 = vmatpush1.bf16.msra.mxu0 0
      %1100 = vmatprep.subr.bf16.mxu0 0
      %1101 = vmatpush1.bf16.msra.mxu0 0
      %1102 = vmatprep.subr.bf16.mxu0 0
      %1103 = vmatpush1.bf16.msra.mxu0 0
      %1104 = vmatprep.mubr.bf16.mxu0 0
      %1105 = vmatmul.mubr.bf16.gmra.mrb[0].mxu0 %v925
      %v1106 = vpop.f32.mrb[0].mxu0
      %v1107 = vadd.f32 %v1058, %v1106
      %v1108 = vpop.f32.mrb[0].mxu0
      %v1109 = vpop.f32.mrb[0].mxu0
      %v1110 = vadd.f32 %v1058, %v1109
      %v1111 = vpop.f32.mrb[0].mxu0
      %1112 = vmatprep.mubr.bf16.mxu0 0
      %1113 = vmatmul.mubr.bf16.gmra.mrb[0].mxu0 %v928
      %v1114 = vpop.f32.mrb[0].mxu0
      %v1115 = vadd.f32 %v1058, %v1114
      %v1116 = vpop.f32.mrb[0].mxu0
      %v1117 = vpop.f32.mrb[0].mxu0
      %v1118 = vpop.f32.mrb[0].mxu0
      %1119 = vdwg.mxu0
      %v1120 = vpack.c.bf16 %v968, %v965
      %v1121 = vpack.c.bf16 %v973, %v973
      %1124 = vrot.lane.b32.xlu0 %v1120, 120
      %v1125 = vpop.permute.xlu0 %1124
      %1126 = vrot.lane.b32.xlu0 %v1121, 120
      %v1127 = vpop.permute.xlu0 %1126
      %1129 = vrot.lane.b32.xlu0 %v1120, 112
      %v1130 = vpop.permute.xlu0 %1129
      %1131 = vrot.lane.b32.xlu0 %v1121, 112
      %v1132 = vpop.permute.xlu0 %1131
      %1134 = vrot.lane.b32.xlu0 %v1120, 104
      %v1135 = vpop.permute.xlu0 %1134
      %1136 = vrot.lane.b32.xlu0 %v1121, 104
      %v1137 = vpop.permute.xlu0 %1136
      %v1139 = vcombine.high %v1120, 0
      %v1141 = vunpack.c.l.s4 1983009808
      %v1142 = vunpack.c.0.s8 %v1141
      %v1143 = vlaneseq
      %v1144 = vshrl.u32 %v1143, 7
      %v1145 = vsub.s32 %v1142, %v1144
      %v1146 = vrot.slane %v1120, %v1145
      %v1148 = vunpack.c.l.s4 1983009808
      %v1149 = vunpack.c.0.s8 %v1148
      %v1150 = vlaneseq
      %v1151 = vshrl.u32 %v1150, 7
      %v1152 = vsub.s32 %v1149, %v1151
      %v1153 = vrot.slane %v1139, %v1152
      %v1154 = vcombine.high %v1130, 0
      %v1156 = vunpack.c.l.s4 1983009808
      %v1157 = vunpack.c.0.s8 %v1156
      %v1158 = vlaneseq
      %v1159 = vshrl.u32 %v1158, 7
      %v1160 = vsub.s32 %v1157, %v1159
      %v1161 = vrot.slane %v1130, %v1160
      %v1163 = vunpack.c.l.s4 1983009808
      %v1164 = vunpack.c.0.s8 %v1163
      %v1165 = vlaneseq
      %v1166 = vshrl.u32 %v1165, 7
      %v1167 = vsub.s32 %v1164, %v1166
      %v1168 = vrot.slane %v1154, %v1167
      %v1169 = vcombine.low %v1146, %v1161
      %v1170 = vcombine.high %v1146, %v1161
      %v1172 = vunpack.c.l.s4 1934713408
      %v1173 = vunpack.c.0.s8 %v1172
      %v1174 = vlaneseq
      %v1175 = vshrl.u32 %v1174, 7
      %v1176 = vsub.s32 %v1173, %v1175
      %v1177 = vrot.slane %v1169, %v1176
      %v1179 = vunpack.c.l.s4 1934713408
      %v1180 = vunpack.c.0.s8 %v1179
      %v1181 = vlaneseq
      %v1182 = vshrl.u32 %v1181, 7
      %v1183 = vsub.s32 %v1180, %v1182
      %v1184 = vrot.slane %v1170, %v1183
      %v1185 = vcombine.low %v1153, %v1168
      %v1186 = vcombine.high %v1153, %v1168
      %v1188 = vunpack.c.l.s4 1934713408
      %v1189 = vunpack.c.0.s8 %v1188
      %v1190 = vlaneseq
      %v1191 = vshrl.u32 %v1190, 7
      %v1192 = vsub.s32 %v1189, %v1191
      %v1193 = vrot.slane %v1185, %v1192
      %v1195 = vunpack.c.l.s4 1934713408
      %v1196 = vunpack.c.0.s8 %v1195
      %v1197 = vlaneseq
      %v1198 = vshrl.u32 %v1197, 7
      %v1199 = vsub.s32 %v1196, %v1198
      %v1200 = vrot.slane %v1186, %v1199
      %v1201 = vcombine.high %v1177, 0
      %v1202 = vcombine.high %v1184, 0
      %v1203 = vcombine.high %v1193, 0
      %v1204 = vcombine.high %v1200, 0
      %v1205 = vcombine.high %v1125, 0
      %v1207 = vunpack.c.l.s4 1983009808
      %v1208 = vunpack.c.0.s8 %v1207
      %v1209 = vlaneseq
      %v1210 = vshrl.u32 %v1209, 7
      %v1211 = vsub.s32 %v1208, %v1210
      %v1212 = vrot.slane %v1125, %v1211
      %v1214 = vunpack.c.l.s4 1983009808
      %v1215 = vunpack.c.0.s8 %v1214
      %v1216 = vlaneseq
      %v1217 = vshrl.u32 %v1216, 7
      %v1218 = vsub.s32 %v1215, %v1217
      %v1219 = vrot.slane %v1205, %v1218
      %v1220 = vcombine.high %v1135, 0
      %v1222 = vunpack.c.l.s4 1983009808
      %v1223 = vunpack.c.0.s8 %v1222
      %v1224 = vlaneseq
      %v1225 = vshrl.u32 %v1224, 7
      %v1226 = vsub.s32 %v1223, %v1225
      %v1227 = vrot.slane %v1135, %v1226
      %v1229 = vunpack.c.l.s4 1983009808
      %v1230 = vunpack.c.0.s8 %v1229
      %v1231 = vlaneseq
      %v1232 = vshrl.u32 %v1231, 7
      %v1233 = vsub.s32 %v1230, %v1232
      %v1234 = vrot.slane %v1220, %v1233
      %v1235 = vcombine.low %v1212, %v1227
      %v1236 = vcombine.high %v1212, %v1227
      %v1238 = vunpack.c.l.s4 1934713408
      %v1239 = vunpack.c.0.s8 %v1238
      %v1240 = vlaneseq
      %v1241 = vshrl.u32 %v1240, 7
      %v1242 = vsub.s32 %v1239, %v1241
      %v1243 = vrot.slane %v1235, %v1242
      %v1245 = vunpack.c.l.s4 1934713408
      %v1246 = vunpack.c.0.s8 %v1245
      %v1247 = vlaneseq
      %v1248 = vshrl.u32 %v1247, 7
      %v1249 = vsub.s32 %v1246, %v1248
      %v1250 = vrot.slane %v1236, %v1249
      %v1251 = vcombine.low %v1219, %v1234
      %v1252 = vcombine.high %v1219, %v1234
      %v1254 = vunpack.c.l.s4 1934713408
      %v1255 = vunpack.c.0.s8 %v1254
      %v1256 = vlaneseq
      %v1257 = vshrl.u32 %v1256, 7
      %v1258 = vsub.s32 %v1255, %v1257
      %v1259 = vrot.slane %v1251, %v1258
      %v1261 = vunpack.c.l.s4 1934713408
      %v1262 = vunpack.c.0.s8 %v1261
      %v1263 = vlaneseq
      %v1264 = vshrl.u32 %v1263, 7
      %v1265 = vsub.s32 %v1262, %v1264
      %v1266 = vrot.slane %v1252, %v1265
      %v1267 = vcombine.high %v1243, 0
      %v1268 = vcombine.high %v1250, 0
      %v1269 = vcombine.high %v1259, 0
      %v1270 = vcombine.high %v1266, 0
      %v1272 = vcombine.low %v1121, %v1132
      %v1274 = vunpack.c.l.s4 1934713408
      %v1275 = vunpack.c.0.s8 %v1274
      %v1276 = vlaneseq
      %v1277 = vshrl.u32 %v1276, 7
      %v1278 = vsub.s32 %v1275, %v1277
      %v1279 = vrot.slane %v1272, %v1278
      %v1282 = vcombine.low %v1127, %v1137
      %v1284 = vunpack.c.l.s4 1934713408
      %v1285 = vunpack.c.0.s8 %v1284
      %v1286 = vlaneseq
      %v1287 = vshrl.u32 %v1286, 7
      %v1288 = vsub.s32 %v1285, %v1287
      %v1289 = vrot.slane %v1282, %v1288
      %v1292 = vpack.i.b16 %v1243, %v1177
      %v1294 = vshrl.u32 %v1177, 16
      %v1295 = vshrl.u32 %v1243, 16
      %v1296 = vpack.i.b16 %v1295, %v1294
      %v1300 = vpack.i.b16 %v1267, %v1201
      %v1302 = vshrl.u32 %v1201, 16
      %v1303 = vshrl.u32 %v1267, 16
      %v1304 = vpack.i.b16 %v1303, %v1302
      %v1308 = vpack.i.b16 %v1250, %v1184
      %v1310 = vshrl.u32 %v1184, 16
      %v1311 = vshrl.u32 %v1250, 16
      %v1312 = vpack.i.b16 %v1311, %v1310
      %v1316 = vpack.i.b16 %v1268, %v1202
      %v1318 = vshrl.u32 %v1202, 16
      %v1319 = vshrl.u32 %v1268, 16
      %v1320 = vpack.i.b16 %v1319, %v1318
      %v1324 = vpack.i.b16 %v1259, %v1193
      %v1326 = vshrl.u32 %v1193, 16
      %v1327 = vshrl.u32 %v1259, 16
      %v1328 = vpack.i.b16 %v1327, %v1326
      %v1332 = vpack.i.b16 %v1269, %v1203
      %v1334 = vshrl.u32 %v1203, 16
      %v1335 = vshrl.u32 %v1269, 16
      %v1336 = vpack.i.b16 %v1335, %v1334
      %v1340 = vpack.i.b16 %v1266, %v1200
      %v1342 = vshrl.u32 %v1200, 16
      %v1343 = vshrl.u32 %v1266, 16
      %v1344 = vpack.i.b16 %v1343, %v1342
      %v1348 = vpack.i.b16 %v1270, %v1204
      %v1350 = vshrl.u32 %v1204, 16
      %v1351 = vshrl.u32 %v1270, 16
      %v1352 = vpack.i.b16 %v1351, %v1350
      %v1356 = vpack.i.b16 %v1289, %v1279
      %v1357 = vcombine.low %v1292, %v1308
      %v1359 = vunpack.c.l.s4 1983009808
      %v1360 = vunpack.c.0.s8 %v1359
      %v1361 = vlaneseq
      %v1362 = vshrl.u32 %v1361, 7
      %v1363 = vsub.s32 %v1360, %v1362
      %v1364 = vrot.slane %v1357, %v1363
      %v1365 = vcombine.low %v1300, %v1316
      %v1367 = vunpack.c.l.s4 1983009808
      %v1368 = vunpack.c.0.s8 %v1367
      %v1369 = vlaneseq
      %v1370 = vshrl.u32 %v1369, 7
      %v1371 = vsub.s32 %v1368, %v1370
      %v1372 = vrot.slane %v1365, %v1371
      %v1373 = vcombine.low %v1324, %v1340
      %v1375 = vunpack.c.l.s4 1983009808
      %v1376 = vunpack.c.0.s8 %v1375
      %v1377 = vlaneseq
      %v1378 = vshrl.u32 %v1377, 7
      %v1379 = vsub.s32 %v1376, %v1378
      %v1380 = vrot.slane %v1373, %v1379
      %v1381 = vcombine.low %v1332, %v1348
      %v1383 = vunpack.c.l.s4 1983009808
      %v1384 = vunpack.c.0.s8 %v1383
      %v1385 = vlaneseq
      %v1386 = vshrl.u32 %v1385, 7
      %v1387 = vsub.s32 %v1384, %v1386
      %v1388 = vrot.slane %v1381, %v1387
      %v1389 = vcombine.low %v1364, %v1372
      %v1391 = vunpack.c.l.s4 1934713408
      %v1392 = vunpack.c.0.s8 %v1391
      %v1393 = vlaneseq
      %v1394 = vshrl.u32 %v1393, 7
      %v1395 = vsub.s32 %v1392, %v1394
      %v1396 = vrot.slane %v1389, %v1395
      %v1397 = vcombine.low %v1380, %v1388
      %v1399 = vunpack.c.l.s4 1934713408
      %v1400 = vunpack.c.0.s8 %v1399
      %v1401 = vlaneseq
      %v1402 = vshrl.u32 %v1401, 7
      %v1403 = vsub.s32 %v1400, %v1402
      %v1404 = vrot.slane %v1397, %v1403
      %v1405 = vcombine.low %v1396, %v1404
      %v1406 = vcombine.high %v1396, %v1404
      %v1407 = vcombine.low %v1296, %v1312
      %v1409 = vunpack.c.l.s4 1983009808
      %v1410 = vunpack.c.0.s8 %v1409
      %v1411 = vlaneseq
      %v1412 = vshrl.u32 %v1411, 7
      %v1413 = vsub.s32 %v1410, %v1412
      %v1414 = vrot.slane %v1407, %v1413
      %v1415 = vcombine.low %v1304, %v1320
      %v1417 = vunpack.c.l.s4 1983009808
      %v1418 = vunpack.c.0.s8 %v1417
      %v1419 = vlaneseq
      %v1420 = vshrl.u32 %v1419, 7
      %v1421 = vsub.s32 %v1418, %v1420
      %v1422 = vrot.slane %v1415, %v1421
      %v1423 = vcombine.low %v1328, %v1344
      %v1425 = vunpack.c.l.s4 1983009808
      %v1426 = vunpack.c.0.s8 %v1425
      %v1427 = vlaneseq
      %v1428 = vshrl.u32 %v1427, 7
      %v1429 = vsub.s32 %v1426, %v1428
      %v1430 = vrot.slane %v1423, %v1429
      %v1431 = vcombine.low %v1336, %v1352
      %v1433 = vunpack.c.l.s4 1983009808
      %v1434 = vunpack.c.0.s8 %v1433
      %v1435 = vlaneseq
      %v1436 = vshrl.u32 %v1435, 7
      %v1437 = vsub.s32 %v1434, %v1436
      %v1438 = vrot.slane %v1431, %v1437
      %v1439 = vcombine.low %v1414, %v1422
      %v1441 = vunpack.c.l.s4 1934713408
      %v1442 = vunpack.c.0.s8 %v1441
      %v1443 = vlaneseq
      %v1444 = vshrl.u32 %v1443, 7
      %v1445 = vsub.s32 %v1442, %v1444
      %v1446 = vrot.slane %v1439, %v1445
      %v1447 = vcombine.low %v1430, %v1438
      %v1449 = vunpack.c.l.s4 1934713408
      %v1450 = vunpack.c.0.s8 %v1449
      %v1451 = vlaneseq
      %v1452 = vshrl.u32 %v1451, 7
      %v1453 = vsub.s32 %v1450, %v1452
      %v1454 = vrot.slane %v1447, %v1453
      %v1455 = vcombine.low %v1446, %v1454
      %v1456 = vcombine.high %v1446, %v1454
      %v1459 = vunpack.c.l.s4 1934713408
      %v1460 = vunpack.c.0.s8 %v1459
      %v1461 = vlaneseq
      %v1462 = vshrl.u32 %v1461, 7
      %v1463 = vsub.s32 %v1460, %v1462
      %v1464 = vrot.slane %v1356, %v1463
      %v1465 = vcombine.high %v1464, 0
      %v1468 = vpack.i.b16 %v1455, %v1405
      %v1469 = vshrl.u32 %v1405, 16
      %v1470 = vshrl.u32 %v1455, 16
      %v1471 = vpack.i.b16 %v1470, %v1469
      %v1474 = vpack.i.b16 %v1456, %v1406
      %v1475 = vshrl.u32 %v1406, 16
      %v1476 = vshrl.u32 %v1456, 16
      %v1477 = vpack.i.b16 %v1476, %v1475
      %v1480 = vpack.i.b16 0, %v1464
      %v1481 = vshrl.u32 %v1464, 16
      %v1482 = vshrl.u32 0, 16
      %v1483 = vpack.i.b16 %v1482, %v1481
      %v1485 = vpack.i.b16 0, %v1465
      %v1486 = vshrl.u32 %v1465, 16
      %v1487 = vpack.i.b16 %v1482, %v1486
      %v1488 = vpack.c.bf16 %v1039, %v1036
      %v1489 = vpack.c.bf16 %v1044, %v1044
      %1492 = vrot.lane.b32.xlu0 %v1488, 120
      %v1493 = vpop.permute.xlu0 %1492
      %1494 = vrot.lane.b32.xlu0 %v1489, 120
      %v1495 = vpop.permute.xlu0 %1494
      %1497 = vrot.lane.b32.xlu0 %v1488, 112
      %v1498 = vpop.permute.xlu0 %1497
      %1499 = vrot.lane.b32.xlu0 %v1489, 112
      %v1500 = vpop.permute.xlu0 %1499
      %1502 = vrot.lane.b32.xlu0 %v1488, 104
      %v1503 = vpop.permute.xlu0 %1502
      %1504 = vrot.lane.b32.xlu0 %v1489, 104
      %v1505 = vpop.permute.xlu0 %1504
      %v1507 = vcombine.high %v1488, 0
      %v1509 = vunpack.c.l.s4 1983009808
      %v1510 = vunpack.c.0.s8 %v1509
      %v1511 = vlaneseq
      %v1512 = vshrl.u32 %v1511, 7
      %v1513 = vsub.s32 %v1510, %v1512
      %v1514 = vrot.slane %v1488, %v1513
      %v1516 = vunpack.c.l.s4 1983009808
      %v1517 = vunpack.c.0.s8 %v1516
      %v1518 = vlaneseq
      %v1519 = vshrl.u32 %v1518, 7
      %v1520 = vsub.s32 %v1517, %v1519
      %v1521 = vrot.slane %v1507, %v1520
      %v1522 = vcombine.high %v1498, 0
      %v1524 = vunpack.c.l.s4 1983009808
      %v1525 = vunpack.c.0.s8 %v1524
      %v1526 = vlaneseq
      %v1527 = vshrl.u32 %v1526, 7
      %v1528 = vsub.s32 %v1525, %v1527
      %v1529 = vrot.slane %v1498, %v1528
      %v1531 = vunpack.c.l.s4 1983009808
      %v1532 = vunpack.c.0.s8 %v1531
      %v1533 = vlaneseq
      %v1534 = vshrl.u32 %v1533, 7
      %v1535 = vsub.s32 %v1532, %v1534
      %v1536 = vrot.slane %v1522, %v1535
      %v1537 = vcombine.low %v1514, %v1529
      %v1538 = vcombine.high %v1514, %v1529
      %v1540 = vunpack.c.l.s4 1934713408
      %v1541 = vunpack.c.0.s8 %v1540
      %v1542 = vlaneseq
      %v1543 = vshrl.u32 %v1542, 7
      %v1544 = vsub.s32 %v1541, %v1543
      %v1545 = vrot.slane %v1537, %v1544
      %v1547 = vunpack.c.l.s4 1934713408
      %v1548 = vunpack.c.0.s8 %v1547
      %v1549 = vlaneseq
      %v1550 = vshrl.u32 %v1549, 7
      %v1551 = vsub.s32 %v1548, %v1550
      %v1552 = vrot.slane %v1538, %v1551
      %v1553 = vcombine.low %v1521, %v1536
      %v1554 = vcombine.high %v1521, %v1536
      %v1556 = vunpack.c.l.s4 1934713408
      %v1557 = vunpack.c.0.s8 %v1556
      %v1558 = vlaneseq
      %v1559 = vshrl.u32 %v1558, 7
      %v1560 = vsub.s32 %v1557, %v1559
      %v1561 = vrot.slane %v1553, %v1560
      %v1563 = vunpack.c.l.s4 1934713408
      %v1564 = vunpack.c.0.s8 %v1563
      %v1565 = vlaneseq
      %v1566 = vshrl.u32 %v1565, 7
      %v1567 = vsub.s32 %v1564, %v1566
      %v1568 = vrot.slane %v1554, %v1567
      %v1569 = vcombine.high %v1545, 0
      %v1570 = vcombine.high %v1552, 0
      %v1571 = vcombine.high %v1561, 0
      %v1572 = vcombine.high %v1568, 0
      %v1573 = vcombine.high %v1493, 0
      %v1575 = vunpack.c.l.s4 1983009808
      %v1576 = vunpack.c.0.s8 %v1575
      %v1577 = vlaneseq
      %v1578 = vshrl.u32 %v1577, 7
      %v1579 = vsub.s32 %v1576, %v1578
      %v1580 = vrot.slane %v1493, %v1579
      %v1582 = vunpack.c.l.s4 1983009808
      %v1583 = vunpack.c.0.s8 %v1582
      %v1584 = vlaneseq
      %v1585 = vshrl.u32 %v1584, 7
      %v1586 = vsub.s32 %v1583, %v1585
      %v1587 = vrot.slane %v1573, %v1586
      %v1588 = vcombine.high %v1503, 0
      %v1590 = vunpack.c.l.s4 1983009808
      %v1591 = vunpack.c.0.s8 %v1590
      %v1592 = vlaneseq
      %v1593 = vshrl.u32 %v1592, 7
      %v1594 = vsub.s32 %v1591, %v1593
      %v1595 = vrot.slane %v1503, %v1594
      %v1597 = vunpack.c.l.s4 1983009808
      %v1598 = vunpack.c.0.s8 %v1597
      %v1599 = vlaneseq
      %v1600 = vshrl.u32 %v1599, 7
      %v1601 = vsub.s32 %v1598, %v1600
      %v1602 = vrot.slane %v1588, %v1601
      %v1603 = vcombine.low %v1580, %v1595
      %v1604 = vcombine.high %v1580, %v1595
      %v1606 = vunpack.c.l.s4 1934713408
      %v1607 = vunpack.c.0.s8 %v1606
      %v1608 = vlaneseq
      %v1609 = vshrl.u32 %v1608, 7
      %v1610 = vsub.s32 %v1607, %v1609
      %v1611 = vrot.slane %v1603, %v1610
      %v1613 = vunpack.c.l.s4 1934713408
      %v1614 = vunpack.c.0.s8 %v1613
      %v1615 = vlaneseq
      %v1616 = vshrl.u32 %v1615, 7
      %v1617 = vsub.s32 %v1614, %v1616
      %v1618 = vrot.slane %v1604, %v1617
      %v1619 = vcombine.low %v1587, %v1602
      %v1620 = vcombine.high %v1587, %v1602
      %v1622 = vunpack.c.l.s4 1934713408
      %v1623 = vunpack.c.0.s8 %v1622
      %v1624 = vlaneseq
      %v1625 = vshrl.u32 %v1624, 7
      %v1626 = vsub.s32 %v1623, %v1625
      %v1627 = vrot.slane %v1619, %v1626
      %v1629 = vunpack.c.l.s4 1934713408
      %v1630 = vunpack.c.0.s8 %v1629
      %v1631 = vlaneseq
      %v1632 = vshrl.u32 %v1631, 7
      %v1633 = vsub.s32 %v1630, %v1632
      %v1634 = vrot.slane %v1620, %v1633
      %v1635 = vcombine.high %v1611, 0
      %v1636 = vcombine.high %v1618, 0
      %v1637 = vcombine.high %v1627, 0
      %v1638 = vcombine.high %v1634, 0
      %v1640 = vcombine.low %v1489, %v1500
      %v1642 = vunpack.c.l.s4 1934713408
      %v1643 = vunpack.c.0.s8 %v1642
      %v1644 = vlaneseq
      %v1645 = vshrl.u32 %v1644, 7
      %v1646 = vsub.s32 %v1643, %v1645
      %v1647 = vrot.slane %v1640, %v1646
      %v1650 = vcombine.low %v1495, %v1505
      %v1652 = vunpack.c.l.s4 1934713408
      %v1653 = vunpack.c.0.s8 %v1652
      %v1654 = vlaneseq
      %v1655 = vshrl.u32 %v1654, 7
      %v1656 = vsub.s32 %v1653, %v1655
      %v1657 = vrot.slane %v1650, %v1656
      %v1660 = vpack.i.b16 %v1611, %v1545
      %v1662 = vshrl.u32 %v1545, 16
      %v1663 = vshrl.u32 %v1611, 16
      %v1664 = vpack.i.b16 %v1663, %v1662
      %v1668 = vpack.i.b16 %v1635, %v1569
      %v1670 = vshrl.u32 %v1569, 16
      %v1671 = vshrl.u32 %v1635, 16
      %v1672 = vpack.i.b16 %v1671, %v1670
      %v1676 = vpack.i.b16 %v1618, %v1552
      %v1678 = vshrl.u32 %v1552, 16
      %v1679 = vshrl.u32 %v1618, 16
      %v1680 = vpack.i.b16 %v1679, %v1678
      %v1684 = vpack.i.b16 %v1636, %v1570
      %v1686 = vshrl.u32 %v1570, 16
      %v1687 = vshrl.u32 %v1636, 16
      %v1688 = vpack.i.b16 %v1687, %v1686
      %v1692 = vpack.i.b16 %v1627, %v1561
      %v1694 = vshrl.u32 %v1561, 16
      %v1695 = vshrl.u32 %v1627, 16
      %v1696 = vpack.i.b16 %v1695, %v1694
      %v1700 = vpack.i.b16 %v1637, %v1571
      %v1702 = vshrl.u32 %v1571, 16
      %v1703 = vshrl.u32 %v1637, 16
      %v1704 = vpack.i.b16 %v1703, %v1702
      %v1708 = vpack.i.b16 %v1634, %v1568
      %v1710 = vshrl.u32 %v1568, 16
      %v1711 = vshrl.u32 %v1634, 16
      %v1712 = vpack.i.b16 %v1711, %v1710
      %v1716 = vpack.i.b16 %v1638, %v1572
      %v1718 = vshrl.u32 %v1572, 16
      %v1719 = vshrl.u32 %v1638, 16
      %v1720 = vpack.i.b16 %v1719, %v1718
      %v1724 = vpack.i.b16 %v1657, %v1647
      %v1725 = vcombine.low %v1660, %v1676
      %v1727 = vunpack.c.l.s4 1983009808
      %v1728 = vunpack.c.0.s8 %v1727
      %v1729 = vlaneseq
      %v1730 = vshrl.u32 %v1729, 7
      %v1731 = vsub.s32 %v1728, %v1730
      %v1732 = vrot.slane %v1725, %v1731
      %v1733 = vcombine.low %v1668, %v1684
      %v1735 = vunpack.c.l.s4 1983009808
      %v1736 = vunpack.c.0.s8 %v1735
      %v1737 = vlaneseq
      %v1738 = vshrl.u32 %v1737, 7
      %v1739 = vsub.s32 %v1736, %v1738
      %v1740 = vrot.slane %v1733, %v1739
      %v1741 = vcombine.low %v1692, %v1708
      %v1743 = vunpack.c.l.s4 1983009808
      %v1744 = vunpack.c.0.s8 %v1743
      %v1745 = vlaneseq
      %v1746 = vshrl.u32 %v1745, 7
      %v1747 = vsub.s32 %v1744, %v1746
      %v1748 = vrot.slane %v1741, %v1747
      %v1749 = vcombine.low %v1700, %v1716
      %v1751 = vunpack.c.l.s4 1983009808
      %v1752 = vunpack.c.0.s8 %v1751
      %v1753 = vlaneseq
      %v1754 = vshrl.u32 %v1753, 7
      %v1755 = vsub.s32 %v1752, %v1754
      %v1756 = vrot.slane %v1749, %v1755
      %v1757 = vcombine.low %v1732, %v1740
      %v1759 = vunpack.c.l.s4 1934713408
      %v1760 = vunpack.c.0.s8 %v1759
      %v1761 = vlaneseq
      %v1762 = vshrl.u32 %v1761, 7
      %v1763 = vsub.s32 %v1760, %v1762
      %v1764 = vrot.slane %v1757, %v1763
      %v1765 = vcombine.low %v1748, %v1756
      %v1767 = vunpack.c.l.s4 1934713408
      %v1768 = vunpack.c.0.s8 %v1767
      %v1769 = vlaneseq
      %v1770 = vshrl.u32 %v1769, 7
      %v1771 = vsub.s32 %v1768, %v1770
      %v1772 = vrot.slane %v1765, %v1771
      %v1773 = vcombine.low %v1764, %v1772
      %v1774 = vcombine.high %v1764, %v1772
      %v1775 = vcombine.low %v1664, %v1680
      %v1777 = vunpack.c.l.s4 1983009808
      %v1778 = vunpack.c.0.s8 %v1777
      %v1779 = vlaneseq
      %v1780 = vshrl.u32 %v1779, 7
      %v1781 = vsub.s32 %v1778, %v1780
      %v1782 = vrot.slane %v1775, %v1781
      %v1783 = vcombine.low %v1672, %v1688
      %v1785 = vunpack.c.l.s4 1983009808
      %v1786 = vunpack.c.0.s8 %v1785
      %v1787 = vlaneseq
      %v1788 = vshrl.u32 %v1787, 7
      %v1789 = vsub.s32 %v1786, %v1788
      %v1790 = vrot.slane %v1783, %v1789
      %v1791 = vcombine.low %v1696, %v1712
      %v1793 = vunpack.c.l.s4 1983009808
      %v1794 = vunpack.c.0.s8 %v1793
      %v1795 = vlaneseq
      %v1796 = vshrl.u32 %v1795, 7
      %v1797 = vsub.s32 %v1794, %v1796
      %v1798 = vrot.slane %v1791, %v1797
      %v1799 = vcombine.low %v1704, %v1720
      %v1801 = vunpack.c.l.s4 1983009808
      %v1802 = vunpack.c.0.s8 %v1801
      %v1803 = vlaneseq
      %v1804 = vshrl.u32 %v1803, 7
      %v1805 = vsub.s32 %v1802, %v1804
      %v1806 = vrot.slane %v1799, %v1805
      %v1807 = vcombine.low %v1782, %v1790
      %v1809 = vunpack.c.l.s4 1934713408
      %v1810 = vunpack.c.0.s8 %v1809
      %v1811 = vlaneseq
      %v1812 = vshrl.u32 %v1811, 7
      %v1813 = vsub.s32 %v1810, %v1812
      %v1814 = vrot.slane %v1807, %v1813
      %v1815 = vcombine.low %v1798, %v1806
      %v1817 = vunpack.c.l.s4 1934713408
      %v1818 = vunpack.c.0.s8 %v1817
      %v1819 = vlaneseq
      %v1820 = vshrl.u32 %v1819, 7
      %v1821 = vsub.s32 %v1818, %v1820
      %v1822 = vrot.slane %v1815, %v1821
      %v1823 = vcombine.low %v1814, %v1822
      %v1824 = vcombine.high %v1814, %v1822
      %v1827 = vunpack.c.l.s4 1934713408
      %v1828 = vunpack.c.0.s8 %v1827
      %v1829 = vlaneseq
      %v1830 = vshrl.u32 %v1829, 7
      %v1831 = vsub.s32 %v1828, %v1830
      %v1832 = vrot.slane %v1724, %v1831
      %v1833 = vcombine.high %v1832, 0
      %v1836 = vpack.i.b16 %v1823, %v1773
      %v1837 = vshrl.u32 %v1773, 16
      %v1838 = vshrl.u32 %v1823, 16
      %v1839 = vpack.i.b16 %v1838, %v1837
      %v1842 = vpack.i.b16 %v1824, %v1774
      %v1843 = vshrl.u32 %v1774, 16
      %v1844 = vshrl.u32 %v1824, 16
      %v1845 = vpack.i.b16 %v1844, %v1843
      %v1847 = vpack.i.b16 0, %v1832
      %v1848 = vshrl.u32 %v1832, 16
      %v1849 = vpack.i.b16 %v1482, %v1848
      %v1851 = vpack.i.b16 0, %v1833
      %v1852 = vshrl.u32 %v1833, 16
      %v1853 = vpack.i.b16 %v1482, %v1852
      %v1854 = vpack.c.bf16 %v1110, %v1107
      %v1855 = vpack.c.bf16 %v1115, %v1115
      %1858 = vrot.lane.b32.xlu0 %v1854, 120
      %v1859 = vpop.permute.xlu0 %1858
      %1860 = vrot.lane.b32.xlu0 %v1855, 120
      %v1861 = vpop.permute.xlu0 %1860
      %1863 = vrot.lane.b32.xlu0 %v1854, 112
      %v1864 = vpop.permute.xlu0 %1863
      %1865 = vrot.lane.b32.xlu0 %v1855, 112
      %v1866 = vpop.permute.xlu0 %1865
      %1868 = vrot.lane.b32.xlu0 %v1854, 104
      %v1869 = vpop.permute.xlu0 %1868
      %1870 = vrot.lane.b32.xlu0 %v1855, 104
      %v1871 = vpop.permute.xlu0 %1870
      %v1873 = vcombine.high %v1854, 0
      %v1875 = vunpack.c.l.s4 1983009808
      %v1876 = vunpack.c.0.s8 %v1875
      %v1877 = vlaneseq
      %v1878 = vshrl.u32 %v1877, 7
      %v1879 = vsub.s32 %v1876, %v1878
      %v1880 = vrot.slane %v1854, %v1879
      %v1882 = vunpack.c.l.s4 1983009808
      %v1883 = vunpack.c.0.s8 %v1882
      %v1884 = vlaneseq
      %v1885 = vshrl.u32 %v1884, 7
      %v1886 = vsub.s32 %v1883, %v1885
      %v1887 = vrot.slane %v1873, %v1886
      %v1888 = vcombine.high %v1864, 0
      %v1890 = vunpack.c.l.s4 1983009808
      %v1891 = vunpack.c.0.s8 %v1890
      %v1892 = vlaneseq
      %v1893 = vshrl.u32 %v1892, 7
      %v1894 = vsub.s32 %v1891, %v1893
      %v1895 = vrot.slane %v1864, %v1894
      %v1897 = vunpack.c.l.s4 1983009808
      %v1898 = vunpack.c.0.s8 %v1897
      %v1899 = vlaneseq
      %v1900 = vshrl.u32 %v1899, 7
      %v1901 = vsub.s32 %v1898, %v1900
      %v1902 = vrot.slane %v1888, %v1901
      %v1903 = vcombine.low %v1880, %v1895
      %v1904 = vcombine.high %v1880, %v1895
      %v1906 = vunpack.c.l.s4 1934713408
      %v1907 = vunpack.c.0.s8 %v1906
      %v1908 = vlaneseq
      %v1909 = vshrl.u32 %v1908, 7
      %v1910 = vsub.s32 %v1907, %v1909
      %v1911 = vrot.slane %v1903, %v1910
      %v1913 = vunpack.c.l.s4 1934713408
      %v1914 = vunpack.c.0.s8 %v1913
      %v1915 = vlaneseq
      %v1916 = vshrl.u32 %v1915, 7
      %v1917 = vsub.s32 %v1914, %v1916
      %v1918 = vrot.slane %v1904, %v1917
      %v1919 = vcombine.low %v1887, %v1902
      %v1920 = vcombine.high %v1887, %v1902
      %v1922 = vunpack.c.l.s4 1934713408
      %v1923 = vunpack.c.0.s8 %v1922
      %v1924 = vlaneseq
      %v1925 = vshrl.u32 %v1924, 7
      %v1926 = vsub.s32 %v1923, %v1925
      %v1927 = vrot.slane %v1919, %v1926
      %v1929 = vunpack.c.l.s4 1934713408
      %v1930 = vunpack.c.0.s8 %v1929
      %v1931 = vlaneseq
      %v1932 = vshrl.u32 %v1931, 7
      %v1933 = vsub.s32 %v1930, %v1932
      %v1934 = vrot.slane %v1920, %v1933
      %v1935 = vcombine.high %v1911, 0
      %v1936 = vcombine.high %v1918, 0
      %v1937 = vcombine.high %v1927, 0
      %v1938 = vcombine.high %v1934, 0
      %v1939 = vcombine.high %v1859, 0
      %v1941 = vunpack.c.l.s4 1983009808
      %v1942 = vunpack.c.0.s8 %v1941
      %v1943 = vlaneseq
      %v1944 = vshrl.u32 %v1943, 7
      %v1945 = vsub.s32 %v1942, %v1944
      %v1946 = vrot.slane %v1859, %v1945
      %v1948 = vunpack.c.l.s4 1983009808
      %v1949 = vunpack.c.0.s8 %v1948
      %v1950 = vlaneseq
      %v1951 = vshrl.u32 %v1950, 7
      %v1952 = vsub.s32 %v1949, %v1951
      %v1953 = vrot.slane %v1939, %v1952
      %v1954 = vcombine.high %v1869, 0
      %v1956 = vunpack.c.l.s4 1983009808
      %v1957 = vunpack.c.0.s8 %v1956
      %v1958 = vlaneseq
      %v1959 = vshrl.u32 %v1958, 7
      %v1960 = vsub.s32 %v1957, %v1959
      %v1961 = vrot.slane %v1869, %v1960
      %v1963 = vunpack.c.l.s4 1983009808
      %v1964 = vunpack.c.0.s8 %v1963
      %v1965 = vlaneseq
      %v1966 = vshrl.u32 %v1965, 7
      %v1967 = vsub.s32 %v1964, %v1966
      %v1968 = vrot.slane %v1954, %v1967
      %v1969 = vcombine.low %v1946, %v1961
      %v1970 = vcombine.high %v1946, %v1961
      %v1972 = vunpack.c.l.s4 1934713408
      %v1973 = vunpack.c.0.s8 %v1972
      %v1974 = vlaneseq
      %v1975 = vshrl.u32 %v1974, 7
      %v1976 = vsub.s32 %v1973, %v1975
      %v1977 = vrot.slane %v1969, %v1976
      %v1979 = vunpack.c.l.s4 1934713408
      %v1980 = vunpack.c.0.s8 %v1979
      %v1981 = vlaneseq
      %v1982 = vshrl.u32 %v1981, 7
      %v1983 = vsub.s32 %v1980, %v1982
      %v1984 = vrot.slane %v1970, %v1983
      %v1985 = vcombine.low %v1953, %v1968
      %v1986 = vcombine.high %v1953, %v1968
      %v1988 = vunpack.c.l.s4 1934713408
      %v1989 = vunpack.c.0.s8 %v1988
      %v1990 = vlaneseq
      %v1991 = vshrl.u32 %v1990, 7
      %v1992 = vsub.s32 %v1989, %v1991
      %v1993 = vrot.slane %v1985, %v1992
      %v1995 = vunpack.c.l.s4 1934713408
      %v1996 = vunpack.c.0.s8 %v1995
      %v1997 = vlaneseq
      %v1998 = vshrl.u32 %v1997, 7
      %v1999 = vsub.s32 %v1996, %v1998
      %v2000 = vrot.slane %v1986, %v1999
      %v2001 = vcombine.high %v1977, 0
      %v2002 = vcombine.high %v1984, 0
      %v2003 = vcombine.high %v1993, 0
      %v2004 = vcombine.high %v2000, 0
      %v2006 = vcombine.low %v1855, %v1866
      %v2008 = vunpack.c.l.s4 1934713408
      %v2009 = vunpack.c.0.s8 %v2008
      %v2010 = vlaneseq
      %v2011 = vshrl.u32 %v2010, 7
      %v2012 = vsub.s32 %v2009, %v2011
      %v2013 = vrot.slane %v2006, %v2012
      %v2016 = vcombine.low %v1861, %v1871
      %v2018 = vunpack.c.l.s4 1934713408
      %v2019 = vunpack.c.0.s8 %v2018
      %v2020 = vlaneseq
      %v2021 = vshrl.u32 %v2020, 7
      %v2022 = vsub.s32 %v2019, %v2021
      %v2023 = vrot.slane %v2016, %v2022
      %v2026 = vpack.i.b16 %v1977, %v1911
      %v2028 = vshrl.u32 %v1911, 16
      %v2029 = vshrl.u32 %v1977, 16
      %v2030 = vpack.i.b16 %v2029, %v2028
      %v2034 = vpack.i.b16 %v2001, %v1935
      %v2036 = vshrl.u32 %v1935, 16
      %v2037 = vshrl.u32 %v2001, 16
      %v2038 = vpack.i.b16 %v2037, %v2036
      %v2042 = vpack.i.b16 %v1984, %v1918
      %v2044 = vshrl.u32 %v1918, 16
      %v2045 = vshrl.u32 %v1984, 16
      %v2046 = vpack.i.b16 %v2045, %v2044
      %v2050 = vpack.i.b16 %v2002, %v1936
      %v2052 = vshrl.u32 %v1936, 16
      %v2053 = vshrl.u32 %v2002, 16
      %v2054 = vpack.i.b16 %v2053, %v2052
      %v2058 = vpack.i.b16 %v1993, %v1927
      %v2060 = vshrl.u32 %v1927, 16
      %v2061 = vshrl.u32 %v1993, 16
      %v2062 = vpack.i.b16 %v2061, %v2060
      %v2066 = vpack.i.b16 %v2003, %v1937
      %v2068 = vshrl.u32 %v1937, 16
      %v2069 = vshrl.u32 %v2003, 16
      %v2070 = vpack.i.b16 %v2069, %v2068
      %v2074 = vpack.i.b16 %v2000, %v1934
      %v2076 = vshrl.u32 %v1934, 16
      %v2077 = vshrl.u32 %v2000, 16
      %v2078 = vpack.i.b16 %v2077, %v2076
      %v2082 = vpack.i.b16 %v2004, %v1938
      %v2084 = vshrl.u32 %v1938, 16
      %v2085 = vshrl.u32 %v2004, 16
      %v2086 = vpack.i.b16 %v2085, %v2084
      %v2090 = vpack.i.b16 %v2023, %v2013
      %v2091 = vcombine.low %v2026, %v2042
      %v2093 = vunpack.c.l.s4 1983009808
      %v2094 = vunpack.c.0.s8 %v2093
      %v2095 = vlaneseq
      %v2096 = vshrl.u32 %v2095, 7
      %v2097 = vsub.s32 %v2094, %v2096
      %v2098 = vrot.slane %v2091, %v2097
      %v2099 = vcombine.low %v2034, %v2050
      %v2101 = vunpack.c.l.s4 1983009808
      %v2102 = vunpack.c.0.s8 %v2101
      %v2103 = vlaneseq
      %v2104 = vshrl.u32 %v2103, 7
      %v2105 = vsub.s32 %v2102, %v2104
      %v2106 = vrot.slane %v2099, %v2105
      %v2107 = vcombine.low %v2058, %v2074
      %v2109 = vunpack.c.l.s4 1983009808
      %v2110 = vunpack.c.0.s8 %v2109
      %v2111 = vlaneseq
      %v2112 = vshrl.u32 %v2111, 7
      %v2113 = vsub.s32 %v2110, %v2112
      %v2114 = vrot.slane %v2107, %v2113
      %v2115 = vcombine.low %v2066, %v2082
      %v2117 = vunpack.c.l.s4 1983009808
      %v2118 = vunpack.c.0.s8 %v2117
      %v2119 = vlaneseq
      %v2120 = vshrl.u32 %v2119, 7
      %v2121 = vsub.s32 %v2118, %v2120
      %v2122 = vrot.slane %v2115, %v2121
      %v2123 = vcombine.low %v2098, %v2106
      %v2125 = vunpack.c.l.s4 1934713408
      %v2126 = vunpack.c.0.s8 %v2125
      %v2127 = vlaneseq
      %v2128 = vshrl.u32 %v2127, 7
      %v2129 = vsub.s32 %v2126, %v2128
      %v2130 = vrot.slane %v2123, %v2129
      %v2131 = vcombine.low %v2114, %v2122
      %v2133 = vunpack.c.l.s4 1934713408
      %v2134 = vunpack.c.0.s8 %v2133
      %v2135 = vlaneseq
      %v2136 = vshrl.u32 %v2135, 7
      %v2137 = vsub.s32 %v2134, %v2136
      %v2138 = vrot.slane %v2131, %v2137
      %v2139 = vcombine.low %v2130, %v2138
      %v2140 = vcombine.high %v2130, %v2138
      %v2141 = vcombine.low %v2030, %v2046
      %v2143 = vunpack.c.l.s4 1983009808
      %v2144 = vunpack.c.0.s8 %v2143
      %v2145 = vlaneseq
      %v2146 = vshrl.u32 %v2145, 7
      %v2147 = vsub.s32 %v2144, %v2146
      %v2148 = vrot.slane %v2141, %v2147
      %v2149 = vcombine.low %v2038, %v2054
      %v2151 = vunpack.c.l.s4 1983009808
      %v2152 = vunpack.c.0.s8 %v2151
      %v2153 = vlaneseq
      %v2154 = vshrl.u32 %v2153, 7
      %v2155 = vsub.s32 %v2152, %v2154
      %v2156 = vrot.slane %v2149, %v2155
      %v2157 = vcombine.low %v2062, %v2078
      %v2159 = vunpack.c.l.s4 1983009808
      %v2160 = vunpack.c.0.s8 %v2159
      %v2161 = vlaneseq
      %v2162 = vshrl.u32 %v2161, 7
      %v2163 = vsub.s32 %v2160, %v2162
      %v2164 = vrot.slane %v2157, %v2163
      %v2165 = vcombine.low %v2070, %v2086
      %v2167 = vunpack.c.l.s4 1983009808
      %v2168 = vunpack.c.0.s8 %v2167
      %v2169 = vlaneseq
      %v2170 = vshrl.u32 %v2169, 7
      %v2171 = vsub.s32 %v2168, %v2170
      %v2172 = vrot.slane %v2165, %v2171
      %v2173 = vcombine.low %v2148, %v2156
      %v2175 = vunpack.c.l.s4 1934713408
      %v2176 = vunpack.c.0.s8 %v2175
      %v2177 = vlaneseq
      %v2178 = vshrl.u32 %v2177, 7
      %v2179 = vsub.s32 %v2176, %v2178
      %v2180 = vrot.slane %v2173, %v2179
      %v2181 = vcombine.low %v2164, %v2172
      %v2183 = vunpack.c.l.s4 1934713408
      %v2184 = vunpack.c.0.s8 %v2183
      %v2185 = vlaneseq
      %v2186 = vshrl.u32 %v2185, 7
      %v2187 = vsub.s32 %v2184, %v2186
      %v2188 = vrot.slane %v2181, %v2187
      %v2189 = vcombine.low %v2180, %v2188
      %v2190 = vcombine.high %v2180, %v2188
      %v2193 = vunpack.c.l.s4 1934713408
      %v2194 = vunpack.c.0.s8 %v2193
      %v2195 = vlaneseq
      %v2196 = vshrl.u32 %v2195, 7
      %v2197 = vsub.s32 %v2194, %v2196
      %v2198 = vrot.slane %v2090, %v2197
      %v2199 = vcombine.high %v2198, 0
      %v2202 = vpack.i.b16 %v2189, %v2139
      %v2204 = vshrl.u32 %v2139, 16
      %v2205 = vshrl.u32 %v2189, 16
      %v2206 = vpack.i.b16 %v2205, %v2204
      %v2210 = vpack.i.b16 %v2190, %v2140
      %v2212 = vshrl.u32 %v2140, 16
      %v2213 = vshrl.u32 %v2190, 16
      %v2214 = vpack.i.b16 %v2213, %v2212
      %v2217 = vpack.i.b16 0, %v2198
      %v2218 = vshrl.u32 %v2198, 16
      %v2219 = vpack.i.b16 %v1482, %v2218
      %v2221 = vpack.i.b16 0, %v2199
      %v2222 = vshrl.u32 %v2199, 16
      %v2223 = vpack.i.b16 %v1482, %v2222
      %vm2224 = vcmask 64512
      %v2226 = vsel %vm2224, %v1468, 0
      %v2229 = vsel %vm2224, %v1480, 0
      %v2232 = vsel %vm2224, %v1836, 0
      %v2235 = vsel %vm2224, %v1847, 0
      %2237 = vmatprep.subr.bf16.mxu0 0
      %2238 = vmatpush1.bf16.xpose.msra.mxu0 %v2232
      %2239 = vmatprep.subr.bf16.mxu0 0
      %2240 = vmatpush1.bf16.xpose.msra.mxu0 %v2235
      %2241 = vmatprep.subr.bf16.mxu0 0
      %2242 = vmatpush1.bf16.xpose.msra.mxu0 0
      %2243 = vmatprep.subr.bf16.mxu0 0
      %2244 = vmatpush1.bf16.xpose.msra.mxu0 0
      %2245 = vmatprep.subr.bf16.mxu0 0
      %2246 = vmatpush1.bf16.xpose.msra.mxu0 0
      %2247 = vmatprep.subr.bf16.mxu0 0
      %2248 = vmatpush1.bf16.xpose.msra.mxu0 0
      %2249 = vmatprep.subr.bf16.mxu0 0
      %2250 = vmatpush1.bf16.xpose.msra.mxu0 0
      %2251 = vmatprep.subr.bf16.mxu0 0
      %2252 = vmatpush1.bf16.xpose.msra.mxu0 0
      %2253 = vmatprep.subr.bf16.mxu0 0
      %2254 = vmatpush1.bf16.xpose.msra.mxu0 0
      %2255 = vmatprep.subr.bf16.mxu0 0
      %2256 = vmatpush1.bf16.xpose.msra.mxu0 0
      %2257 = vmatprep.subr.bf16.mxu0 0
      %2258 = vmatpush1.bf16.xpose.msra.mxu0 0
      %2259 = vmatprep.subr.bf16.mxu0 0
      %2260 = vmatpush1.bf16.xpose.msra.mxu0 0
      %2261 = vmatprep.subr.bf16.mxu0 0
      %2262 = vmatpush1.bf16.xpose.msra.mxu0 0
      %2263 = vmatprep.subr.bf16.mxu0 0
      %2264 = vmatpush1.bf16.xpose.msra.mxu0 0
      %2265 = vmatprep.subr.bf16.mxu0 0
      %2266 = vmatpush1.bf16.xpose.msra.mxu0 0
      %2267 = vmatprep.subr.bf16.mxu0 0
      %2268 = vmatpush1.bf16.xpose.msra.mxu0 0
      %2269 = vmatprep.mubr.bf16.mxu0 0
      %2270 = vmatmul.mubr.bf16.gmra.mrb[0].mxu0 %v2226
      %v2271 = vpop.f32.mrb[0].mxu0
      %v2272 = vadd.f32 0.0, %v2271
      %v2273 = vpop.f32.mrb[0].mxu0
      %v2274 = vpop.f32.mrb[0].mxu0
      %v2275 = vadd.f32 0.0, %v2274
      %v2276 = vpop.f32.mrb[0].mxu0
      %2277 = vmatprep.mubr.bf16.mxu0 0
      %2278 = vmatmul.mubr.bf16.gmra.mrb[0].mxu0 %v2229
      %v2279 = vpop.f32.mrb[0].mxu0
      %v2280 = vadd.f32 0.0, %v2279
      %v2281 = vpop.f32.mrb[0].mxu0
      %v2282 = vpop.f32.mrb[0].mxu0
      %v2283 = vpop.f32.mrb[0].mxu0
      %2284 = vdwg.mxu0
      %v2286 = vsel %vm2224, %v1471, 0
      %v2289 = vsel %vm2224, %v1483, 0
      %v2292 = vsel %vm2224, %v1839, 0
      %v2295 = vsel %vm2224, %v1849, 0
      %2297 = vmatprep.subr.bf16.mxu0 0
      %2298 = vmatpush1.bf16.xpose.msra.mxu0 %v2292
      %2299 = vmatprep.subr.bf16.mxu0 0
      %2300 = vmatpush1.bf16.xpose.msra.mxu0 %v2295
      %2301 = vmatprep.subr.bf16.mxu0 0
      %2302 = vmatpush1.bf16.xpose.msra.mxu0 0
      %2303 = vmatprep.subr.bf16.mxu0 0
      %2304 = vmatpush1.bf16.xpose.msra.mxu0 0
      %2305 = vmatprep.subr.bf16.mxu0 0
      %2306 = vmatpush1.bf16.xpose.msra.mxu0 0
      %2307 = vmatprep.subr.bf16.mxu0 0
      %2308 = vmatpush1.bf16.xpose.msra.mxu0 0
      %2309 = vmatprep.subr.bf16.mxu0 0
      %2310 = vmatpush1.bf16.xpose.msra.mxu0 0
      %2311 = vmatprep.subr.bf16.mxu0 0
      %2312 = vmatpush1.bf16.xpose.msra.mxu0 0
      %2313 = vmatprep.subr.bf16.mxu0 0
      %2314 = vmatpush1.bf16.xpose.msra.mxu0 0
      %2315 = vmatprep.subr.bf16.mxu0 0
      %2316 = vmatpush1.bf16.xpose.msra.mxu0 0
      %2317 = vmatprep.subr.bf16.mxu0 0
      %2318 = vmatpush1.bf16.xpose.msra.mxu0 0
      %2319 = vmatprep.subr.bf16.mxu0 0
      %2320 = vmatpush1.bf16.xpose.msra.mxu0 0
      %2321 = vmatprep.subr.bf16.mxu0 0
      %2322 = vmatpush1.bf16.xpose.msra.mxu0 0
      %2323 = vmatprep.subr.bf16.mxu0 0
      %2324 = vmatpush1.bf16.xpose.msra.mxu0 0
      %2325 = vmatprep.subr.bf16.mxu0 0
      %2326 = vmatpush1.bf16.xpose.msra.mxu0 0
      %2327 = vmatprep.subr.bf16.mxu0 0
      %2328 = vmatpush1.bf16.xpose.msra.mxu0 0
      %2329 = vmatprep.mubr.bf16.mxu0 0
      %2330 = vmatmul.mubr.bf16.gmra.mrb[0].mxu0 %v2286
      %v2331 = vpop.f32.mrb[0].mxu0
      %v2332 = vadd.f32 0.0, %v2331
      %v2333 = vpop.f32.mrb[0].mxu0
      %v2334 = vpop.f32.mrb[0].mxu0
      %v2335 = vadd.f32 0.0, %v2334
      %v2336 = vpop.f32.mrb[0].mxu0
      %2337 = vmatprep.mubr.bf16.mxu0 0
      %2338 = vmatmul.mubr.bf16.gmra.mrb[0].mxu0 %v2289
      %v2339 = vpop.f32.mrb[0].mxu0
      %v2340 = vadd.f32 0.0, %v2339
      %v2341 = vpop.f32.mrb[0].mxu0
      %v2342 = vpop.f32.mrb[0].mxu0
      %v2343 = vpop.f32.mrb[0].mxu0
      %2344 = vdwg.mxu0
      %v2346 = vsel %vm2224, %v1474, 0
      %v2349 = vsel %vm2224, %v1485, 0
      %v2352 = vsel %vm2224, %v1842, 0
      %v2355 = vsel %vm2224, %v1851, 0
      %2357 = vmatprep.subr.bf16.mxu0 0
      %2358 = vmatpush1.bf16.xpose.msra.mxu0 %v2352
      %2359 = vmatprep.subr.bf16.mxu0 0
      %2360 = vmatpush1.bf16.xpose.msra.mxu0 %v2355
      %2361 = vmatprep.subr.bf16.mxu0 0
      %2362 = vmatpush1.bf16.xpose.msra.mxu0 0
      %2363 = vmatprep.subr.bf16.mxu0 0
      %2364 = vmatpush1.bf16.xpose.msra.mxu0 0
      %2365 = vmatprep.subr.bf16.mxu0 0
      %2366 = vmatpush1.bf16.xpose.msra.mxu0 0
      %2367 = vmatprep.subr.bf16.mxu0 0
      %2368 = vmatpush1.bf16.xpose.msra.mxu0 0
      %2369 = vmatprep.subr.bf16.mxu0 0
      %2370 = vmatpush1.bf16.xpose.msra.mxu0 0
      %2371 = vmatprep.subr.bf16.mxu0 0
      %2372 = vmatpush1.bf16.xpose.msra.mxu0 0
      %2373 = vmatprep.subr.bf16.mxu0 0
      %2374 = vmatpush1.bf16.xpose.msra.mxu0 0
      %2375 = vmatprep.subr.bf16.mxu0 0
      %2376 = vmatpush1.bf16.xpose.msra.mxu0 0
      %2377 = vmatprep.subr.bf16.mxu0 0
      %2378 = vmatpush1.bf16.xpose.msra.mxu0 0
      %2379 = vmatprep.subr.bf16.mxu0 0
      %2380 = vmatpush1.bf16.xpose.msra.mxu0 0
      %2381 = vmatprep.subr.bf16.mxu0 0
      %2382 = vmatpush1.bf16.xpose.msra.mxu0 0
      %2383 = vmatprep.subr.bf16.mxu0 0
      %2384 = vmatpush1.bf16.xpose.msra.mxu0 0
      %2385 = vmatprep.subr.bf16.mxu0 0
      %2386 = vmatpush1.bf16.xpose.msra.mxu0 0
      %2387 = vmatprep.subr.bf16.mxu0 0
      %2388 = vmatpush1.bf16.xpose.msra.mxu0 0
      %2389 = vmatprep.mubr.bf16.mxu0 0
      %2390 = vmatmul.mubr.bf16.gmra.mrb[0].mxu0 %v2346
      %v2391 = vpop.f32.mrb[0].mxu0
      %v2392 = vadd.f32 0.0, %v2391
      %v2393 = vpop.f32.mrb[0].mxu0
      %v2394 = vpop.f32.mrb[0].mxu0
      %v2395 = vadd.f32 0.0, %v2394
      %v2396 = vpop.f32.mrb[0].mxu0
      %2397 = vmatprep.mubr.bf16.mxu0 0
      %2398 = vmatmul.mubr.bf16.gmra.mrb[0].mxu0 %v2349
      %v2399 = vpop.f32.mrb[0].mxu0
      %v2400 = vadd.f32 0.0, %v2399
      %v2401 = vpop.f32.mrb[0].mxu0
      %v2402 = vpop.f32.mrb[0].mxu0
      %v2403 = vpop.f32.mrb[0].mxu0
      %2404 = vdwg.mxu0
      %v2406 = vsel %vm2224, %v1477, 0
      %v2409 = vsel %vm2224, %v1487, 0
      %v2412 = vsel %vm2224, %v1845, 0
      %v2415 = vsel %vm2224, %v1853, 0
      %2417 = vmatprep.subr.bf16.mxu0 0
      %2418 = vmatpush1.bf16.xpose.msra.mxu0 %v2412
      %2419 = vmatprep.subr.bf16.mxu0 0
      %2420 = vmatpush1.bf16.xpose.msra.mxu0 %v2415
      %2421 = vmatprep.subr.bf16.mxu0 0
      %2422 = vmatpush1.bf16.xpose.msra.mxu0 0
      %2423 = vmatprep.subr.bf16.mxu0 0
      %2424 = vmatpush1.bf16.xpose.msra.mxu0 0
      %2425 = vmatprep.subr.bf16.mxu0 0
      %2426 = vmatpush1.bf16.xpose.msra.mxu0 0
      %2427 = vmatprep.subr.bf16.mxu0 0
      %2428 = vmatpush1.bf16.xpose.msra.mxu0 0
      %2429 = vmatprep.subr.bf16.mxu0 0
      %2430 = vmatpush1.bf16.xpose.msra.mxu0 0
      %2431 = vmatprep.subr.bf16.mxu0 0
      %2432 = vmatpush1.bf16.xpose.msra.mxu0 0
      %2433 = vmatprep.subr.bf16.mxu0 0
      %2434 = vmatpush1.bf16.xpose.msra.mxu0 0
      %2435 = vmatprep.subr.bf16.mxu0 0
      %2436 = vmatpush1.bf16.xpose.msra.mxu0 0
      %2437 = vmatprep.subr.bf16.mxu0 0
      %2438 = vmatpush1.bf16.xpose.msra.mxu0 0
      %2439 = vmatprep.subr.bf16.mxu0 0
      %2440 = vmatpush1.bf16.xpose.msra.mxu0 0
      %2441 = vmatprep.subr.bf16.mxu0 0
      %2442 = vmatpush1.bf16.xpose.msra.mxu0 0
      %2443 = vmatprep.subr.bf16.mxu0 0
      %2444 = vmatpush1.bf16.xpose.msra.mxu0 0
      %2445 = vmatprep.subr.bf16.mxu0 0
      %2446 = vmatpush1.bf16.xpose.msra.mxu0 0
      %2447 = vmatprep.subr.bf16.mxu0 0
      %2448 = vmatpush1.bf16.xpose.msra.mxu0 0
      %2449 = vmatprep.mubr.bf16.mxu0 0
      %2450 = vmatmul.mubr.bf16.gmra.mrb[0].mxu0 %v2406
      %v2451 = vpop.f32.mrb[0].mxu0
      %v2452 = vadd.f32 0.0, %v2451
      %v2453 = vpop.f32.mrb[0].mxu0
      %v2454 = vpop.f32.mrb[0].mxu0
      %v2455 = vadd.f32 0.0, %v2454
      %v2456 = vpop.f32.mrb[0].mxu0
      %2457 = vmatprep.mubr.bf16.mxu0 0
      %2458 = vmatmul.mubr.bf16.gmra.mrb[0].mxu0 %v2409
      %v2459 = vpop.f32.mrb[0].mxu0
      %v2460 = vadd.f32 0.0, %v2459
      %v2461 = vpop.f32.mrb[0].mxu0
      %v2462 = vpop.f32.mrb[0].mxu0
      %v2463 = vpop.f32.mrb[0].mxu0
      %2464 = vdwg.mxu0
      %vm2465 = vcmask 138240
      %v2466 = vsel %vm2465, %v2272, -inf
      %2467 = vmax.xlane.f32.xlu0 %v2466
      %v2468 = vpop.xlane.xlu0 %2467
      %v2469 = vsel %vm2465, %v2275, -inf
      %2470 = vmax.xlane.f32.xlu0 %v2469
      %v2471 = vpop.xlane.xlu0 %2470
      %vm2472 = vcmask 131072
      %v2473 = vsel %vm2472, %v2280, -inf
      %2474 = vmax.xlane.f32.xlu0 %v2473
      %v2475 = vpop.xlane.xlu0 %2474
      %v2476 = vsel %vm2465, %v2332, -inf
      %2477 = vmax.xlane.f32.xlu0 %v2476
      %v2478 = vpop.xlane.xlu0 %2477
      %v2479 = vsel %vm2465, %v2335, -inf
      %2480 = vmax.xlane.f32.xlu0 %v2479
      %v2481 = vpop.xlane.xlu0 %2480
      %v2482 = vsel %vm2472, %v2340, -inf
      %2483 = vmax.xlane.f32.xlu0 %v2482
      %v2484 = vpop.xlane.xlu0 %2483
      %v2485 = vsel %vm2465, %v2392, -inf
      %2486 = vmax.xlane.f32.xlu0 %v2485
      %v2487 = vpop.xlane.xlu0 %2486
      %v2488 = vsel %vm2465, %v2395, -inf
      %2489 = vmax.xlane.f32.xlu0 %v2488
      %v2490 = vpop.xlane.xlu0 %2489
      %v2491 = vsel %vm2472, %v2400, -inf
      %2492 = vmax.xlane.f32.xlu0 %v2491
      %v2493 = vpop.xlane.xlu0 %2492
      %v2494 = vsel %vm2465, %v2452, -inf
      %2495 = vmax.xlane.f32.xlu0 %v2494
      %v2496 = vpop.xlane.xlu0 %2495
      %v2497 = vsel %vm2465, %v2455, -inf
      %2498 = vmax.xlane.f32.xlu0 %v2497
      %v2499 = vpop.xlane.xlu0 %2498
      %v2500 = vsel %vm2472, %v2460, -inf
      %2501 = vmax.xlane.f32.xlu0 %v2500
      %v2502 = vpop.xlane.xlu0 %2501
      %v2503 = vsub.f32 %v2272, %v2468
      %v2504 = vsub.f32 %v2275, %v2471
      %v2505 = vsub.f32 %v2280, %v2475
      %v2506 = vsub.f32 %v2332, %v2478
      %v2507 = vsub.f32 %v2335, %v2481
      %v2508 = vsub.f32 %v2340, %v2484
      %v2509 = vsub.f32 %v2392, %v2487
      %v2510 = vsub.f32 %v2395, %v2490
      %v2511 = vsub.f32 %v2400, %v2493
      %v2512 = vsub.f32 %v2452, %v2496
      %v2513 = vsub.f32 %v2455, %v2499
      %v2514 = vsub.f32 %v2460, %v2502
      %v2515 = vmul.f32 %v2503, 1.442695
      %v2516 = vpow.pop %v2515
      %v2517 = vmul.f32 %v2504, 1.442695
      %v2518 = vpow.pop %v2517
      %v2519 = vmul.f32 %v2505, 1.442695
      %v2520 = vpow.pop %v2519
      %v2521 = vmul.f32 %v2506, 1.442695
      %v2522 = vpow.pop %v2521
      %v2523 = vmul.f32 %v2507, 1.442695
      %v2524 = vpow.pop %v2523
      %v2525 = vmul.f32 %v2508, 1.442695
      %v2526 = vpow.pop %v2525
      %v2527 = vmul.f32 %v2509, 1.442695
      %v2528 = vpow.pop %v2527
      %v2529 = vmul.f32 %v2510, 1.442695
      %v2530 = vpow.pop %v2529
      %v2531 = vmul.f32 %v2511, 1.442695
      %v2532 = vpow.pop %v2531
      %v2533 = vmul.f32 %v2512, 1.442695
      %v2534 = vpow.pop %v2533
      %v2535 = vmul.f32 %v2513, 1.442695
      %v2536 = vpow.pop %v2535
      %v2537 = vmul.f32 %v2514, 1.442695
      %v2538 = vpow.pop %v2537
      %v2539 = vsel %vm2465, %v2516, 0.0
      %2540 = vadd.xlane.f32.xlu0 %v2539
      %v2541 = vpop.xlane.xlu0 %2540
      %v2542 = vsel %vm2465, %v2518, 0.0
      %2543 = vadd.xlane.f32.xlu0 %v2542
      %v2544 = vpop.xlane.xlu0 %2543
      %v2545 = vsel %vm2472, %v2520, 0.0
      %2546 = vadd.xlane.f32.xlu0 %v2545
      %v2547 = vpop.xlane.xlu0 %2546
      %v2548 = vsel %vm2465, %v2522, 0.0
      %2549 = vadd.xlane.f32.xlu0 %v2548
      %v2550 = vpop.xlane.xlu0 %2549
      %v2551 = vsel %vm2465, %v2524, 0.0
      %2552 = vadd.xlane.f32.xlu0 %v2551
      %v2553 = vpop.xlane.xlu0 %2552
      %v2554 = vsel %vm2472, %v2526, 0.0
      %2555 = vadd.xlane.f32.xlu0 %v2554
      %v2556 = vpop.xlane.xlu0 %2555
      %v2557 = vsel %vm2465, %v2528, 0.0
      %2558 = vadd.xlane.f32.xlu0 %v2557
      %v2559 = vpop.xlane.xlu0 %2558
      %v2560 = vsel %vm2465, %v2530, 0.0
      %2561 = vadd.xlane.f32.xlu0 %v2560
      %v2562 = vpop.xlane.xlu0 %2561
      %v2563 = vsel %vm2472, %v2532, 0.0
      %2564 = vadd.xlane.f32.xlu0 %v2563
      %v2565 = vpop.xlane.xlu0 %2564
      %v2566 = vsel %vm2465, %v2534, 0.0
      %2567 = vadd.xlane.f32.xlu0 %v2566
      %v2568 = vpop.xlane.xlu0 %2567
      %v2569 = vsel %vm2465, %v2536, 0.0
      %2570 = vadd.xlane.f32.xlu0 %v2569
      %v2571 = vpop.xlane.xlu0 %2570
      %v2572 = vsel %vm2472, %v2538, 0.0
      %2573 = vadd.xlane.f32.xlu0 %v2572
      %v2574 = vpop.xlane.xlu0 %2573
      %v2575 = vrcp.pop %v2541
      %v2576 = vrcp.pop %v2544
      %v2577 = vrcp.pop %v2547
      %v2578 = vrcp.pop %v2550
      %v2579 = vrcp.pop %v2553
      %v2580 = vrcp.pop %v2556
      %v2581 = vrcp.pop %v2559
      %v2582 = vrcp.pop %v2562
      %v2583 = vrcp.pop %v2565
      %v2584 = vrcp.pop %v2568
      %v2585 = vrcp.pop %v2571
      %v2586 = vrcp.pop %v2574
      %v2587 = vmul.f32 %v2516, %v2575
      %v2588 = vmul.f32 %v2518, %v2576
      %v2589 = vmul.f32 %v2520, %v2577
      %v2590 = vmul.f32 %v2522, %v2578
      %v2591 = vmul.f32 %v2524, %v2579
      %v2592 = vmul.f32 %v2526, %v2580
      %v2593 = vmul.f32 %v2528, %v2581
      %v2594 = vmul.f32 %v2530, %v2582
      %v2595 = vmul.f32 %v2532, %v2583
      %v2596 = vmul.f32 %v2534, %v2584
      %v2597 = vmul.f32 %v2536, %v2585
      %v2598 = vmul.f32 %v2538, %v2586
      %v2599 = vpack.c.bf16 %v2588, %v2587
      %v2600 = vpack.c.bf16 %v2589, %v2589
      %v2601 = vpack.c.bf16 %v2591, %v2590
      %v2602 = vpack.c.bf16 %v2592, %v2592
      %v2603 = vpack.c.bf16 %v2594, %v2593
      %v2604 = vpack.c.bf16 %v2595, %v2595
      %v2605 = vpack.c.bf16 %v2597, %v2596
      %v2606 = vpack.c.bf16 %v2598, %v2598
      %v2608 = vsel %vm2465, %v2599, 0
      %v2611 = vsel %vm2465, %v2600, 0
      %vm2613 = vcmask 1040384
      %v2614 = vsel 0, 4294967295, 65535
      %v2615 = vsel %vm2613, %v2614, 0
      %v2617 = vand.u32 %v2217, %v2615
      %2619 = vmatprep.subr.bf16.mxu0 0
      %2620 = vmatpush1.bf16.msra.mxu0 %v2202
      %2621 = vmatprep.subr.bf16.mxu0 0
      %2622 = vmatpush1.bf16.msra.mxu0 %v2617
      %2623 = vmatprep.subr.bf16.mxu0 0
      %2624 = vmatpush1.bf16.msra.mxu0 0
      %2625 = vmatprep.subr.bf16.mxu0 0
      %2626 = vmatpush1.bf16.msra.mxu0 0
      %2627 = vmatprep.subr.bf16.mxu0 0
      %2628 = vmatpush1.bf16.msra.mxu0 0
      %2629 = vmatprep.subr.bf16.mxu0 0
      %2630 = vmatpush1.bf16.msra.mxu0 0
      %2631 = vmatprep.subr.bf16.mxu0 0
      %2632 = vmatpush1.bf16.msra.mxu0 0
      %2633 = vmatprep.subr.bf16.mxu0 0
      %2634 = vmatpush1.bf16.msra.mxu0 0
      %2635 = vmatprep.subr.bf16.mxu0 0
      %2636 = vmatpush1.bf16.msra.mxu0 0
      %2637 = vmatprep.subr.bf16.mxu0 0
      %2638 = vmatpush1.bf16.msra.mxu0 0
      %2639 = vmatprep.subr.bf16.mxu0 0
      %2640 = vmatpush1.bf16.msra.mxu0 0
      %2641 = vmatprep.subr.bf16.mxu0 0
      %2642 = vmatpush1.bf16.msra.mxu0 0
      %2643 = vmatprep.subr.bf16.mxu0 0
      %2644 = vmatpush1.bf16.msra.mxu0 0
      %2645 = vmatprep.subr.bf16.mxu0 0
      %2646 = vmatpush1.bf16.msra.mxu0 0
      %2647 = vmatprep.subr.bf16.mxu0 0
      %2648 = vmatpush1.bf16.msra.mxu0 0
      %2649 = vmatprep.subr.bf16.mxu0 0
      %2650 = vmatpush1.bf16.msra.mxu0 0
      %2651 = vmatprep.mubr.bf16.mxu0 0
      %2652 = vmatmul.mubr.bf16.gmra.mrb[0].mxu0 %v2608
      %v2653 = vpop.f32.mrb[0].mxu0
      %v2654 = vadd.f32 0.0, %v2653
      %v2655 = vpop.f32.mrb[0].mxu0
      %v2656 = vpop.f32.mrb[0].mxu0
      %v2657 = vadd.f32 0.0, %v2656
      %v2658 = vpop.f32.mrb[0].mxu0
      %2659 = vmatprep.mubr.bf16.mxu0 0
      %2660 = vmatmul.mubr.bf16.gmra.mrb[0].mxu0 %v2611
      %v2661 = vpop.f32.mrb[0].mxu0
      %v2662 = vadd.f32 0.0, %v2661
      %v2663 = vpop.f32.mrb[0].mxu0
      %v2664 = vpop.f32.mrb[0].mxu0
      %v2665 = vpop.f32.mrb[0].mxu0
      %2666 = vdwg.mxu0
      %v2668 = vsel %vm2465, %v2601, 0
      %v2671 = vsel %vm2465, %v2602, 0
      %v2674 = vand.u32 %v2219, %v2615
      %2676 = vmatprep.subr.bf16.mxu0 0
      %2677 = vmatpush1.bf16.msra.mxu0 %v2206
      %2678 = vmatprep.subr.bf16.mxu0 0
      %2679 = vmatpush1.bf16.msra.mxu0 %v2674
      %2680 = vmatprep.subr.bf16.mxu0 0
      %2681 = vmatpush1.bf16.msra.mxu0 0
      %2682 = vmatprep.subr.bf16.mxu0 0
      %2683 = vmatpush1.bf16.msra.mxu0 0
      %2684 = vmatprep.subr.bf16.mxu0 0
      %2685 = vmatpush1.bf16.msra.mxu0 0
      %2686 = vmatprep.subr.bf16.mxu0 0
      %2687 = vmatpush1.bf16.msra.mxu0 0
      %2688 = vmatprep.subr.bf16.mxu0 0
      %2689 = vmatpush1.bf16.msra.mxu0 0
      %2690 = vmatprep.subr.bf16.mxu0 0
      %2691 = vmatpush1.bf16.msra.mxu0 0
      %2692 = vmatprep.subr.bf16.mxu0 0
      %2693 = vmatpush1.bf16.msra.mxu0 0
      %2694 = vmatprep.subr.bf16.mxu0 0
      %2695 = vmatpush1.bf16.msra.mxu0 0
      %2696 = vmatprep.subr.bf16.mxu0 0
      %2697 = vmatpush1.bf16.msra.mxu0 0
      %2698 = vmatprep.subr.bf16.mxu0 0
      %2699 = vmatpush1.bf16.msra.mxu0 0
      %2700 = vmatprep.subr.bf16.mxu0 0
      %2701 = vmatpush1.bf16.msra.mxu0 0
      %2702 = vmatprep.subr.bf16.mxu0 0
      %2703 = vmatpush1.bf16.msra.mxu0 0
      %2704 = vmatprep.subr.bf16.mxu0 0
      %2705 = vmatpush1.bf16.msra.mxu0 0
      %2706 = vmatprep.subr.bf16.mxu0 0
      %2707 = vmatpush1.bf16.msra.mxu0 0
      %2708 = vmatprep.mubr.bf16.mxu0 0
      %2709 = vmatmul.mubr.bf16.gmra.mrb[0].mxu0 %v2668
      %v2710 = vpop.f32.mrb[0].mxu0
      %v2711 = vadd.f32 0.0, %v2710
      %v2712 = vpop.f32.mrb[0].mxu0
      %v2713 = vpop.f32.mrb[0].mxu0
      %v2714 = vadd.f32 0.0, %v2713
      %v2715 = vpop.f32.mrb[0].mxu0
      %2716 = vmatprep.mubr.bf16.mxu0 0
      %2717 = vmatmul.mubr.bf16.gmra.mrb[0].mxu0 %v2671
      %v2718 = vpop.f32.mrb[0].mxu0
      %v2719 = vadd.f32 0.0, %v2718
      %v2720 = vpop.f32.mrb[0].mxu0
      %v2721 = vpop.f32.mrb[0].mxu0
      %v2722 = vpop.f32.mrb[0].mxu0
      %2723 = vdwg.mxu0
      %v2725 = vsel %vm2465, %v2603, 0
      %v2728 = vsel %vm2465, %v2604, 0
      %v2731 = vand.u32 %v2221, %v2615
      %2733 = vmatprep.subr.bf16.mxu0 0
      %2734 = vmatpush1.bf16.msra.mxu0 %v2210
      %2735 = vmatprep.subr.bf16.mxu0 0
      %2736 = vmatpush1.bf16.msra.mxu0 %v2731
      %2737 = vmatprep.subr.bf16.mxu0 0
      %2738 = vmatpush1.bf16.msra.mxu0 0
      %2739 = vmatprep.subr.bf16.mxu0 0
      %2740 = vmatpush1.bf16.msra.mxu0 0
      %2741 = vmatprep.subr.bf16.mxu0 0
      %2742 = vmatpush1.bf16.msra.mxu0 0
      %2743 = vmatprep.subr.bf16.mxu0 0
      %2744 = vmatpush1.bf16.msra.mxu0 0
      %2745 = vmatprep.subr.bf16.mxu0 0
      %2746 = vmatpush1.bf16.msra.mxu0 0
      %2747 = vmatprep.subr.bf16.mxu0 0
      %2748 = vmatpush1.bf16.msra.mxu0 0
      %2749 = vmatprep.subr.bf16.mxu0 0
      %2750 = vmatpush1.bf16.msra.mxu0 0
      %2751 = vmatprep.subr.bf16.mxu0 0
      %2752 = vmatpush1.bf16.msra.mxu0 0
      %2753 = vmatprep.subr.bf16.mxu0 0
      %2754 = vmatpush1.bf16.msra.mxu0 0
      %2755 = vmatprep.subr.bf16.mxu0 0
      %2756 = vmatpush1.bf16.msra.mxu0 0
      %2757 = vmatprep.subr.bf16.mxu0 0
      %2758 = vmatpush1.bf16.msra.mxu0 0
      %2759 = vmatprep.subr.bf16.mxu0 0
      %2760 = vmatpush1.bf16.msra.mxu0 0
      %2761 = vmatprep.subr.bf16.mxu0 0
      %2762 = vmatpush1.bf16.msra.mxu0 0
      %2763 = vmatprep.subr.bf16.mxu0 0
      %2764 = vmatpush1.bf16.msra.mxu0 0
      %2765 = vmatprep.mubr.bf16.mxu0 0
      %2766 = vmatmul.mubr.bf16.gmra.mrb[0].mxu0 %v2725
      %v2767 = vpop.f32.mrb[0].mxu0
      %v2768 = vadd.f32 0.0, %v2767
      %v2769 = vpop.f32.mrb[0].mxu0
      %v2770 = vpop.f32.mrb[0].mxu0
      %v2771 = vadd.f32 0.0, %v2770
      %v2772 = vpop.f32.mrb[0].mxu0
      %2773 = vmatprep.mubr.bf16.mxu0 0
      %2774 = vmatmul.mubr.bf16.gmra.mrb[0].mxu0 %v2728
      %v2775 = vpop.f32.mrb[0].mxu0
      %v2776 = vadd.f32 0.0, %v2775
      %v2777 = vpop.f32.mrb[0].mxu0
      %v2778 = vpop.f32.mrb[0].mxu0
      %v2779 = vpop.f32.mrb[0].mxu0
      %2780 = vdwg.mxu0
      %v2782 = vsel %vm2465, %v2605, 0
      %v2785 = vsel %vm2465, %v2606, 0
      %v2788 = vand.u32 %v2223, %v2615
      %2790 = vmatprep.subr.bf16.mxu0 0
      %2791 = vmatpush1.bf16.msra.mxu0 %v2214
      %2792 = vmatprep.subr.bf16.mxu0 0
      %2793 = vmatpush1.bf16.msra.mxu0 %v2788
      %2794 = vmatprep.subr.bf16.mxu0 0
      %2795 = vmatpush1.bf16.msra.mxu0 0
      %2796 = vmatprep.subr.bf16.mxu0 0
      %2797 = vmatpush1.bf16.msra.mxu0 0
      %2798 = vmatprep.subr.bf16.mxu0 0
      %2799 = vmatpush1.bf16.msra.mxu0 0
      %2800 = vmatprep.subr.bf16.mxu0 0
      %2801 = vmatpush1.bf16.msra.mxu0 0
      %2802 = vmatprep.subr.bf16.mxu0 0
      %2803 = vmatpush1.bf16.msra.mxu0 0
      %2804 = vmatprep.subr.bf16.mxu0 0
      %2805 = vmatpush1.bf16.msra.mxu0 0
      %2806 = vmatprep.subr.bf16.mxu0 0
      %2807 = vmatpush1.bf16.msra.mxu0 0
      %2808 = vmatprep.subr.bf16.mxu0 0
      %2809 = vmatpush1.bf16.msra.mxu0 0
      %2810 = vmatprep.subr.bf16.mxu0 0
      %2811 = vmatpush1.bf16.msra.mxu0 0
      %2812 = vmatprep.subr.bf16.mxu0 0
      %2813 = vmatpush1.bf16.msra.mxu0 0
      %2814 = vmatprep.subr.bf16.mxu0 0
      %2815 = vmatpush1.bf16.msra.mxu0 0
      %2816 = vmatprep.subr.bf16.mxu0 0
      %2817 = vmatpush1.bf16.msra.mxu0 0
      %2818 = vmatprep.subr.bf16.mxu0 0
      %2819 = vmatpush1.bf16.msra.mxu0 0
      %2820 = vmatprep.subr.bf16.mxu0 0
      %2821 = vmatpush1.bf16.msra.mxu0 0
      %2822 = vmatprep.mubr.bf16.mxu0 0
      %2823 = vmatmul.mubr.bf16.gmra.mrb[0].mxu0 %v2782
      %v2824 = vpop.f32.mrb[0].mxu0
      %v2825 = vadd.f32 0.0, %v2824
      %v2826 = vpop.f32.mrb[0].mxu0
      %v2827 = vpop.f32.mrb[0].mxu0
      %v2828 = vadd.f32 0.0, %v2827
      %v2829 = vpop.f32.mrb[0].mxu0
      %2830 = vmatprep.mubr.bf16.mxu0 0
      %2831 = vmatmul.mubr.bf16.gmra.mrb[0].mxu0 %v2785
      %v2832 = vpop.f32.mrb[0].mxu0
      %v2833 = vadd.f32 0.0, %v2832
      %v2834 = vpop.f32.mrb[0].mxu0
      %v2835 = vpop.f32.mrb[0].mxu0
      %v2836 = vpop.f32.mrb[0].mxu0
      %2837 = vdwg.mxu0
      %v2838 = vpack.c.bf16 %v2657, %v2654
      %v2839 = vpack.c.bf16 %v2714, %v2711
      %v2840 = vpack.c.bf16 %v2771, %v2768
      %v2841 = vpack.c.bf16 %v2828, %v2825
      %v2842 = vcombine.high %v2838, 0
      %v2844 = vunpack.c.l.s4 1983009808
      %v2845 = vunpack.c.0.s8 %v2844
      %v2846 = vlaneseq
      %v2847 = vshrl.u32 %v2846, 7
      %v2848 = vsub.s32 %v2845, %v2847
      %v2849 = vrot.slane %v2838, %v2848
      %v2851 = vunpack.c.l.s4 1983009808
      %v2852 = vunpack.c.0.s8 %v2851
      %v2853 = vlaneseq
      %v2854 = vshrl.u32 %v2853, 7
      %v2855 = vsub.s32 %v2852, %v2854
      %v2856 = vrot.slane %v2842, %v2855
      %v2857 = vcombine.high %v2840, 0
      %v2859 = vunpack.c.l.s4 1983009808
      %v2860 = vunpack.c.0.s8 %v2859
      %v2861 = vlaneseq
      %v2862 = vshrl.u32 %v2861, 7
      %v2863 = vsub.s32 %v2860, %v2862
      %v2864 = vrot.slane %v2840, %v2863
      %v2866 = vunpack.c.l.s4 1983009808
      %v2867 = vunpack.c.0.s8 %v2866
      %v2868 = vlaneseq
      %v2869 = vshrl.u32 %v2868, 7
      %v2870 = vsub.s32 %v2867, %v2869
      %v2871 = vrot.slane %v2857, %v2870
      %v2872 = vcombine.low %v2849, %v2864
      %v2873 = vcombine.high %v2849, %v2864
      %v2875 = vunpack.c.l.s4 1934713408
      %v2876 = vunpack.c.0.s8 %v2875
      %v2877 = vlaneseq
      %v2878 = vshrl.u32 %v2877, 7
      %v2879 = vsub.s32 %v2876, %v2878
      %v2880 = vrot.slane %v2872, %v2879
      %v2882 = vunpack.c.l.s4 1934713408
      %v2883 = vunpack.c.0.s8 %v2882
      %v2884 = vlaneseq
      %v2885 = vshrl.u32 %v2884, 7
      %v2886 = vsub.s32 %v2883, %v2885
      %v2887 = vrot.slane %v2873, %v2886
      %v2888 = vcombine.low %v2856, %v2871
      %v2889 = vcombine.high %v2856, %v2871
      %v2891 = vunpack.c.l.s4 1934713408
      %v2892 = vunpack.c.0.s8 %v2891
      %v2893 = vlaneseq
      %v2894 = vshrl.u32 %v2893, 7
      %v2895 = vsub.s32 %v2892, %v2894
      %v2896 = vrot.slane %v2888, %v2895
      %v2898 = vunpack.c.l.s4 1934713408
      %v2899 = vunpack.c.0.s8 %v2898
      %v2900 = vlaneseq
      %v2901 = vshrl.u32 %v2900, 7
      %v2902 = vsub.s32 %v2899, %v2901
      %v2903 = vrot.slane %v2889, %v2902
      %v2904 = vcombine.high %v2880, 0
      %v2905 = vcombine.high %v2887, 0
      %v2906 = vcombine.high %v2896, 0
      %v2907 = vcombine.high %v2903, 0
      %v2908 = vcombine.high %v2839, 0
      %v2910 = vunpack.c.l.s4 1983009808
      %v2911 = vunpack.c.0.s8 %v2910
      %v2912 = vlaneseq
      %v2913 = vshrl.u32 %v2912, 7
      %v2914 = vsub.s32 %v2911, %v2913
      %v2915 = vrot.slane %v2839, %v2914
      %v2917 = vunpack.c.l.s4 1983009808
      %v2918 = vunpack.c.0.s8 %v2917
      %v2919 = vlaneseq
      %v2920 = vshrl.u32 %v2919, 7
      %v2921 = vsub.s32 %v2918, %v2920
      %v2922 = vrot.slane %v2908, %v2921
      %v2923 = vcombine.high %v2841, 0
      %v2925 = vunpack.c.l.s4 1983009808
      %v2926 = vunpack.c.0.s8 %v2925
      %v2927 = vlaneseq
      %v2928 = vshrl.u32 %v2927, 7
      %v2929 = vsub.s32 %v2926, %v2928
      %v2930 = vrot.slane %v2841, %v2929
      %v2932 = vunpack.c.l.s4 1983009808
      %v2933 = vunpack.c.0.s8 %v2932
      %v2934 = vlaneseq
      %v2935 = vshrl.u32 %v2934, 7
      %v2936 = vsub.s32 %v2933, %v2935
      %v2937 = vrot.slane %v2923, %v2936
      %v2938 = vcombine.low %v2915, %v2930
      %v2939 = vcombine.high %v2915, %v2930
      %v2941 = vunpack.c.l.s4 1934713408
      %v2942 = vunpack.c.0.s8 %v2941
      %v2943 = vlaneseq
      %v2944 = vshrl.u32 %v2943, 7
      %v2945 = vsub.s32 %v2942, %v2944
      %v2946 = vrot.slane %v2938, %v2945
      %v2948 = vunpack.c.l.s4 1934713408
      %v2949 = vunpack.c.0.s8 %v2948
      %v2950 = vlaneseq
      %v2951 = vshrl.u32 %v2950, 7
      %v2952 = vsub.s32 %v2949, %v2951
      %v2953 = vrot.slane %v2939, %v2952
      %v2954 = vcombine.low %v2922, %v2937
      %v2955 = vcombine.high %v2922, %v2937
      %v2957 = vunpack.c.l.s4 1934713408
      %v2958 = vunpack.c.0.s8 %v2957
      %v2959 = vlaneseq
      %v2960 = vshrl.u32 %v2959, 7
      %v2961 = vsub.s32 %v2958, %v2960
      %v2962 = vrot.slane %v2954, %v2961
      %v2964 = vunpack.c.l.s4 1934713408
      %v2965 = vunpack.c.0.s8 %v2964
      %v2966 = vlaneseq
      %v2967 = vshrl.u32 %v2966, 7
      %v2968 = vsub.s32 %v2965, %v2967
      %v2969 = vrot.slane %v2955, %v2968
      %v2970 = vcombine.high %v2946, 0
      %v2971 = vcombine.high %v2953, 0
      %v2972 = vcombine.high %v2962, 0
      %v2973 = vcombine.high %v2969, 0
      %v2974 = vpack.c.bf16 %v2662, %v2662
      %v2975 = vpack.c.bf16 %v2776, %v2776
      %v2976 = vcombine.low %v2974, %v2975
      %v2978 = vunpack.c.l.s4 1934713408
      %v2979 = vunpack.c.0.s8 %v2978
      %v2980 = vlaneseq
      %v2981 = vshrl.u32 %v2980, 7
      %v2982 = vsub.s32 %v2979, %v2981
      %v2983 = vrot.slane %v2976, %v2982
      %v2984 = vpack.c.bf16 %v2719, %v2719
      %v2985 = vpack.c.bf16 %v2833, %v2833
      %v2986 = vcombine.low %v2984, %v2985
      %v2988 = vunpack.c.l.s4 1934713408
      %v2989 = vunpack.c.0.s8 %v2988
      %v2990 = vlaneseq
      %v2991 = vshrl.u32 %v2990, 7
      %v2992 = vsub.s32 %v2989, %v2991
      %v2993 = vrot.slane %v2986, %v2992
      %v2996 = vpack.i.b16 %v2946, %v2880
      %v2998 = vshrl.u32 %v2880, 16
      %v2999 = vshrl.u32 %v2946, 16
      %v3000 = vpack.i.b16 %v2999, %v2998
      %v3004 = vpack.i.b16 %v2970, %v2904
      %v3006 = vshrl.u32 %v2904, 16
      %v3007 = vshrl.u32 %v2970, 16
      %v3008 = vpack.i.b16 %v3007, %v3006
      %v3012 = vpack.i.b16 %v2953, %v2887
      %v3014 = vshrl.u32 %v2887, 16
      %v3015 = vshrl.u32 %v2953, 16
      %v3016 = vpack.i.b16 %v3015, %v3014
      %v3020 = vpack.i.b16 %v2971, %v2905
      %v3022 = vshrl.u32 %v2905, 16
      %v3023 = vshrl.u32 %v2971, 16
      %v3024 = vpack.i.b16 %v3023, %v3022
      %v3028 = vpack.i.b16 %v2962, %v2896
      %v3030 = vshrl.u32 %v2896, 16
      %v3031 = vshrl.u32 %v2962, 16
      %v3032 = vpack.i.b16 %v3031, %v3030
      %v3036 = vpack.i.b16 %v2972, %v2906
      %v3038 = vshrl.u32 %v2906, 16
      %v3039 = vshrl.u32 %v2972, 16
      %v3040 = vpack.i.b16 %v3039, %v3038
      %v3044 = vpack.i.b16 %v2969, %v2903
      %v3046 = vshrl.u32 %v2903, 16
      %v3047 = vshrl.u32 %v2969, 16
      %v3048 = vpack.i.b16 %v3047, %v3046
      %v3052 = vpack.i.b16 %v2973, %v2907
      %v3054 = vshrl.u32 %v2907, 16
      %v3055 = vshrl.u32 %v2973, 16
      %v3056 = vpack.i.b16 %v3055, %v3054
      %v3060 = vpack.i.b16 %v2993, %v2983
      %v3061 = vcombine.low %v2996, %v3012
      %v3063 = vunpack.c.l.s4 1983009808
      %v3064 = vunpack.c.0.s8 %v3063
      %v3065 = vlaneseq
      %v3066 = vshrl.u32 %v3065, 7
      %v3067 = vsub.s32 %v3064, %v3066
      %v3068 = vrot.slane %v3061, %v3067
      %v3069 = vcombine.low %v3004, %v3020
      %v3071 = vunpack.c.l.s4 1983009808
      %v3072 = vunpack.c.0.s8 %v3071
      %v3073 = vlaneseq
      %v3074 = vshrl.u32 %v3073, 7
      %v3075 = vsub.s32 %v3072, %v3074
      %v3076 = vrot.slane %v3069, %v3075
      %v3077 = vcombine.low %v3028, %v3044
      %v3079 = vunpack.c.l.s4 1983009808
      %v3080 = vunpack.c.0.s8 %v3079
      %v3081 = vlaneseq
      %v3082 = vshrl.u32 %v3081, 7
      %v3083 = vsub.s32 %v3080, %v3082
      %v3084 = vrot.slane %v3077, %v3083
      %v3085 = vcombine.low %v3036, %v3052
      %v3087 = vunpack.c.l.s4 1983009808
      %v3088 = vunpack.c.0.s8 %v3087
      %v3089 = vlaneseq
      %v3090 = vshrl.u32 %v3089, 7
      %v3091 = vsub.s32 %v3088, %v3090
      %v3092 = vrot.slane %v3085, %v3091
      %v3093 = vcombine.low %v3068, %v3076
      %v3095 = vunpack.c.l.s4 1934713408
      %v3096 = vunpack.c.0.s8 %v3095
      %v3097 = vlaneseq
      %v3098 = vshrl.u32 %v3097, 7
      %v3099 = vsub.s32 %v3096, %v3098
      %v3100 = vrot.slane %v3093, %v3099
      %v3101 = vcombine.low %v3084, %v3092
      %v3103 = vunpack.c.l.s4 1934713408
      %v3104 = vunpack.c.0.s8 %v3103
      %v3105 = vlaneseq
      %v3106 = vshrl.u32 %v3105, 7
      %v3107 = vsub.s32 %v3104, %v3106
      %v3108 = vrot.slane %v3101, %v3107
      %v3109 = vcombine.low %v3100, %v3108
      %v3110 = vcombine.high %v3100, %v3108
      %v3111 = vcombine.low %v3000, %v3016
      %v3113 = vunpack.c.l.s4 1983009808
      %v3114 = vunpack.c.0.s8 %v3113
      %v3115 = vlaneseq
      %v3116 = vshrl.u32 %v3115, 7
      %v3117 = vsub.s32 %v3114, %v3116
      %v3118 = vrot.slane %v3111, %v3117
      %v3119 = vcombine.low %v3008, %v3024
      %v3121 = vunpack.c.l.s4 1983009808
      %v3122 = vunpack.c.0.s8 %v3121
      %v3123 = vlaneseq
      %v3124 = vshrl.u32 %v3123, 7
      %v3125 = vsub.s32 %v3122, %v3124
      %v3126 = vrot.slane %v3119, %v3125
      %v3127 = vcombine.low %v3032, %v3048
      %v3129 = vunpack.c.l.s4 1983009808
      %v3130 = vunpack.c.0.s8 %v3129
      %v3131 = vlaneseq
      %v3132 = vshrl.u32 %v3131, 7
      %v3133 = vsub.s32 %v3130, %v3132
      %v3134 = vrot.slane %v3127, %v3133
      %v3135 = vcombine.low %v3040, %v3056
      %v3137 = vunpack.c.l.s4 1983009808
      %v3138 = vunpack.c.0.s8 %v3137
      %v3139 = vlaneseq
      %v3140 = vshrl.u32 %v3139, 7
      %v3141 = vsub.s32 %v3138, %v3140
      %v3142 = vrot.slane %v3135, %v3141
      %v3143 = vcombine.low %v3118, %v3126
      %v3145 = vunpack.c.l.s4 1934713408
      %v3146 = vunpack.c.0.s8 %v3145
      %v3147 = vlaneseq
      %v3148 = vshrl.u32 %v3147, 7
      %v3149 = vsub.s32 %v3146, %v3148
      %v3150 = vrot.slane %v3143, %v3149
      %v3151 = vcombine.low %v3134, %v3142
      %v3153 = vunpack.c.l.s4 1934713408
      %v3154 = vunpack.c.0.s8 %v3153
      %v3155 = vlaneseq
      %v3156 = vshrl.u32 %v3155, 7
      %v3157 = vsub.s32 %v3154, %v3156
      %v3158 = vrot.slane %v3151, %v3157
      %v3159 = vcombine.low %v3150, %v3158
      %v3160 = vcombine.high %v3150, %v3158
      %v3163 = vunpack.c.l.s4 1934713408
      %v3164 = vunpack.c.0.s8 %v3163
      %v3165 = vlaneseq
      %v3166 = vshrl.u32 %v3165, 7
      %v3167 = vsub.s32 %v3164, %v3166
      %v3168 = vrot.slane %v3060, %v3167
      %v3169 = vcombine.high %v3168, 0
      %v3172 = vpack.i.b16 %v3159, %v3109
      %v3173 = vshrl.u32 %v3109, 16
      %v3174 = vshrl.u32 %v3159, 16
      %v3175 = vpack.i.b16 %v3174, %v3173
      %v3178 = vpack.i.b16 %v3160, %v3110
      %v3179 = vshrl.u32 %v3110, 16
      %v3180 = vshrl.u32 %v3160, 16
      %v3181 = vpack.i.b16 %v3180, %v3179
      %v3183 = vpack.i.b16 0, %v3168
      %v3184 = vshrl.u32 %v3168, 16
      %v3185 = vpack.i.b16 %v1482, %v3184
      %v3187 = vpack.i.b16 0, %v3169
      %v3188 = vshrl.u32 %v3169, 16
      %v3189 = vpack.i.b16 %v1482, %v3188
      %3190 = vrot.lane.b32.xlu0 %v3175, 8
      %v3191 = vpop.permute.xlu0 %3190
      %3192 = vrot.lane.b32.xlu0 %v3185, 8
      %v3193 = vpop.permute.xlu0 %3192
      %3194 = vrot.lane.b32.xlu0 %v3178, 16
      %v3195 = vpop.permute.xlu0 %3194
      %3196 = vrot.lane.b32.xlu0 %v3187, 16
      %v3197 = vpop.permute.xlu0 %3196
      %3198 = vrot.lane.b32.xlu0 %v3181, 24
      %v3199 = vpop.permute.xlu0 %3198
      %3200 = vrot.lane.b32.xlu0 %v3189, 24
      %v3201 = vpop.permute.xlu0 %3200
      %v3204 = vsel %vm2224, %v3172, %v3191
      %v3207 = vsel %vm2224, %v3183, %v3193
      %vm3208 = vcmask 130048
      %v3210 = vsel %vm3208, %v3204, %v3195
      %v3212 = vsel %vm3208, %v3207, %v3197
      %vm3213 = vcmask 195584
      %v3215 = vsel %vm3213, %v3210, %v3199
      %v3217 = vsel %vm3213, %v3212, %v3201
      %v3218 = vld [vmem:[%s790] sm:$0xf]
      %v3219 = vld [vmem:[%s790 + $0x4] sm:$0xf]
      %v3220 = vld [vmem:[%s790 + $0x8] sm:$0xf]
      %v3221 = vld [vmem:[%s790 + $0xc] sm:$0xf]
      %v3222 = vld [vmem:[%s793] sm:$0x1]
      %v3224 = vlaneseq
      %v3225 = vshrl.u32 %v3224, 7
      %v3226 = vsub.s32 0, %v3225
      %v3227 = vrot.slane %v3222, %v3226
      %v3233 = vunpack.c.l.b16 %v3218
      %v3234 = vunpack.c.l.b16 %v3219
      %v3235 = vunpack.c.l.b16 %v3220
      %v3236 = vunpack.c.l.b16 %v3221
      %v3237 = vpack.c.b16 %v3234, %v3233
      %v3238 = vpack.c.b16 %v3236, %v3235
      %v3241 = vsel %vm839, %v3215, 0
      %v3243 = vsel %vm839, %v3217, 0
      %3245 = vmatprep.subr.bf16.mxu0 0
      %3246 = vmatpush1.bf16.msra.mxu0 %v3237
      %3247 = vmatprep.subr.bf16.mxu0 0
      %3248 = vmatpush1.bf16.msra.mxu0 %v3238
      %3249 = vmatprep.subr.bf16.mxu0 0
      %3250 = vmatpush1.bf16.msra.mxu0 0
      %3251 = vmatprep.subr.bf16.mxu0 0
      %3252 = vmatpush1.bf16.msra.mxu0 0
      %3253 = vmatprep.subr.bf16.mxu0 0
      %3254 = vmatpush1.bf16.msra.mxu0 0
      %3255 = vmatprep.subr.bf16.mxu0 0
      %3256 = vmatpush1.bf16.msra.mxu0 0
      %3257 = vmatprep.subr.bf16.mxu0 0
      %3258 = vmatpush1.bf16.msra.mxu0 0
      %3259 = vmatprep.subr.bf16.mxu0 0
      %3260 = vmatpush1.bf16.msra.mxu0 0
      %3261 = vmatprep.subr.bf16.mxu0 0
      %3262 = vmatpush1.bf16.msra.mxu0 0
      %3263 = vmatprep.subr.bf16.mxu0 0
      %3264 = vmatpush1.bf16.msra.mxu0 0
      %3265 = vmatprep.subr.bf16.mxu0 0
      %3266 = vmatpush1.bf16.msra.mxu0 0
      %3267 = vmatprep.subr.bf16.mxu0 0
      %3268 = vmatpush1.bf16.msra.mxu0 0
      %3269 = vmatprep.subr.bf16.mxu0 0
      %3270 = vmatpush1.bf16.msra.mxu0 0
      %3271 = vmatprep.subr.bf16.mxu0 0
      %3272 = vmatpush1.bf16.msra.mxu0 0
      %3273 = vmatprep.subr.bf16.mxu0 0
      %3274 = vmatpush1.bf16.msra.mxu0 0
      %3275 = vmatprep.subr.bf16.mxu0 0
      %3276 = vmatpush1.bf16.msra.mxu0 0
      %3277 = vmatprep.mubr.bf16.mxu0 0
      %3278 = vmatmul.mubr.bf16.gmra.mrb[0].mxu0 %v3241
      %v3279 = vpop.f32.mrb[0].mxu0
      %v3280 = vadd.f32 %v3227, %v3279
      %v3281 = vpop.f32.mrb[0].mxu0
      %v3282 = vpop.f32.mrb[0].mxu0
      %v3283 = vadd.f32 %v3227, %v3282
      %v3284 = vpop.f32.mrb[0].mxu0
      %3285 = vmatprep.mubr.bf16.mxu0 0
      %3286 = vmatmul.mubr.bf16.gmra.mrb[0].mxu0 %v3243
      %v3287 = vpop.f32.mrb[0].mxu0
      %v3288 = vadd.f32 %v3227, %v3287
      %v3289 = vpop.f32.mrb[0].mxu0
      %v3290 = vpop.f32.mrb[0].mxu0
      %v3291 = vpop.f32.mrb[0].mxu0
      %3292 = vdwg.mxu0
      %v3293 = vadd.f32 %v834, %v3280
      %v3294 = vadd.f32 %v835, %v3283
      %v3295 = vadd.f32 %v836, %v3288
      %v3296 = vld [vmem:[%s796] sm:$0x1]
      %v3297 = vld [vmem:[%s799] sm:$0x1]
      %v3298 = vsel %vm839, %v3293, 0.0
      %3299 = vadd.xlane.f32.xlu0 %v3298
      %v3300 = vpop.xlane.xlu0 %3299
      %v3301 = vsel %vm839, %v3294, 0.0
      %3302 = vadd.xlane.f32.xlu0 %v3301
      %v3303 = vpop.xlane.xlu0 %3302
      %v3304 = vsel %vm846, %v3295, 0.0
      %3305 = vadd.xlane.f32.xlu0 %v3304
      %v3306 = vpop.xlane.xlu0 %3305
      %v3307 = vmul.f32 %v3300, %v850
      %v3308 = vmul.f32 %v3303, %v850
      %v3309 = vmul.f32 %v3306, %v850
      %v3310 = vsub.f32 %v3293, %v3307
      %v3311 = vsub.f32 %v3294, %v3308
      %v3312 = vsub.f32 %v3295, %v3309
      %v3313 = vmul.f32 %v3310, %v3310
      %v3314 = vmul.f32 %v3311, %v3311
      %v3315 = vmul.f32 %v3312, %v3312
      %v3316 = vsel %vm839, %v3313, 0.0
      %3317 = vadd.xlane.f32.xlu0 %v3316
      %v3318 = vpop.xlane.xlu0 %3317
      %v3319 = vsel %vm839, %v3314, 0.0
      %3320 = vadd.xlane.f32.xlu0 %v3319
      %v3321 = vpop.xlane.xlu0 %3320
      %v3322 = vsel %vm846, %v3315, 0.0
      %3323 = vadd.xlane.f32.xlu0 %v3322
      %v3324 = vpop.xlane.xlu0 %3323
      %v3325 = vmul.f32 %v3318, %v850
      %v3326 = vmul.f32 %v3321, %v850
      %v3327 = vmul.f32 %v3324, %v850
      %v3328 = vadd.f32 %v3325, 1e-05
      %v3329 = vadd.f32 %v3326, 1e-05
      %v3330 = vadd.f32 %v3327, 1e-05
      %v3331 = vrsqrt.pop %v3328
      %v3332 = vrsqrt.pop %v3329
      %v3333 = vrsqrt.pop %v3330
      %v3334 = vmul.f32 %v3310, %v3331
      %v3335 = vmul.f32 %v3311, %v3332
      %v3336 = vmul.f32 %v3312, %v3333
      %v3338 = vlaneseq
      %v3339 = vshrl.u32 %v3338, 7
      %v3340 = vsub.s32 0, %v3339
      %v3341 = vrot.slane %v3296, %v3340
      %v3343 = vmul.f32 %v3334, %v3341
      %v3344 = vmul.f32 %v3335, %v3341
      %v3345 = vmul.f32 %v3336, %v3341
      %v3347 = vlaneseq
      %v3348 = vshrl.u32 %v3347, 7
      %v3349 = vsub.s32 0, %v3348
      %v3350 = vrot.slane %v3297, %v3349
      %v3352 = vadd.f32 %v3343, %v3350
      %v3353 = vadd.f32 %v3344, %v3350
      %v3354 = vadd.f32 %v3345, %v3350
      %v3355 = vpack.c.bf16 %v3353, %v3352
      %v3356 = vpack.c.bf16 %v3354, %v3354
      %v3357 = vld [vmem:[%s804] sm:$0xf]
      %v3358 = vld [vmem:[%s804 + $0x4] sm:$0xf]
      %v3359 = vld [vmem:[%s804 + $0x8] sm:$0xf]
      %v3360 = vld [vmem:[%s804 + $0xc] sm:$0xf]
      %v3361 = vld [vmem:[%s807] sm:$0x1]
      %v3363 = vlaneseq
      %v3364 = vshrl.u32 %v3363, 7
      %v3365 = vsub.s32 0, %v3364
      %v3366 = vrot.slane %v3361, %v3365
      %v3372 = vunpack.c.l.b16 %v3357
      %v3373 = vunpack.c.l.b16 %v3358
      %v3374 = vunpack.c.l.b16 %v3359
      %v3375 = vunpack.c.l.b16 %v3360
      %v3376 = vpack.c.b16 %v3373, %v3372
      %v3377 = vpack.c.b16 %v3375, %v3374
      %v3381 = vsel %vm839, %v3355, 0
      %v3384 = vsel %vm839, %v3356, 0
      %3386 = vmatprep.subr.bf16.mxu0 0
      %3387 = vmatpush1.bf16.msra.mxu0 %v3376
      %3388 = vmatprep.subr.bf16.mxu0 0
      %3389 = vmatpush1.bf16.msra.mxu0 %v3377
      %3390 = vmatprep.subr.bf16.mxu0 0
      %3391 = vmatpush1.bf16.msra.mxu0 0
      %3392 = vmatprep.subr.bf16.mxu0 0
      %3393 = vmatpush1.bf16.msra.mxu0 0
      %3394 = vmatprep.subr.bf16.mxu0 0
      %3395 = vmatpush1.bf16.msra.mxu0 0
      %3396 = vmatprep.subr.bf16.mxu0 0
      %3397 = vmatpush1.bf16.msra.mxu0 0
      %3398 = vmatprep.subr.bf16.mxu0 0
      %3399 = vmatpush1.bf16.msra.mxu0 0
      %3400 = vmatprep.subr.bf16.mxu0 0
      %3401 = vmatpush1.bf16.msra.mxu0 0
      %3402 = vmatprep.subr.bf16.mxu0 0
      %3403 = vmatpush1.bf16.msra.mxu0 0
      %3404 = vmatprep.subr.bf16.mxu0 0
      %3405 = vmatpush1.bf16.msra.mxu0 0
      %3406 = vmatprep.subr.bf16.mxu0 0
      %3407 = vmatpush1.bf16.msra.mxu0 0
      %3408 = vmatprep.subr.bf16.mxu0 0
      %3409 = vmatpush1.bf16.msra.mxu0 0
      %3410 = vmatprep.subr.bf16.mxu0 0
      %3411 = vmatpush1.bf16.msra.mxu0 0
      %3412 = vmatprep.subr.bf16.mxu0 0
      %3413 = vmatpush1.bf16.msra.mxu0 0
      %3414 = vmatprep.subr.bf16.mxu0 0
      %3415 = vmatpush1.bf16.msra.mxu0 0
      %3416 = vmatprep.subr.bf16.mxu0 0
      %3417 = vmatpush1.bf16.msra.mxu0 0
      %3418 = vmatprep.mubr.bf16.mxu0 0
      %3419 = vmatmul.mubr.bf16.gmra.mrb[0].mxu0 %v3381
      %v3420 = vpop.f32.mrb[0].mxu0
      %v3421 = vadd.f32 %v3366, %v3420
      %v3422 = vpop.f32.mrb[0].mxu0
      %v3423 = vpop.f32.mrb[0].mxu0
      %v3424 = vadd.f32 %v3366, %v3423
      %v3425 = vpop.f32.mrb[0].mxu0
      %3426 = vmatprep.mubr.bf16.mxu0 0
      %3427 = vmatmul.mubr.bf16.gmra.mrb[0].mxu0 %v3384
      %v3428 = vpop.f32.mrb[0].mxu0
      %v3429 = vadd.f32 %v3366, %v3428
      %v3430 = vpop.f32.mrb[0].mxu0
      %v3431 = vpop.f32.mrb[0].mxu0
      %v3432 = vpop.f32.mrb[0].mxu0
      %3433 = vdwg.mxu0
      %v3434 = vmul.f32 %v3421, %v3421
      %v3435 = vmul.f32 %v3424, %v3424
      %v3436 = vmul.f32 %v3429, %v3429
      %v3437 = vmul.f32 %v3421, %v3434
      %v3438 = vmul.f32 %v3424, %v3435
      %v3439 = vmul.f32 %v3429, %v3436
      %v3440 = vmul.f32 %v3437, 0.044715
      %v3441 = vmul.f32 %v3438, 0.044715
      %v3442 = vmul.f32 %v3439, 0.044715
      %v3443 = vadd.f32 %v3421, %v3440
      %v3444 = vadd.f32 %v3424, %v3441
      %v3445 = vadd.f32 %v3429, %v3442
      %v3446 = vmul.f32 %v3443, 0.7978846
      %v3447 = vmul.f32 %v3444, 0.7978846
      %v3448 = vmul.f32 %v3445, 0.7978846
      %v3449 = vtanh.pop %v3446
      %v3450 = vtanh.pop %v3447
      %v3451 = vtanh.pop %v3448
      %v3452 = vadd.f32 %v3449, 1.0
      %v3453 = vadd.f32 %v3450, 1.0
      %v3454 = vadd.f32 %v3451, 1.0
      %v3455 = vmul.f32 %v3452, 0.5
      %v3456 = vmul.f32 %v3453, 0.5
      %v3457 = vmul.f32 %v3454, 0.5
      %v3458 = vmul.f32 %v3421, %v3455
      %v3459 = vmul.f32 %v3424, %v3456
      %v3460 = vmul.f32 %v3429, %v3457
      %v3461 = vpack.c.bf16 %v3459, %v3458
      %v3462 = vpack.c.bf16 %v3460, %v3460
      %v3463 = vld [vmem:[%s812] sm:$0xf]
      %v3464 = vld [vmem:[%s812 + $0x4] sm:$0xf]
      %v3465 = vld [vmem:[%s812 + $0x8] sm:$0xf]
      %v3466 = vld [vmem:[%s812 + $0xc] sm:$0xf]
      %v3467 = vld [vmem:[%s812 + $0x10] sm:$0xf]
      %v3468 = vld [vmem:[%s812 + $0x14] sm:$0xf]
      %v3469 = vld [vmem:[%s812 + $0x18] sm:$0xf]
      %v3470 = vld [vmem:[%s812 + $0x1c] sm:$0xf]
      %v3471 = vld [vmem:[%s815] sm:$0x1]
      %v3473 = vlaneseq
      %v3474 = vshrl.u32 %v3473, 7
      %v3475 = vsub.s32 0, %v3474
      %v3476 = vrot.slane %v3471, %v3475
      %v3486 = vunpack.c.l.b16 %v3463
      %v3487 = vunpack.c.l.b16 %v3464
      %v3488 = vunpack.c.l.b16 %v3465
      %v3489 = vunpack.c.l.b16 %v3466
      %v3490 = vunpack.c.l.b16 %v3467
      %v3491 = vunpack.c.l.b16 %v3468
      %v3492 = vunpack.c.l.b16 %v3469
      %v3493 = vunpack.c.l.b16 %v3470
      %v3494 = vpack.c.b16 %v3487, %v3486
      %v3495 = vpack.c.b16 %v3489, %v3488
      %v3496 = vpack.c.b16 %v3491, %v3490
      %v3497 = vpack.c.b16 %v3493, %v3492
      %vm3502 = vcmask 523264
      %v3504 = vsel %vm3502, %v3461, 0
      %v3507 = vsel %vm3502, %v3462, 0
      %3509 = vmatprep.subr.bf16.mxu0 0
      %3510 = vmatpush1.bf16.msra.mxu0 %v3494
      %3511 = vmatprep.subr.bf16.mxu0 0
      %3512 = vmatpush1.bf16.msra.mxu0 %v3495
      %3513 = vmatprep.subr.bf16.mxu0 0
      %3514 = vmatpush1.bf16.msra.mxu0 %v3496
      %3515 = vmatprep.subr.bf16.mxu0 0
      %3516 = vmatpush1.bf16.msra.mxu0 %v3497
      %3517 = vmatprep.subr.bf16.mxu0 0
      %3518 = vmatpush1.bf16.msra.mxu0 0
      %3519 = vmatprep.subr.bf16.mxu0 0
      %3520 = vmatpush1.bf16.msra.mxu0 0
      %3521 = vmatprep.subr.bf16.mxu0 0
      %3522 = vmatpush1.bf16.msra.mxu0 0
      %3523 = vmatprep.subr.bf16.mxu0 0
      %3524 = vmatpush1.bf16.msra.mxu0 0
      %3525 = vmatprep.subr.bf16.mxu0 0
      %3526 = vmatpush1.bf16.msra.mxu0 0
      %3527 = vmatprep.subr.bf16.mxu0 0
      %3528 = vmatpush1.bf16.msra.mxu0 0
      %3529 = vmatprep.subr.bf16.mxu0 0
      %3530 = vmatpush1.bf16.msra.mxu0 0
      %3531 = vmatprep.subr.bf16.mxu0 0
      %3532 = vmatpush1.bf16.msra.mxu0 0
      %3533 = vmatprep.subr.bf16.mxu0 0
      %3534 = vmatpush1.bf16.msra.mxu0 0
      %3535 = vmatprep.subr.bf16.mxu0 0
      %3536 = vmatpush1.bf16.msra.mxu0 0
      %3537 = vmatprep.subr.bf16.mxu0 0
      %3538 = vmatpush1.bf16.msra.mxu0 0
      %3539 = vmatprep.subr.bf16.mxu0 0
      %3540 = vmatpush1.bf16.msra.mxu0 0
      %3541 = vmatprep.mubr.bf16.mxu0 0
      %3542 = vmatmul.mubr.bf16.gmra.mrb[0].mxu0 %v3504
      %v3543 = vpop.f32.mrb[0].mxu0
      %v3544 = vadd.f32 %v3476, %v3543
      %v3545 = vpop.f32.mrb[0].mxu0
      %v3546 = vpop.f32.mrb[0].mxu0
      %v3547 = vadd.f32 %v3476, %v3546
      %v3548 = vpop.f32.mrb[0].mxu0
      %3549 = vmatprep.mubr.bf16.mxu0 0
      %3550 = vmatmul.mubr.bf16.gmra.mrb[0].mxu0 %v3507
      %v3551 = vpop.f32.mrb[0].mxu0
      %v3552 = vadd.f32 %v3476, %v3551
      %v3553 = vpop.f32.mrb[0].mxu0
      %v3554 = vpop.f32.mrb[0].mxu0
      %v3555 = vpop.f32.mrb[0].mxu0
      %3556 = vdwg.mxu0
      %v3557 = vadd.f32 %v3293, %v3544
      %v3558 = vadd.f32 %v3294, %v3547
      %v3559 = vadd.f32 %v3295, %v3552
      %3560 = vst.msk [vmem:[#allocation2] sm:$0xff] %vm839, %v3557
      %3561 = vst.msk [vmem:[#allocation2 + $0x8] sm:$0xff] %vm839, %v3558
      %3562 = vst.msk [vmem:[#allocation2 + $0x10] sm:$0x1] %vm846, %v3559
      %p3563 = scmp.eq.s32.totalorder %s33, 1
      // Predicated region
      $region93: #{rankvit_forward.4} parent=87 // pred_check
        %p3564 = pneg %p3563
      $region94: #{rankvit_forward.4} parent=87 // pred_check_branch
        %3566 = sbr.rel (%p3564) target = $region96
      $region95: #{rankvit_forward.4} parent=87 // pred_region
        %v3567 = vld [vmem:[#allocation2] sm:$0xff]
        %v3568 = vld [vmem:[#allocation2 + $0x8] sm:$0xff]
        %v3569 = vld [vmem:[#allocation2 + $0x10] sm:$0x1]
        %3570 = vst.msk [vmem:[%s820] sm:$0xff] %vm839, %v3567
        %3571 = vst.msk [vmem:[%s820 + $0x8] sm:$0xff] %vm839, %v3568
        %3572 = vst.msk [vmem:[%s820 + $0x10] sm:$0x1] %vm846, %v3569
      $region96: #{rankvit_forward.4} parent=87 // pred_fallthru
        _
      %p3573 = scmp.lt.s32.totalorder %s32, 1
      %s3574 = scalar_select %p3573, %s32, 1
      %s3575 = smul.addr %s3574, 3
      %s3576 = smul.addr %s3575, 8
      %s3577 = scalar_lea.vmem %s17, %s3576
      // Predicated region
      $region97: #{rankvit_forward.4} parent=87 // pred_check
        %p3578 = pneg %p500
      $region98: #{rankvit_forward.4} parent=87 // pred_check_branch
        %3580 = sbr.rel (%p3578) target = $region100
      $region99: #{rankvit_forward.4} parent=87 // pred_region
        _
      $region100: #{rankvit_forward.4} parent=87 // pred_fallthru
        _
    $region88: #{rankvit_forward.4} parent=5 // pred_fallthru
      _
    %p3581 = scmp.le.s32.totalorder 2, %s23
    // Predicated region
    $region101: #{rankvit_forward.4} parent=5 // pred_check
      %p3582 = pneg %p3581
    $region102: #{rankvit_forward.4} parent=5 // pred_check_branch
      %3584 = sbr.rel (%p3582) target = $region104
    $region103: #{rankvit_forward.4} parent=5 // pred_region
      %s3585 = ssub.s32 %s23, 2
      // Predicated region
      $region105: #{rankvit_forward.4} parent=103 // pred_check
        %p3586 = pneg %p506
      $region106: #{rankvit_forward.4} parent=103 // pred_check_branch
        %3588 = sbr.rel (%p3586) target = $region108
      $region107: #{rankvit_forward.4} parent=103 // pred_region
        %p3589 = scmp.lt.s32.totalorder %s34, 1
        %s3590 = scalar_select %p3589, %s34, 1
        %s3591 = smul.addr %s3590, 3
        %s3592 = smul.addr %s3591, 8
        %s3593 = scalar_lea.vmem %s17, %s3592
      $region108: #{rankvit_forward.4} parent=103 // pred_fallthru
        _
    $region104: #{rankvit_forward.4} parent=5 // pred_fallthru
      _
  $region6: #{rankvit_forward.4} parent=0 // loop_footer
    %s27 = sadd.s32 1, %s23
  $region7: #{rankvit_forward.4} parent=0 // loop_footer_branch
    %22 = sbr.rel target = $region3
  $region8: #{rankvit_forward.4} parent=0 // loop_exit
    _

</llo_original>
